<compile_context>
chip_gen: v7x
topology: tpu7x:2x2x1
jax: 0.10.0
libtpu: 0.0.40
codegen_flags: <defaults>
</compile_context>

<pallas_src>
import functools
import math

import numpy as np
import jax
import jax.numpy as jnp
from jax import lax
from jax.experimental import pallas as pl
from jax.experimental.pallas import tpu as pltpu

_SQRT2 = math.sqrt(2.0)
_LANE_PAD = 128        # flat-spatial zero padding on each side (must be >= W2 + 1)


def _interp_matrix(out_size: int, in_size: int) -> np.ndarray:
    """Bilinear, align_corners=True interpolation matrix of shape (out, in)."""
    mat = np.zeros((out_size, in_size), dtype=np.float64)
    if out_size == 1 or in_size == 1:
        mat[:, 0] = 1.0
        return mat.astype(np.float32)
    scale = (in_size - 1) / (out_size - 1)
    for p in range(out_size):
        src = p * scale
        lo = min(int(np.floor(src)), in_size - 1)
        hi = min(lo + 1, in_size - 1)
        frac = src - lo
        mat[p, lo] += 1.0 - frac
        mat[p, hi] += frac
    return mat.astype(np.float32)


def _scaled_leaky_relu(x, slope):
    return jnp.where(x >= 0, x, slope * x) * _SQRT2


def _conv3x3_gemm(z, w_mat, scale, pad_ref, *, W2, HW2, col):
    """3x3, stride 1, pad 1 conv of z:(Cin, H2*W2) with w_mat:(Cout, 9*Cin)."""
    # Place z in the interior of a zero-padded flat image.
    pad_ref[...] = jnp.zeros_like(pad_ref)
    pad_ref[:, pl.ds(_LANE_PAD, HW2)] = z
    taps = []
    for ki in range(3):
        for kj in range(3):
            shift = (ki - 1) * W2 + (kj - 1)
            tap = pad_ref[:, pl.ds(_LANE_PAD + shift, HW2)]
            if kj == 0:            # reads column w-1: invalid at w == 0
                tap = jnp.where(col >= 1, tap, 0.0)
            elif kj == 2:          # reads column w+1: invalid at w == W2-1
                tap = jnp.where(col <= W2 - 2, tap, 0.0)
            taps.append(tap)
    patches = jnp.concatenate(taps, axis=0)               # (9*Cin, HW2)
    w = w_mat.astype(jnp.float32) * scale                  # EqualConv2d scaling
    return jnp.dot(w, patches, preferred_element_type=jnp.float32)


def _double_deconv_kernel(x_ref, up_ref, w1_ref, w2_ref, o_ref,
                          pad1_ref, pad2_ref, *, W2, HW2, scale1, scale2, slope):
    # Column (w) index of every flattened spatial lane, for conv boundary masks.
    col = lax.broadcasted_iota(jnp.int32, (1, HW2), 1) % W2

    x = x_ref[0].astype(jnp.float32)                               # (Cin, H*W)
    # bilinear x2 upsample (align_corners=True) as a single GEMM.
    up = jnp.dot(x, up_ref[...], preferred_element_type=jnp.float32)  # (Cin, HW2)

    # pre:  conv1 -> scaled leaky relu
    tmp = _scaled_leaky_relu(
        _conv3x3_gemm(up, w1_ref[...], scale1, pad1_ref, W2=W2, HW2=HW2, col=col),
        slope)
    # net:  conv2 -> scaled leaky relu, then residual add
    ret = _scaled_leaky_relu(
        _conv3x3_gemm(tmp, w2_ref[...], scale2, pad2_ref, W2=W2, HW2=HW2, col=col),
        slope) + tmp

    o_ref[0] = ret.astype(o_ref.dtype)


def double_deconv2d(x, w1, w2, *, scale_factor=2, negative_slope=0.2):
    """Forward pass of DoubleDeconv2d.  x: (B, Cin, H, W) NCHW, w*: (O, I, 3, 3)."""
    B, Cin, H, W = x.shape
    Cmid, Cin_w, kh, kw = w1.shape
    Cout, Cmid_w, kh2, kw2 = w2.shape
    assert (kh, kw, kh2, kw2) == (3, 3, 3, 3)
    assert Cin_w == Cin and Cmid_w == Cmid and Cout == Cmid
    H2, W2 = H * scale_factor, W * scale_factor
    HW, HW2 = H * W, H2 * W2
    assert W2 + 1 <= _LANE_PAD, "flat-pad conv trick requires W2 < 128"
    # TODO(synk): tile spatially (and switch to separable upsample GEMMs) for
    # feature maps too large to hold one upsampled image per batch in VMEM.

    scale1 = 1.0 / math.sqrt(Cin * 9)      # EqualConv2d scale, kernel_size = 3
    scale2 = 1.0 / math.sqrt(Cmid * 9)

    # Host-precomputed separable bilinear operator: up_flat = x_flat @ kron(Ah, Aw)^T
    a_h = _interp_matrix(H2, H)
    a_w = _interp_matrix(W2, W)
    up_mat = jnp.asarray(np.kron(a_h, a_w).T)              # (H*W, H2*W2)

    # (O, I, 3, 3) -> (O, 9*I) with column order (ki, kj, ci), matching the
    # im2col row order built inside the kernel.
    w1_mat = jnp.transpose(w1, (0, 2, 3, 1)).reshape(Cmid, 9 * Cin)
    w2_mat = jnp.transpose(w2, (0, 2, 3, 1)).reshape(Cout, 9 * Cmid)

    x_flat = x.reshape(B, Cin, HW)                          # metadata-only reshape

    kernel = functools.partial(
        _double_deconv_kernel, W2=W2, HW2=HW2,
        scale1=scale1, scale2=scale2, slope=negative_slope)

    out_flat = pl.pallas_call(
        kernel,
        out_shape=jax.ShapeDtypeStruct((B, Cout, HW2), x.dtype),
        grid_spec=pltpu.PrefetchScalarGridSpec(
            num_scalar_prefetch=0,
            grid=(B,),
            in_specs=[
                pl.BlockSpec((1, Cin, HW), lambda b: (b, 0, 0)),
                pl.BlockSpec((HW, HW2), lambda b: (0, 0)),
                pl.BlockSpec((Cmid, 9 * Cin), lambda b: (0, 0)),
                pl.BlockSpec((Cout, 9 * Cmid), lambda b: (0, 0)),
            ],
            out_specs=pl.BlockSpec((1, Cout, HW2), lambda b: (b, 0, 0)),
            scratch_shapes=[
                pltpu.VMEM((Cin, HW2 + 2 * _LANE_PAD), jnp.float32),
                pltpu.VMEM((Cmid, HW2 + 2 * _LANE_PAD), jnp.float32),
            ],
        ),
        compiler_params=pltpu.CompilerParams(
            dimension_semantics=("parallel",),
        ),
    )(x_flat, up_mat, w1_mat, w2_mat)

    return out_flat.reshape(B, Cout, H2, W2)


def _reference(x, w1, w2, a_h, a_w, negative_slope=0.2):
    """Pure-XLA reference (high precision) for the self-check."""
    Cin = x.shape[1]
    Cmid = w1.shape[0]
    scale1 = 1.0 / math.sqrt(Cin * 9)
    scale2 = 1.0 / math.sqrt(Cmid * 9)
    hi = lax.Precision.HIGHEST
    up = jnp.einsum('ph,bchw->bcpw', a_h, x, precision=hi)
    up = jnp.einsum('qw,bcpw->bcpq', a_w, up, precision=hi)

    def conv(z, w, s):
        return lax.conv_general_dilated(
            z, w * s, window_strides=(1, 1), padding=((1, 1), (1, 1)),
            dimension_numbers=('NCHW', 'OIHW', 'NCHW'), precision=hi)

    def slrelu(t):
        return jnp.where(t >= 0, t, negative_slope * t) * _SQRT2

    tmp = slrelu(conv(up, w1, scale1))
    return slrelu(conv(tmp, w2, scale2)) + tmp


if __name__ == "__main__":
    # Module defaults: source_channels = output_channels = 32, scale_factor = 2.
    B, Cin, H, W = 2, 32, 16, 16
    Cmid = 32
    kx, kw1, kw2 = jax.random.split(jax.random.PRNGKey(0), 3)
    x = jax.random.normal(kx, (B, Cin, H, W), dtype=jnp.float32)
    w1 = jax.random.normal(kw1, (Cmid, Cin, 3, 3), dtype=jnp.float32)
    w2 = jax.random.normal(kw2, (Cmid, Cmid, 3, 3), dtype=jnp.float32)

    out = jax.jit(double_deconv2d)(x, w1, w2)
    out = jax.block_until_ready(out)
    assert out.shape == (B, Cmid, 2 * H, 2 * W)
    assert out.dtype == x.dtype

    ref = _reference(x, w1, w2,
                     jnp.asarray(_interp_matrix(2 * H, H)),
                     jnp.asarray(_interp_matrix(2 * W, W)))
    max_err = float(jnp.max(jnp.abs(out - ref)))
    assert bool(jnp.allclose(out, ref, atol=2e-3, rtol=2e-3)), max_err

    print("KERNEL_OK")
</pallas_src>

<mosaic_0001>
module attributes {stable_mosaic.version = 11 : i64} {
  func.func @_double_deconv_kernel(%arg0: i32, %arg1: memref<1x32x256xf32, #tpu.memory_space<vmem>>, %arg2: memref<256x1024xf32, #tpu.memory_space<vmem>>, %arg3: memref<32x288xf32, #tpu.memory_space<vmem>>, %arg4: memref<32x288xf32, #tpu.memory_space<vmem>>, %arg5: memref<1x32x1024xf32, #tpu.memory_space<vmem>>, %arg6: memref<32x1280xf32, #tpu.memory_space<vmem>>, %arg7: memref<32x1280xf32, #tpu.memory_space<vmem>>) attributes {dimension_semantics = [#tpu.dimension_semantics<parallel>], iteration_bounds = array<i64: 2>, scalar_prefetch = 0 : i64, scratch_operands = 2 : i64, tpu.core_type = #tpu.core_type<tc>, window_params = [{transform_indices = @transform_0, window_bounds = array<i64: 1, 32, 256>}, {pipeline_mode = #tpu.pipeline_mode<synchronous>, transform_indices = @transform_1, window_bounds = array<i64: 256, 1024>}, {pipeline_mode = #tpu.pipeline_mode<synchronous>, transform_indices = @transform_2, window_bounds = array<i64: 32, 288>}, {pipeline_mode = #tpu.pipeline_mode<synchronous>, transform_indices = @transform_3, window_bounds = array<i64: 32, 288>}, {transform_indices = @transform_4, window_bounds = array<i64: 1, 32, 1024>}]} {
    %0 = tpu.iota {dimensions = array<i32: 1>} : vector<1x1024xi32>
    %c32_i32 = arith.constant 32 : i32
    %c0_i32 = arith.constant 0 : i32
    %1 = arith.cmpi eq, %c32_i32, %c0_i32 : i32
    %c1_i32 = arith.constant 1 : i32
    %2 = arith.select %1, %c1_i32, %c32_i32 : i32
    %3 = vector.broadcast %2 : i32 to vector<1x1024xi32>
    %4 = arith.remsi %0, %3 : vector<1x1024xi32>
    %c0_i32_0 = arith.constant 0 : i32
    %5 = vector.broadcast %c0_i32_0 : i32 to vector<1x1024xi32>
    %6 = arith.cmpi ne, %4, %5 : vector<1x1024xi32>
    %c0_i32_1 = arith.constant 0 : i32
    %7 = vector.broadcast %c0_i32_1 : i32 to vector<1x1024xi32>
    %8 = arith.cmpi slt, %4, %7 : vector<1x1024xi32>
    %c0_i32_2 = arith.constant 0 : i32
    %9 = arith.cmpi slt, %2, %c0_i32_2 : i32
    %10 = vector.broadcast %9 : i1 to vector<1x1024xi1>
    %11 = vector.broadcast %10 : vector<1x1024xi1> to vector<1x1024xi1>
    %12 = arith.xori %8, %11 : vector<1x1024xi1>
    %13 = arith.andi %12, %6 : vector<1x1024xi1>
    %14 = vector.broadcast %2 : i32 to vector<1x1024xi32>
    %15 = arith.addi %4, %14 : vector<1x1024xi32>
    %16 = arith.select %13, %15, %4 : vector<1x1024xi1>, vector<1x1024xi32>
    %c0 = arith.constant 0 : index
    %c0_3 = arith.constant 0 : index
    %c0_4 = arith.constant 0 : index
    %17 = vector.load %arg1[%c0, %c0_3, %c0_4] : memref<1x32x256xf32, #tpu.memory_space<vmem>>, vector<1x32x256xf32>
    %18 = vector.shape_cast %17 : vector<1x32x256xf32> to vector<32x256xf32>
    %c0_5 = arith.constant 0 : index
    %c0_6 = arith.constant 0 : index
    %19 = vector.load %arg2[%c0_5, %c0_6] : memref<256x1024xf32, #tpu.memory_space<vmem>>, vector<256x1024xf32>
    %cst = arith.constant dense<0.000000e+00> : vector<32x1024xf32>
    %20 = tpu.matmul %18, %19, %cst {dimension_numbers = #tpu.dot_dimension_numbers<[1], [0], [0], [1], [0, 0, 1, 1], [], []>} : vector<32x256xf32>, vector<256x1024xf32>, vector<32x1024xf32> -> vector<32x1024xf32>
    %c0_7 = arith.constant 0 : index
    %c0_8 = arith.constant 0 : index
    %21 = vector.load %arg3[%c0_7, %c0_8] : memref<32x288xf32, #tpu.memory_space<vmem>>, vector<32x288xf32>
    %cst_9 = arith.constant 0.000000e+00 : f32
    %22 = vector.broadcast %cst_9 : f32 to vector<32x1280xf32>
    %c0_10 = arith.constant 0 : index
    %c0_11 = arith.constant 0 : index
    %23 = vector.load %arg6[%c0_10, %c0_11] : memref<32x1280xf32, #tpu.memory_space<vmem>>, vector<32x1280xf32>
    tpu.vector_store %arg6[%c0_10, %c0_11], %22 {strides = array<i32>} : memref<32x1280xf32, #tpu.memory_space<vmem>>, vector<32x1280xf32>,
    %c0_12 = arith.constant 0 : index
    %c128 = arith.constant 128 : index
    %24 = vector.load %arg6[%c0_12, %c128] : memref<32x1280xf32, #tpu.memory_space<vmem>>, vector<32x1024xf32>
    tpu.vector_store %arg6[%c0_12, %c128], %20 {strides = array<i32>} : memref<32x1280xf32, #tpu.memory_space<vmem>>, vector<32x1024xf32>,
    %c0_13 = arith.constant 0 : index
    %c95 = arith.constant 95 : index
    %25 = vector.load %arg6[%c0_13, %c95] : memref<32x1280xf32, #tpu.memory_space<vmem>>, vector<32x1024xf32>
    %c1_i32_14 = arith.constant 1 : i32
    %26 = vector.broadcast %c1_i32_14 : i32 to vector<1x1024xi32>
    %27 = arith.cmpi sge, %16, %26 : vector<1x1024xi32>
    %cst_15 = arith.constant 0.000000e+00 : f32
    %28 = vector.shape_cast %27 : vector<1x1024xi1> to vector<1x1024xi1>
    %29 = vector.broadcast %28 : vector<1x1024xi1> to vector<32x1024xi1>
    %30 = vector.broadcast %cst_15 : f32 to vector<32x1024xf32>
    %31 = arith.select %29, %25, %30 : vector<32x1024xi1>, vector<32x1024xf32>
    %c0_16 = arith.constant 0 : index
    %c96 = arith.constant 96 : index
    %32 = vector.load %arg6[%c0_16, %c96] : memref<32x1280xf32, #tpu.memory_space<vmem>>, vector<32x1024xf32>
    %c0_17 = arith.constant 0 : index
    %c97 = arith.constant 97 : index
    %33 = vector.load %arg6[%c0_17, %c97] : memref<32x1280xf32, #tpu.memory_space<vmem>>, vector<32x1024xf32>
    %c30_i32 = arith.constant 30 : i32
    %34 = vector.broadcast %c30_i32 : i32 to vector<1x1024xi32>
    %35 = arith.cmpi sle, %16, %34 : vector<1x1024xi32>
    %cst_18 = arith.constant 0.000000e+00 : f32
    %36 = vector.shape_cast %35 : vector<1x1024xi1> to vector<1x1024xi1>
    %37 = vector.broadcast %36 : vector<1x1024xi1> to vector<32x1024xi1>
    %38 = vector.broadcast %cst_18 : f32 to vector<32x1024xf32>
    %39 = arith.select %37, %33, %38 : vector<32x1024xi1>, vector<32x1024xf32>
    %c0_19 = arith.constant 0 : index
    %c127 = arith.constant 127 : index
    %40 = vector.load %arg6[%c0_19, %c127] : memref<32x1280xf32, #tpu.memory_space<vmem>>, vector<32x1024xf32>
    %c1_i32_20 = arith.constant 1 : i32
    %41 = vector.broadcast %c1_i32_20 : i32 to vector<1x1024xi32>
    %42 = arith.cmpi sge, %16, %41 : vector<1x1024xi32>
    %cst_21 = arith.constant 0.000000e+00 : f32
    %43 = vector.shape_cast %42 : vector<1x1024xi1> to vector<1x1024xi1>
    %44 = vector.broadcast %43 : vector<1x1024xi1> to vector<32x1024xi1>
    %45 = vector.broadcast %cst_21 : f32 to vector<32x1024xf32>
    %46 = arith.select %44, %40, %45 : vector<32x1024xi1>, vector<32x1024xf32>
    %c0_22 = arith.constant 0 : index
    %c128_23 = arith.constant 128 : index
    %47 = vector.load %arg6[%c0_22, %c128_23] : memref<32x1280xf32, #tpu.memory_space<vmem>>, vector<32x1024xf32>
    %c0_24 = arith.constant 0 : index
    %c129 = arith.constant 129 : index
    %48 = vector.load %arg6[%c0_24, %c129] : memref<32x1280xf32, #tpu.memory_space<vmem>>, vector<32x1024xf32>
    %c30_i32_25 = arith.constant 30 : i32
    %49 = vector.broadcast %c30_i32_25 : i32 to vector<1x1024xi32>
    %50 = arith.cmpi sle, %16, %49 : vector<1x1024xi32>
    %cst_26 = arith.constant 0.000000e+00 : f32
    %51 = vector.shape_cast %50 : vector<1x1024xi1> to vector<1x1024xi1>
    %52 = vector.broadcast %51 : vector<1x1024xi1> to vector<32x1024xi1>
    %53 = vector.broadcast %cst_26 : f32 to vector<32x1024xf32>
    %54 = arith.select %52, %48, %53 : vector<32x1024xi1>, vector<32x1024xf32>
    %c0_27 = arith.constant 0 : index
    %c159 = arith.constant 159 : index
    %55 = vector.load %arg6[%c0_27, %c159] : memref<32x1280xf32, #tpu.memory_space<vmem>>, vector<32x1024xf32>
    %c1_i32_28 = arith.constant 1 : i32
    %56 = vector.broadcast %c1_i32_28 : i32 to vector<1x1024xi32>
    %57 = arith.cmpi sge, %16, %56 : vector<1x1024xi32>
    %cst_29 = arith.constant 0.000000e+00 : f32
    %58 = vector.shape_cast %57 : vector<1x1024xi1> to vector<1x1024xi1>
    %59 = vector.broadcast %58 : vector<1x1024xi1> to vector<32x1024xi1>
    %60 = vector.broadcast %cst_29 : f32 to vector<32x1024xf32>
    %61 = arith.select %59, %55, %60 : vector<32x1024xi1>, vector<32x1024xf32>
    %c0_30 = arith.constant 0 : index
    %c160 = arith.constant 160 : index
    %62 = vector.load %arg6[%c0_30, %c160] : memref<32x1280xf32, #tpu.memory_space<vmem>>, vector<32x1024xf32>
    %c0_31 = arith.constant 0 : index
    %c161 = arith.constant 161 : index
    %63 = vector.load %arg6[%c0_31, %c161] : memref<32x1280xf32, #tpu.memory_space<vmem>>, vector<32x1024xf32>
    %c30_i32_32 = arith.constant 30 : i32
    %64 = vector.broadcast %c30_i32_32 : i32 to vector<1x1024xi32>
    %65 = arith.cmpi sle, %16, %64 : vector<1x1024xi32>
    %cst_33 = arith.constant 0.000000e+00 : f32
    %66 = vector.shape_cast %65 : vector<1x1024xi1> to vector<1x1024xi1>
    %67 = vector.broadcast %66 : vector<1x1024xi1> to vector<32x1024xi1>
    %68 = vector.broadcast %cst_33 : f32 to vector<32x1024xf32>
    %69 = arith.select %67, %63, %68 : vector<32x1024xi1>, vector<32x1024xf32>
    %70 = tpu.concatenate %31, %32, %39, %46, %47, %54, %61, %62, %69 in 0 : vector<32x1024xf32>, vector<32x1024xf32>, vector<32x1024xf32>, vector<32x1024xf32>, vector<32x1024xf32>, vector<32x1024xf32>, vector<32x1024xf32>, vector<32x1024xf32>, vector<32x1024xf32> -> vector<288x1024xf32>
    %cst_34 = arith.constant 0.0589255653 : f32
    %71 = vector.broadcast %cst_34 : f32 to vector<32x288xf32>
    %72 = arith.mulf %21, %71 : vector<32x288xf32>
    %cst_35 = arith.constant dense<0.000000e+00> : vector<32x1024xf32>
    %73 = tpu.matmul %72, %70, %cst_35 {dimension_numbers = #tpu.dot_dimension_numbers<[1], [0], [0], [1], [0, 0, 1, 1], [], []>} : vector<32x288xf32>, vector<288x1024xf32>, vector<32x1024xf32> -> vector<32x1024xf32>
    %cst_36 = arith.constant 0.000000e+00 : f32
    %74 = vector.broadcast %cst_36 : f32 to vector<32x1024xf32>
    %75 = arith.cmpf oge, %73, %74 : vector<32x1024xf32>
    %cst_37 = arith.constant 2.000000e-01 : f32
    %76 = vector.broadcast %cst_37 : f32 to vector<32x1024xf32>
    %77 = arith.mulf %76, %73 : vector<32x1024xf32>
    %78 = arith.select %75, %73, %77 : vector<32x1024xi1>, vector<32x1024xf32>
    %cst_38 = arith.constant 1.41421354 : f32
    %79 = vector.broadcast %cst_38 : f32 to vector<32x1024xf32>
    %80 = arith.mulf %78, %79 : vector<32x1024xf32>
    %c0_39 = arith.constant 0 : index
    %c0_40 = arith.constant 0 : index
    %81 = vector.load %arg4[%c0_39, %c0_40] : memref<32x288xf32, #tpu.memory_space<vmem>>, vector<32x288xf32>
    %cst_41 = arith.constant 0.000000e+00 : f32
    %82 = vector.broadcast %cst_41 : f32 to vector<32x1280xf32>
    %c0_42 = arith.constant 0 : index
    %c0_43 = arith.constant 0 : index
    %83 = vector.load %arg7[%c0_42, %c0_43] : memref<32x1280xf32, #tpu.memory_space<vmem>>, vector<32x1280xf32>
    tpu.vector_store %arg7[%c0_42, %c0_43], %82 {strides = array<i32>} : memref<32x1280xf32, #tpu.memory_space<vmem>>, vector<32x1280xf32>,
    %c0_44 = arith.constant 0 : index
    %c128_45 = arith.constant 128 : index
    %84 = vector.load %arg7[%c0_44, %c128_45] : memref<32x1280xf32, #tpu.memory_space<vmem>>, vector<32x1024xf32>
    tpu.vector_store %arg7[%c0_44, %c128_45], %80 {strides = array<i32>} : memref<32x1280xf32, #tpu.memory_space<vmem>>, vector<32x1024xf32>,
    %c0_46 = arith.constant 0 : index
    %c95_47 = arith.constant 95 : index
    %85 = vector.load %arg7[%c0_46, %c95_47] : memref<32x1280xf32, #tpu.memory_space<vmem>>, vector<32x1024xf32>
    %c1_i32_48 = arith.constant 1 : i32
    %86 = vector.broadcast %c1_i32_48 : i32 to vector<1x1024xi32>
    %87 = arith.cmpi sge, %16, %86 : vector<1x1024xi32>
    %cst_49 = arith.constant 0.000000e+00 : f32
    %88 = vector.shape_cast %87 : vector<1x1024xi1> to vector<1x1024xi1>
    %89 = vector.broadcast %88 : vector<1x1024xi1> to vector<32x1024xi1>
    %90 = vector.broadcast %cst_49 : f32 to vector<32x1024xf32>
    %91 = arith.select %89, %85, %90 : vector<32x1024xi1>, vector<32x1024xf32>
    %c0_50 = arith.constant 0 : index
    %c96_51 = arith.constant 96 : index
    %92 = vector.load %arg7[%c0_50, %c96_51] : memref<32x1280xf32, #tpu.memory_space<vmem>>, vector<32x1024xf32>
    %c0_52 = arith.constant 0 : index
    %c97_53 = arith.constant 97 : index
    %93 = vector.load %arg7[%c0_52, %c97_53] : memref<32x1280xf32, #tpu.memory_space<vmem>>, vector<32x1024xf32>
    %c30_i32_54 = arith.constant 30 : i32
    %94 = vector.broadcast %c30_i32_54 : i32 to vector<1x1024xi32>
    %95 = arith.cmpi sle, %16, %94 : vector<1x1024xi32>
    %cst_55 = arith.constant 0.000000e+00 : f32
    %96 = vector.shape_cast %95 : vector<1x1024xi1> to vector<1x1024xi1>
    %97 = vector.broadcast %96 : vector<1x1024xi1> to vector<32x1024xi1>
    %98 = vector.broadcast %cst_55 : f32 to vector<32x1024xf32>
    %99 = arith.select %97, %93, %98 : vector<32x1024xi1>, vector<32x1024xf32>
    %c0_56 = arith.constant 0 : index
    %c127_57 = arith.constant 127 : index
    %100 = vector.load %arg7[%c0_56, %c127_57] : memref<32x1280xf32, #tpu.memory_space<vmem>>, vector<32x1024xf32>
    %c1_i32_58 = arith.constant 1 : i32
    %101 = vector.broadcast %c1_i32_58 : i32 to vector<1x1024xi32>
    %102 = arith.cmpi sge, %16, %101 : vector<1x1024xi32>
    %cst_59 = arith.constant 0.000000e+00 : f32
    %103 = vector.shape_cast %102 : vector<1x1024xi1> to vector<1x1024xi1>
    %104 = vector.broadcast %103 : vector<1x1024xi1> to vector<32x1024xi1>
    %105 = vector.broadcast %cst_59 : f32 to vector<32x1024xf32>
    %106 = arith.select %104, %100, %105 : vector<32x1024xi1>, vector<32x1024xf32>
    %c0_60 = arith.constant 0 : index
    %c128_61 = arith.constant 128 : index
    %107 = vector.load %arg7[%c0_60, %c128_61] : memref<32x1280xf32, #tpu.memory_space<vmem>>, vector<32x1024xf32>
    %c0_62 = arith.constant 0 : index
    %c129_63 = arith.constant 129 : index
    %108 = vector.load %arg7[%c0_62, %c129_63] : memref<32x1280xf32, #tpu.memory_space<vmem>>, vector<32x1024xf32>
    %c30_i32_64 = arith.constant 30 : i32
    %109 = vector.broadcast %c30_i32_64 : i32 to vector<1x1024xi32>
    %110 = arith.cmpi sle, %16, %109 : vector<1x1024xi32>
    %cst_65 = arith.constant 0.000000e+00 : f32
    %111 = vector.shape_cast %110 : vector<1x1024xi1> to vector<1x1024xi1>
    %112 = vector.broadcast %111 : vector<1x1024xi1> to vector<32x1024xi1>
    %113 = vector.broadcast %cst_65 : f32 to vector<32x1024xf32>
    %114 = arith.select %112, %108, %113 : vector<32x1024xi1>, vector<32x1024xf32>
    %c0_66 = arith.constant 0 : index
    %c159_67 = arith.constant 159 : index
    %115 = vector.load %arg7[%c0_66, %c159_67] : memref<32x1280xf32, #tpu.memory_space<vmem>>, vector<32x1024xf32>
    %c1_i32_68 = arith.constant 1 : i32
    %116 = vector.broadcast %c1_i32_68 : i32 to vector<1x1024xi32>
    %117 = arith.cmpi sge, %16, %116 : vector<1x1024xi32>
    %cst_69 = arith.constant 0.000000e+00 : f32
    %118 = vector.shape_cast %117 : vector<1x1024xi1> to vector<1x1024xi1>
    %119 = vector.broadcast %118 : vector<1x1024xi1> to vector<32x1024xi1>
    %120 = vector.broadcast %cst_69 : f32 to vector<32x1024xf32>
    %121 = arith.select %119, %115, %120 : vector<32x1024xi1>, vector<32x1024xf32>
    %c0_70 = arith.constant 0 : index
    %c160_71 = arith.constant 160 : index
    %122 = vector.load %arg7[%c0_70, %c160_71] : memref<32x1280xf32, #tpu.memory_space<vmem>>, vector<32x1024xf32>
    %c0_72 = arith.constant 0 : index
    %c161_73 = arith.constant 161 : index
    %123 = vector.load %arg7[%c0_72, %c161_73] : memref<32x1280xf32, #tpu.memory_space<vmem>>, vector<32x1024xf32>
    %c30_i32_74 = arith.constant 30 : i32
    %124 = vector.broadcast %c30_i32_74 : i32 to vector<1x1024xi32>
    %125 = arith.cmpi sle, %16, %124 : vector<1x1024xi32>
    %cst_75 = arith.constant 0.000000e+00 : f32
    %126 = vector.shape_cast %125 : vector<1x1024xi1> to vector<1x1024xi1>
    %127 = vector.broadcast %126 : vector<1x1024xi1> to vector<32x1024xi1>
    %128 = vector.broadcast %cst_75 : f32 to vector<32x1024xf32>
    %129 = arith.select %127, %123, %128 : vector<32x1024xi1>, vector<32x1024xf32>
    %130 = tpu.concatenate %91, %92, %99, %106, %107, %114, %121, %122, %129 in 0 : vector<32x1024xf32>, vector<32x1024xf32>, vector<32x1024xf32>, vector<32x1024xf32>, vector<32x1024xf32>, vector<32x1024xf32>, vector<32x1024xf32>, vector<32x1024xf32>, vector<32x1024xf32> -> vector<288x1024xf32>
    %cst_76 = arith.constant 0.0589255653 : f32
    %131 = vector.broadcast %cst_76 : f32 to vector<32x288xf32>
    %132 = arith.mulf %81, %131 : vector<32x288xf32>
    %cst_77 = arith.constant dense<0.000000e+00> : vector<32x1024xf32>
    %133 = tpu.matmul %132, %130, %cst_77 {dimension_numbers = #tpu.dot_dimension_numbers<[1], [0], [0], [1], [0, 0, 1, 1], [], []>} : vector<32x288xf32>, vector<288x1024xf32>, vector<32x1024xf32> -> vector<32x1024xf32>
    %cst_78 = arith.constant 0.000000e+00 : f32
    %134 = vector.broadcast %cst_78 : f32 to vector<32x1024xf32>
    %135 = arith.cmpf oge, %133, %134 : vector<32x1024xf32>
    %cst_79 = arith.constant 2.000000e-01 : f32
    %136 = vector.broadcast %cst_79 : f32 to vector<32x1024xf32>
    %137 = arith.mulf %136, %133 : vector<32x1024xf32>
    %138 = arith.select %135, %133, %137 : vector<32x1024xi1>, vector<32x1024xf32>
    %cst_80 = arith.constant 1.41421354 : f32
    %139 = vector.broadcast %cst_80 : f32 to vector<32x1024xf32>
    %140 = arith.mulf %138, %139 : vector<32x1024xf32>
    %141 = arith.addf %140, %80 : vector<32x1024xf32>
    %c0_81 = arith.constant 0 : index
    %c0_82 = arith.constant 0 : index
    %c0_83 = arith.constant 0 : index
    %142 = vector.load %arg5[%c0_81, %c0_82, %c0_83] : memref<1x32x1024xf32, #tpu.memory_space<vmem>>, vector<1x32x1024xf32>
    %143 = vector.shape_cast %142 : vector<1x32x1024xf32> to vector<32x1024xf32>
    %144 = vector.shape_cast %141 : vector<32x1024xf32> to vector<1x32x1024xf32>
    tpu.vector_store %arg5[%c0_81, %c0_82, %c0_83], %144 {strides = array<i32>} : memref<1x32x1024xf32, #tpu.memory_space<vmem>>, vector<1x32x1024xf32>,
    return
  }
  func.func @transform_0(%arg0: i32) -> (i32, i32, i32) {
    %c0_i32 = arith.constant 0 : i32
    %c0_i32_0 = arith.constant 0 : i32
    %c0_i32_1 = arith.constant 0 : i32
    return %arg0, %c0_i32, %c0_i32_0 : i32, i32, i32
  }
  func.func @transform_1(%arg0: i32) -> (i32, i32) {
    %c0_i32 = arith.constant 0 : i32
    %c0_i32_0 = arith.constant 0 : i32
    %c0_i32_1 = arith.constant 0 : i32
    return %c0_i32, %c0_i32_0 : i32, i32
  }
  func.func @transform_2(%arg0: i32) -> (i32, i32) {
    %c0_i32 = arith.constant 0 : i32
    %c0_i32_0 = arith.constant 0 : i32
    %c0_i32_1 = arith.constant 0 : i32
    return %c0_i32, %c0_i32_0 : i32, i32
  }
  func.func @transform_3(%arg0: i32) -> (i32, i32) {
    %c0_i32 = arith.constant 0 : i32
    %c0_i32_0 = arith.constant 0 : i32
    %c0_i32_1 = arith.constant 0 : i32
    return %c0_i32, %c0_i32_0 : i32, i32
  }
  func.func @transform_4(%arg0: i32) -> (i32, i32, i32) {
    %c0_i32 = arith.constant 0 : i32
    %c0_i32_0 = arith.constant 0 : i32
    %c0_i32_1 = arith.constant 0 : i32
    return %arg0, %c0_i32, %c0_i32_0 : i32, i32, i32
  }
}

</mosaic_0001>

<llo_original>
// kernel: double_deconv2d.1
$region0: #{double_deconv2d.1}
  #allocation0 [shape = 'u32[]', space=smem, size = 0x4, offset = 0x4, fixed_abs, tag = 'smem constant byte address 0x4 - core index']
  #allocation1 [shape = 'u32[144,128]{1,0:T(1,128)}', space=vmem, size = 0x12000, scoped, tag = 'internal scratch']
  #allocation2 [shape = 'f32[32,1280]{1,0:T(8,128)}', space=vmem, size = 0x28000, scoped, tag = 'scratch operand']
  #allocation3 [shape = 'f32[32,1280]{1,0:T(8,128)}', space=vmem, size = 0x28000, scoped, tag = 'scratch operand']
  %s0 = inlined_call_operand.vmem [shape: f32[2,32,256], index: 0, kind: input, shape index: {}]
  %s1 = inlined_call_operand.vmem [shape: f32[256,1024], index: 1, kind: input, shape index: {}]
  %s2 = inlined_call_operand.vmem [shape: f32[32,288], index: 2, kind: input, shape index: {}]
  %s3 = inlined_call_operand.vmem [shape: f32[32,288], index: 3, kind: input, shape index: {}]
  %s4 = inlined_call_operand.vmem [shape: f32[2,32,1024], index: 4, kind: output, shape index: {}]
  %s5 = sld [smem:[#allocation0]]
  $region49: #{double_deconv2d.1} parent=0
    _
  %s7 = ssub.s32 1, %s5
  %s8 = scalar_select 0, %s7, %s5
  loop: start=0, step=1, limit=4
  $region2: #{double_deconv2d.1} parent=0 // loop_pre_header
    _
  $region3: #{double_deconv2d.1} parent=0 // loop_header
    %s10 = sphi 0, %s14
    %p11 = scmp.ge.s32.totalorder %s10, 4
    %s20 = sphi 0, %s22
    %s23 = sphi 0, %s20
    %s24 = sphi 0, %s23
    %s40 = sphi 0, %s24
    %s44 = sphi 0, %s44
    %s46 = sphi 0, %s44
    %s47 = sphi 0, %s46
    %s61 = sphi 0, %s47
    %s65 = sphi 0, %s65
    %s67 = sphi 0, %s65
    %s68 = sphi 0, %s67
    %s82 = sphi 0, %s68
    %s86 = sphi 0, %s86
    %s88 = sphi 0, %s86
    %s89 = sphi 0, %s88
    %s103 = sphi 0, %s89
    %s109 = sphi 0, %s111
    %s112 = sphi 0, %s109
    %s113 = sphi 0, %s112
    %s129 = sphi 0, %s113
  $region4: #{double_deconv2d.1} parent=0 // loop_header_branch
    %13 = sbr.rel (%p11) target = $region8
  $region5: #{double_deconv2d.1} parent=0 // loop_body
    %s15 = ssub.s32 %s10, 1
    %s16 = ssub.s32 %s10, 2
    %s17 = sadd.s32 %s10, 1
    %s18 = ssub.s32 %s10, %s17
    %p19 = scmp.eq.s32.totalorder %s18, 0
    %s21 = sadd.s32 %s20, 1
    %s22 = scalar_select %p19, %s20, %s21
    %p25 = pneg %p19
    %p26 = scmp.eq.s32.totalorder %s10, 1
    %p27 = por %p25, %p26
    %p28 = scmp.ne.s32.totalorder %s20, %s23
    %p29 = scmp.eq.s32.totalorder %s10, 0
    %p30 = por %p28, %p29
    %p31 = scmp.ne.s32.totalorder %s20, %s23
    %p32 = scmp.eq.s32.totalorder %s15, 1
    %p33 = por %p31, %p32
    %p34 = scmp.ne.s32.totalorder %s23, %s24
    %p35 = scmp.eq.s32.totalorder %s15, 0
    %p36 = por %p34, %p35
    %p37 = scmp.ne.s32.totalorder %s23, %s24
    %p38 = scmp.eq.s32.totalorder %s16, 1
    %p39 = por %p37, %p38
    %p41 = scmp.ne.s32.totalorder %s24, %s40
    %p42 = scmp.eq.s32.totalorder %s16, 0
    %p43 = por %p41, %p42
    %s45 = sadd.s32 %s44, 1
    %p48 = scmp.eq.s32.totalorder %s10, 1
    %p49 = scmp.ne.s32.totalorder %s44, %s46
    %p50 = scmp.eq.s32.totalorder %s10, 0
    %p51 = por %p49, %p50
    %p52 = scmp.ne.s32.totalorder %s44, %s46
    %p53 = scmp.eq.s32.totalorder %s15, 1
    %p54 = por %p52, %p53
    %p55 = scmp.ne.s32.totalorder %s46, %s47
    %p56 = scmp.eq.s32.totalorder %s15, 0
    %p57 = por %p55, %p56
    %p58 = scmp.ne.s32.totalorder %s46, %s47
    %p59 = scmp.eq.s32.totalorder %s16, 1
    %p60 = por %p58, %p59
    %p62 = scmp.ne.s32.totalorder %s47, %s61
    %p63 = scmp.eq.s32.totalorder %s16, 0
    %p64 = por %p62, %p63
    %s66 = sadd.s32 %s65, 1
    %p69 = scmp.eq.s32.totalorder %s10, 1
    %p70 = scmp.ne.s32.totalorder %s65, %s67
    %p71 = scmp.eq.s32.totalorder %s10, 0
    %p72 = por %p70, %p71
    %p73 = scmp.ne.s32.totalorder %s65, %s67
    %p74 = scmp.eq.s32.totalorder %s15, 1
    %p75 = por %p73, %p74
    %p76 = scmp.ne.s32.totalorder %s67, %s68
    %p77 = scmp.eq.s32.totalorder %s15, 0
    %p78 = por %p76, %p77
    %p79 = scmp.ne.s32.totalorder %s67, %s68
    %p80 = scmp.eq.s32.totalorder %s16, 1
    %p81 = por %p79, %p80
    %p83 = scmp.ne.s32.totalorder %s68, %s82
    %p84 = scmp.eq.s32.totalorder %s16, 0
    %p85 = por %p83, %p84
    %s87 = sadd.s32 %s86, 1
    %p90 = scmp.eq.s32.totalorder %s10, 1
    %p91 = scmp.ne.s32.totalorder %s86, %s88
    %p92 = scmp.eq.s32.totalorder %s10, 0
    %p93 = por %p91, %p92
    %p94 = scmp.ne.s32.totalorder %s86, %s88
    %p95 = scmp.eq.s32.totalorder %s15, 1
    %p96 = por %p94, %p95
    %p97 = scmp.ne.s32.totalorder %s88, %s89
    %p98 = scmp.eq.s32.totalorder %s15, 0
    %p99 = por %p97, %p98
    %p100 = scmp.ne.s32.totalorder %s88, %s89
    %p101 = scmp.eq.s32.totalorder %s16, 1
    %p102 = por %p100, %p101
    %p104 = scmp.ne.s32.totalorder %s89, %s103
    %p105 = scmp.eq.s32.totalorder %s16, 0
    %p106 = por %p104, %p105
    %s107 = ssub.s32 %s10, %s17
    %p108 = scmp.eq.s32.totalorder %s107, 0
    %s110 = sadd.s32 %s109, 1
    %s111 = scalar_select %p108, %s109, %s110
    %p114 = pneg %p108
    %p115 = scmp.eq.s32.totalorder %s10, 1
    %p116 = por %p114, %p115
    %p117 = scmp.ne.s32.totalorder %s109, %s112
    %p118 = scmp.eq.s32.totalorder %s10, 0
    %p119 = por %p117, %p118
    %p120 = scmp.ne.s32.totalorder %s109, %s112
    %p121 = scmp.eq.s32.totalorder %s15, 1
    %p122 = por %p120, %p121
    %p123 = scmp.ne.s32.totalorder %s112, %s113
    %p124 = scmp.eq.s32.totalorder %s15, 0
    %p125 = por %p123, %p124
    %p126 = scmp.ne.s32.totalorder %s112, %s113
    %p127 = scmp.eq.s32.totalorder %s16, 1
    %p128 = por %p126, %p127
    %p130 = scmp.ne.s32.totalorder %s113, %s129
    %p131 = scmp.eq.s32.totalorder %s16, 0
    %p132 = por %p130, %p131
    %p133 = scmp.le.s32.totalorder 1, %s10
    %p134 = scmp.lt.s32.totalorder %s10, 3
    %p135 = pnand %p133, %p134
    %p136 = pneg %p135
    // Predicated region
    $region9: #{double_deconv2d.1} parent=5 // pred_check
      _
    $region10: #{double_deconv2d.1} parent=5 // pred_check_branch
      %138 = sbr.rel (%p135) target = $region12
    $region11: #{double_deconv2d.1} parent=5 // pred_region
      %s139 = ssub.s32 %s10, 1
      // Predicated region
      $region13: #{double_deconv2d.1} parent=11 // pred_check
        %p140 = pneg %p57
      $region14: #{double_deconv2d.1} parent=11 // pred_check_branch
        %142 = sbr.rel (%p140) target = $region16
      $region15: #{double_deconv2d.1} parent=11 // pred_region
        _
      $region16: #{double_deconv2d.1} parent=11 // pred_fallthru
        _
      // Predicated region
      $region17: #{double_deconv2d.1} parent=11 // pred_check
        %p143 = pneg %p78
      $region18: #{double_deconv2d.1} parent=11 // pred_check_branch
        %145 = sbr.rel (%p143) target = $region20
      $region19: #{double_deconv2d.1} parent=11 // pred_region
        _
      $region20: #{double_deconv2d.1} parent=11 // pred_fallthru
        _
      // Predicated region
      $region21: #{double_deconv2d.1} parent=11 // pred_check
        %p146 = pneg %p99
      $region22: #{double_deconv2d.1} parent=11 // pred_check_branch
        %148 = sbr.rel (%p146) target = $region24
      $region23: #{double_deconv2d.1} parent=11 // pred_region
        _
      $region24: #{double_deconv2d.1} parent=11 // pred_fallthru
        _
    $region12: #{double_deconv2d.1} parent=5 // pred_fallthru
      _
    %p149 = scmp.lt.s32.totalorder %s10, 2
    // Predicated region
    $region25: #{double_deconv2d.1} parent=5 // pred_check
      %p150 = pneg %p149
    $region26: #{double_deconv2d.1} parent=5 // pred_check_branch
      %152 = sbr.rel (%p150) target = $region28
    $region27: #{double_deconv2d.1} parent=5 // pred_region
      // Predicated region
      $region29: #{double_deconv2d.1} parent=27 // pred_check
        %p153 = pneg %p30
      $region30: #{double_deconv2d.1} parent=27 // pred_check_branch
        %155 = sbr.rel (%p153) target = $region32
      $region31: #{double_deconv2d.1} parent=27 // pred_region
        %p156 = scmp.lt.s32.totalorder %s10, 1
        %s157 = scalar_select %p156, %s10, 1
        %s158 = smul.addr %s157, 8
        %s159 = smul.addr %s158, 8
        %s160 = scalar_lea.vmem %s0, %s159
      $region32: #{double_deconv2d.1} parent=27 // pred_fallthru
        _
    $region28: #{double_deconv2d.1} parent=5 // pred_fallthru
      _
    %p161 = scmp.le.s32.totalorder 1, %s10
    %p162 = scmp.lt.s32.totalorder %s10, 3
    %p163 = pnand %p161, %p162
    %p164 = pneg %p163
    // Predicated region
    $region33: #{double_deconv2d.1} parent=5 // pred_check
      _
    $region34: #{double_deconv2d.1} parent=5 // pred_check_branch
      %166 = sbr.rel (%p163) target = $region36
    $region35: #{double_deconv2d.1} parent=5 // pred_region
      %s167 = ssub.s32 %s10, 1
      %p168 = scmp.lt.s32.totalorder %s15, 1
      %s169 = scalar_select %p168, %s15, 1
      %s170 = smul.addr %s169, 8
      %s171 = smul.addr %s170, 8
      %s172 = scalar_lea.vmem %s0, %s171
      %p173 = pneg %p36
      %p174 = pneg %p33
      %p175 = pneg %p57
      %p176 = pneg %p54
      %p177 = pneg %p78
      %p178 = pneg %p75
      %p179 = pneg %p99
      %p180 = pneg %p96
      %p181 = pneg %p125
      %p182 = pneg %p122
      %p183 = scmp.lt.s32.totalorder %s15, 1
      %s184 = scalar_select %p183, %s15, 1
      %s185 = smul.addr %s184, 32
      %s186 = smul.addr %s185, 8
      %s187 = scalar_lea.vmem %s4, %s186
      %p188 = scmp.lt.s32.totalorder %s15, 1
      %s189 = scalar_select %p188, %s15, 1
      %s190 = smul.addr %s189, 8
      %s191 = smul.addr %s190, 8
      %s192 = scalar_lea.vmem %s0, %s191
      %p193 = scmp.lt.s32.totalorder %s15, 1
      %s194 = scalar_select %p193, %s15, 1
      %s195 = smul.addr %s194, 32
      %s196 = smul.addr %s195, 8
      %s197 = scalar_lea.vmem %s4, %s196
      %v198 = vlaneseq
      %v199 = vand.u32 %v198, 127
      %v200 = vadd.s32 %v199, 128
      %v201 = vadd.s32 %v199, 256
      %v202 = vadd.s32 %v199, 384
      %v203 = vadd.s32 %v199, 512
      %v204 = vadd.s32 %v199, 640
      %v205 = vadd.s32 %v199, 768
      %v206 = vadd.s32 %v199, 896
      %vm207 = vcmp.lt.s32.totalorder %v199, 0
      %v208 = vsub.s32 0, %v199
      %v209 = vsel %vm207, %v208, %v199
      %v210 = vshrl.u32 %v209, 5
      %v211 = vand.u32 %v209, 31
      %v212 = vsub.s32 0, %v211
      %v213 = vsel %vm207, %v212, %v211
      %vm214 = vcmp.lt.s32.totalorder %v200, 0
      %v215 = vsub.s32 0, %v200
      %v216 = vsel %vm214, %v215, %v200
      %v217 = vshrl.u32 %v216, 5
      %v218 = vand.u32 %v216, 31
      %v219 = vsub.s32 0, %v218
      %v220 = vsel %vm214, %v219, %v218
      %vm221 = vcmp.lt.s32.totalorder %v201, 0
      %v222 = vsub.s32 0, %v201
      %v223 = vsel %vm221, %v222, %v201
      %v224 = vshrl.u32 %v223, 5
      %v225 = vand.u32 %v223, 31
      %v226 = vsub.s32 0, %v225
      %v227 = vsel %vm221, %v226, %v225
      %vm228 = vcmp.lt.s32.totalorder %v202, 0
      %v229 = vsub.s32 0, %v202
      %v230 = vsel %vm228, %v229, %v202
      %v231 = vshrl.u32 %v230, 5
      %v232 = vand.u32 %v230, 31
      %v233 = vsub.s32 0, %v232
      %v234 = vsel %vm228, %v233, %v232
      %vm235 = vcmp.lt.s32.totalorder %v203, 0
      %v236 = vsub.s32 0, %v203
      %v237 = vsel %vm235, %v236, %v203
      %v238 = vshrl.u32 %v237, 5
      %v239 = vand.u32 %v237, 31
      %v240 = vsub.s32 0, %v239
      %v241 = vsel %vm235, %v240, %v239
      %vm242 = vcmp.lt.s32.totalorder %v204, 0
      %v243 = vsub.s32 0, %v204
      %v244 = vsel %vm242, %v243, %v204
      %v245 = vshrl.u32 %v244, 5
      %v246 = vand.u32 %v244, 31
      %v247 = vsub.s32 0, %v246
      %v248 = vsel %vm242, %v247, %v246
      %vm249 = vcmp.lt.s32.totalorder %v205, 0
      %v250 = vsub.s32 0, %v205
      %v251 = vsel %vm249, %v250, %v205
      %v252 = vshrl.u32 %v251, 5
      %v253 = vand.u32 %v251, 31
      %v254 = vsub.s32 0, %v253
      %v255 = vsel %vm249, %v254, %v253
      %vm256 = vcmp.lt.s32.totalorder %v206, 0
      %v257 = vsub.s32 0, %v206
      %v258 = vsel %vm256, %v257, %v206
      %v259 = vshrl.u32 %v258, 5
      %v260 = vand.u32 %v258, 31
      %v261 = vsub.s32 0, %v260
      %v262 = vsel %vm256, %v261, %v260
      %vm263 = vcmp.ne.s32.totalorder %v213, 0
      %vm264 = vcmp.ne.s32.totalorder %v220, 0
      %vm265 = vcmp.ne.s32.totalorder %v227, 0
      %vm266 = vcmp.ne.s32.totalorder %v234, 0
      %vm267 = vcmp.ne.s32.totalorder %v241, 0
      %vm268 = vcmp.ne.s32.totalorder %v248, 0
      %vm269 = vcmp.ne.s32.totalorder %v255, 0
      %vm270 = vcmp.ne.s32.totalorder %v262, 0
      %vm271 = vcmp.lt.s32.totalorder %v213, 0
      %vm272 = vcmp.lt.s32.totalorder %v220, 0
      %vm273 = vcmp.lt.s32.totalorder %v227, 0
      %vm274 = vcmp.lt.s32.totalorder %v234, 0
      %vm275 = vcmp.lt.s32.totalorder %v241, 0
      %vm276 = vcmp.lt.s32.totalorder %v248, 0
      %vm277 = vcmp.lt.s32.totalorder %v255, 0
      %vm278 = vcmp.lt.s32.totalorder %v262, 0
      %vm279 = vmand %vm271, %vm263
      %vm280 = vmand %vm272, %vm264
      %vm281 = vmand %vm273, %vm265
      %vm282 = vmand %vm274, %vm266
      %vm283 = vmand %vm275, %vm267
      %vm284 = vmand %vm276, %vm268
      %vm285 = vmand %vm277, %vm269
      %vm286 = vmand %vm278, %vm270
      %v287 = vadd.s32 %v213, 32
      %v288 = vadd.s32 %v220, 32
      %v289 = vadd.s32 %v227, 32
      %v290 = vadd.s32 %v234, 32
      %v291 = vadd.s32 %v241, 32
      %v292 = vadd.s32 %v248, 32
      %v293 = vadd.s32 %v255, 32
      %v294 = vadd.s32 %v262, 32
      %v295 = vsel %vm279, %v287, %v213
      %v296 = vsel %vm280, %v288, %v220
      %v297 = vsel %vm281, %v289, %v227
      %v298 = vsel %vm282, %v290, %v234
      %v299 = vsel %vm283, %v291, %v241
      %v300 = vsel %vm284, %v292, %v248
      %v301 = vsel %vm285, %v293, %v255
      %v302 = vsel %vm286, %v294, %v262
      %v303 = vld [vmem:[%s192] sm:$0xff]
      %v304 = vld [vmem:[%s192 + $0x8] sm:$0xff]
      %v305 = vld [vmem:[%s192 + $0x10] sm:$0xff]
      %v306 = vld [vmem:[%s192 + $0x18] sm:$0xff]
      %v307 = vld [vmem:[%s192 + $0x20] sm:$0xff]
      %v308 = vld [vmem:[%s192 + $0x28] sm:$0xff]
      %v309 = vld [vmem:[%s192 + $0x30] sm:$0xff]
      %v310 = vld [vmem:[%s192 + $0x38] sm:$0xff]
      %v311 = vld [vmem:[%s1] sm:$0xff]
      %v312 = vld [vmem:[%s1 + $0x8] sm:$0xff]
      %v313 = vld [vmem:[%s1 + $0x10] sm:$0xff]
      %v314 = vld [vmem:[%s1 + $0x18] sm:$0xff]
      %v315 = vld [vmem:[%s1 + $0x20] sm:$0xff]
      %v316 = vld [vmem:[%s1 + $0x28] sm:$0xff]
      %v317 = vld [vmem:[%s1 + $0x30] sm:$0xff]
      %v318 = vld [vmem:[%s1 + $0x38] sm:$0xff]
      %v319 = vld [vmem:[%s1 + $0x40] sm:$0xff]
      %v320 = vld [vmem:[%s1 + $0x48] sm:$0xff]
      %v321 = vld [vmem:[%s1 + $0x50] sm:$0xff]
      %v322 = vld [vmem:[%s1 + $0x58] sm:$0xff]
      %v323 = vld [vmem:[%s1 + $0x60] sm:$0xff]
      %v324 = vld [vmem:[%s1 + $0x68] sm:$0xff]
      %v325 = vld [vmem:[%s1 + $0x70] sm:$0xff]
      %v326 = vld [vmem:[%s1 + $0x78] sm:$0xff]
      %v327 = vld [vmem:[%s1 + $0x80] sm:$0xff]
      %v328 = vld [vmem:[%s1 + $0x88] sm:$0xff]
      %v329 = vld [vmem:[%s1 + $0x90] sm:$0xff]
      %v330 = vld [vmem:[%s1 + $0x98] sm:$0xff]
      %v331 = vld [vmem:[%s1 + $0xa0] sm:$0xff]
      %v332 = vld [vmem:[%s1 + $0xa8] sm:$0xff]
      %v333 = vld [vmem:[%s1 + $0xb0] sm:$0xff]
      %v334 = vld [vmem:[%s1 + $0xb8] sm:$0xff]
      %v335 = vld [vmem:[%s1 + $0xc0] sm:$0xff]
      %v336 = vld [vmem:[%s1 + $0xc8] sm:$0xff]
      %v337 = vld [vmem:[%s1 + $0xd0] sm:$0xff]
      %v338 = vld [vmem:[%s1 + $0xd8] sm:$0xff]
      %v339 = vld [vmem:[%s1 + $0xe0] sm:$0xff]
      %v340 = vld [vmem:[%s1 + $0xe8] sm:$0xff]
      %v341 = vld [vmem:[%s1 + $0xf0] sm:$0xff]
      %v342 = vld [vmem:[%s1 + $0xf8] sm:$0xff]
      %v343 = vld [vmem:[%s1 + $0x100] sm:$0xff]
      %v344 = vld [vmem:[%s1 + $0x108] sm:$0xff]
      %v345 = vld [vmem:[%s1 + $0x110] sm:$0xff]
      %v346 = vld [vmem:[%s1 + $0x118] sm:$0xff]
      %v347 = vld [vmem:[%s1 + $0x120] sm:$0xff]
      %v348 = vld [vmem:[%s1 + $0x128] sm:$0xff]
      %v349 = vld [vmem:[%s1 + $0x130] sm:$0xff]
      %v350 = vld [vmem:[%s1 + $0x138] sm:$0xff]
      %v351 = vld [vmem:[%s1 + $0x140] sm:$0xff]
      %v352 = vld [vmem:[%s1 + $0x148] sm:$0xff]
      %v353 = vld [vmem:[%s1 + $0x150] sm:$0xff]
      %v354 = vld [vmem:[%s1 + $0x158] sm:$0xff]
      %v355 = vld [vmem:[%s1 + $0x160] sm:$0xff]
      %v356 = vld [vmem:[%s1 + $0x168] sm:$0xff]
      %v357 = vld [vmem:[%s1 + $0x170] sm:$0xff]
      %v358 = vld [vmem:[%s1 + $0x178] sm:$0xff]
      %v359 = vld [vmem:[%s1 + $0x180] sm:$0xff]
      %v360 = vld [vmem:[%s1 + $0x188] sm:$0xff]
      %v361 = vld [vmem:[%s1 + $0x190] sm:$0xff]
      %v362 = vld [vmem:[%s1 + $0x198] sm:$0xff]
      %v363 = vld [vmem:[%s1 + $0x1a0] sm:$0xff]
      %v364 = vld [vmem:[%s1 + $0x1a8] sm:$0xff]
      %v365 = vld [vmem:[%s1 + $0x1b0] sm:$0xff]
      %v366 = vld [vmem:[%s1 + $0x1b8] sm:$0xff]
      %v367 = vld [vmem:[%s1 + $0x1c0] sm:$0xff]
      %v368 = vld [vmem:[%s1 + $0x1c8] sm:$0xff]
      %v369 = vld [vmem:[%s1 + $0x1d0] sm:$0xff]
      %v370 = vld [vmem:[%s1 + $0x1d8] sm:$0xff]
      %v371 = vld [vmem:[%s1 + $0x1e0] sm:$0xff]
      %v372 = vld [vmem:[%s1 + $0x1e8] sm:$0xff]
      %v373 = vld [vmem:[%s1 + $0x1f0] sm:$0xff]
      %v374 = vld [vmem:[%s1 + $0x1f8] sm:$0xff]
      %v375 = vld [vmem:[%s1 + $0x200] sm:$0xff]
      %v376 = vld [vmem:[%s1 + $0x208] sm:$0xff]
      %v377 = vld [vmem:[%s1 + $0x210] sm:$0xff]
      %v378 = vld [vmem:[%s1 + $0x218] sm:$0xff]
      %v379 = vld [vmem:[%s1 + $0x220] sm:$0xff]
      %v380 = vld [vmem:[%s1 + $0x228] sm:$0xff]
      %v381 = vld [vmem:[%s1 + $0x230] sm:$0xff]
      %v382 = vld [vmem:[%s1 + $0x238] sm:$0xff]
      %v383 = vld [vmem:[%s1 + $0x240] sm:$0xff]
      %v384 = vld [vmem:[%s1 + $0x248] sm:$0xff]
      %v385 = vld [vmem:[%s1 + $0x250] sm:$0xff]
      %v386 = vld [vmem:[%s1 + $0x258] sm:$0xff]
      %v387 = vld [vmem:[%s1 + $0x260] sm:$0xff]
      %v388 = vld [vmem:[%s1 + $0x268] sm:$0xff]
      %v389 = vld [vmem:[%s1 + $0x270] sm:$0xff]
      %v390 = vld [vmem:[%s1 + $0x278] sm:$0xff]
      %v391 = vld [vmem:[%s1 + $0x280] sm:$0xff]
      %v392 = vld [vmem:[%s1 + $0x288] sm:$0xff]
      %v393 = vld [vmem:[%s1 + $0x290] sm:$0xff]
      %v394 = vld [vmem:[%s1 + $0x298] sm:$0xff]
      %v395 = vld [vmem:[%s1 + $0x2a0] sm:$0xff]
      %v396 = vld [vmem:[%s1 + $0x2a8] sm:$0xff]
      %v397 = vld [vmem:[%s1 + $0x2b0] sm:$0xff]
      %v398 = vld [vmem:[%s1 + $0x2b8] sm:$0xff]
      %v399 = vld [vmem:[%s1 + $0x2c0] sm:$0xff]
      %v400 = vld [vmem:[%s1 + $0x2c8] sm:$0xff]
      %v401 = vld [vmem:[%s1 + $0x2d0] sm:$0xff]
      %v402 = vld [vmem:[%s1 + $0x2d8] sm:$0xff]
      %v403 = vld [vmem:[%s1 + $0x2e0] sm:$0xff]
      %v404 = vld [vmem:[%s1 + $0x2e8] sm:$0xff]
      %v405 = vld [vmem:[%s1 + $0x2f0] sm:$0xff]
      %v406 = vld [vmem:[%s1 + $0x2f8] sm:$0xff]
      %v407 = vld [vmem:[%s1 + $0x300] sm:$0xff]
      %v408 = vld [vmem:[%s1 + $0x308] sm:$0xff]
      %v409 = vld [vmem:[%s1 + $0x310] sm:$0xff]
      %v410 = vld [vmem:[%s1 + $0x318] sm:$0xff]
      %v411 = vld [vmem:[%s1 + $0x320] sm:$0xff]
      %v412 = vld [vmem:[%s1 + $0x328] sm:$0xff]
      %v413 = vld [vmem:[%s1 + $0x330] sm:$0xff]
      %v414 = vld [vmem:[%s1 + $0x338] sm:$0xff]
      %v415 = vld [vmem:[%s1 + $0x340] sm:$0xff]
      %v416 = vld [vmem:[%s1 + $0x348] sm:$0xff]
      %v417 = vld [vmem:[%s1 + $0x350] sm:$0xff]
      %v418 = vld [vmem:[%s1 + $0x358] sm:$0xff]
      %v419 = vld [vmem:[%s1 + $0x360] sm:$0xff]
      %v420 = vld [vmem:[%s1 + $0x368] sm:$0xff]
      %v421 = vld [vmem:[%s1 + $0x370] sm:$0xff]
      %v422 = vld [vmem:[%s1 + $0x378] sm:$0xff]
      %v423 = vld [vmem:[%s1 + $0x380] sm:$0xff]
      %v424 = vld [vmem:[%s1 + $0x388] sm:$0xff]
      %v425 = vld [vmem:[%s1 + $0x390] sm:$0xff]
      %v426 = vld [vmem:[%s1 + $0x398] sm:$0xff]
      %v427 = vld [vmem:[%s1 + $0x3a0] sm:$0xff]
      %v428 = vld [vmem:[%s1 + $0x3a8] sm:$0xff]
      %v429 = vld [vmem:[%s1 + $0x3b0] sm:$0xff]
      %v430 = vld [vmem:[%s1 + $0x3b8] sm:$0xff]
      %v431 = vld [vmem:[%s1 + $0x3c0] sm:$0xff]
      %v432 = vld [vmem:[%s1 + $0x3c8] sm:$0xff]
      %v433 = vld [vmem:[%s1 + $0x3d0] sm:$0xff]
      %v434 = vld [vmem:[%s1 + $0x3d8] sm:$0xff]
      %v435 = vld [vmem:[%s1 + $0x3e0] sm:$0xff]
      %v436 = vld [vmem:[%s1 + $0x3e8] sm:$0xff]
      %v437 = vld [vmem:[%s1 + $0x3f0] sm:$0xff]
      %v438 = vld [vmem:[%s1 + $0x3f8] sm:$0xff]
      %v439 = vld [vmem:[%s1 + $0x400] sm:$0xff]
      %v440 = vld [vmem:[%s1 + $0x408] sm:$0xff]
      %v441 = vld [vmem:[%s1 + $0x410] sm:$0xff]
      %v442 = vld [vmem:[%s1 + $0x418] sm:$0xff]
      %v443 = vld [vmem:[%s1 + $0x420] sm:$0xff]
      %v444 = vld [vmem:[%s1 + $0x428] sm:$0xff]
      %v445 = vld [vmem:[%s1 + $0x430] sm:$0xff]
      %v446 = vld [vmem:[%s1 + $0x438] sm:$0xff]
      %v447 = vld [vmem:[%s1 + $0x440] sm:$0xff]
      %v448 = vld [vmem:[%s1 + $0x448] sm:$0xff]
      %v449 = vld [vmem:[%s1 + $0x450] sm:$0xff]
      %v450 = vld [vmem:[%s1 + $0x458] sm:$0xff]
      %v451 = vld [vmem:[%s1 + $0x460] sm:$0xff]
      %v452 = vld [vmem:[%s1 + $0x468] sm:$0xff]
      %v453 = vld [vmem:[%s1 + $0x470] sm:$0xff]
      %v454 = vld [vmem:[%s1 + $0x478] sm:$0xff]
      %v455 = vld [vmem:[%s1 + $0x480] sm:$0xff]
      %v456 = vld [vmem:[%s1 + $0x488] sm:$0xff]
      %v457 = vld [vmem:[%s1 + $0x490] sm:$0xff]
      %v458 = vld [vmem:[%s1 + $0x498] sm:$0xff]
      %v459 = vld [vmem:[%s1 + $0x4a0] sm:$0xff]
      %v460 = vld [vmem:[%s1 + $0x4a8] sm:$0xff]
      %v461 = vld [vmem:[%s1 + $0x4b0] sm:$0xff]
      %v462 = vld [vmem:[%s1 + $0x4b8] sm:$0xff]
      %v463 = vld [vmem:[%s1 + $0x4c0] sm:$0xff]
      %v464 = vld [vmem:[%s1 + $0x4c8] sm:$0xff]
      %v465 = vld [vmem:[%s1 + $0x4d0] sm:$0xff]
      %v466 = vld [vmem:[%s1 + $0x4d8] sm:$0xff]
      %v467 = vld [vmem:[%s1 + $0x4e0] sm:$0xff]
      %v468 = vld [vmem:[%s1 + $0x4e8] sm:$0xff]
      %v469 = vld [vmem:[%s1 + $0x4f0] sm:$0xff]
      %v470 = vld [vmem:[%s1 + $0x4f8] sm:$0xff]
      %v471 = vld [vmem:[%s1 + $0x500] sm:$0xff]
      %v472 = vld [vmem:[%s1 + $0x508] sm:$0xff]
      %v473 = vld [vmem:[%s1 + $0x510] sm:$0xff]
      %v474 = vld [vmem:[%s1 + $0x518] sm:$0xff]
      %v475 = vld [vmem:[%s1 + $0x520] sm:$0xff]
      %v476 = vld [vmem:[%s1 + $0x528] sm:$0xff]
      %v477 = vld [vmem:[%s1 + $0x530] sm:$0xff]
      %v478 = vld [vmem:[%s1 + $0x538] sm:$0xff]
      %v479 = vld [vmem:[%s1 + $0x540] sm:$0xff]
      %v480 = vld [vmem:[%s1 + $0x548] sm:$0xff]
      %v481 = vld [vmem:[%s1 + $0x550] sm:$0xff]
      %v482 = vld [vmem:[%s1 + $0x558] sm:$0xff]
      %v483 = vld [vmem:[%s1 + $0x560] sm:$0xff]
      %v484 = vld [vmem:[%s1 + $0x568] sm:$0xff]
      %v485 = vld [vmem:[%s1 + $0x570] sm:$0xff]
      %v486 = vld [vmem:[%s1 + $0x578] sm:$0xff]
      %v487 = vld [vmem:[%s1 + $0x580] sm:$0xff]
      %v488 = vld [vmem:[%s1 + $0x588] sm:$0xff]
      %v489 = vld [vmem:[%s1 + $0x590] sm:$0xff]
      %v490 = vld [vmem:[%s1 + $0x598] sm:$0xff]
      %v491 = vld [vmem:[%s1 + $0x5a0] sm:$0xff]
      %v492 = vld [vmem:[%s1 + $0x5a8] sm:$0xff]
      %v493 = vld [vmem:[%s1 + $0x5b0] sm:$0xff]
      %v494 = vld [vmem:[%s1 + $0x5b8] sm:$0xff]
      %v495 = vld [vmem:[%s1 + $0x5c0] sm:$0xff]
      %v496 = vld [vmem:[%s1 + $0x5c8] sm:$0xff]
      %v497 = vld [vmem:[%s1 + $0x5d0] sm:$0xff]
      %v498 = vld [vmem:[%s1 + $0x5d8] sm:$0xff]
      %v499 = vld [vmem:[%s1 + $0x5e0] sm:$0xff]
      %v500 = vld [vmem:[%s1 + $0x5e8] sm:$0xff]
      %v501 = vld [vmem:[%s1 + $0x5f0] sm:$0xff]
      %v502 = vld [vmem:[%s1 + $0x5f8] sm:$0xff]
      %v503 = vld [vmem:[%s1 + $0x600] sm:$0xff]
      %v504 = vld [vmem:[%s1 + $0x608] sm:$0xff]
      %v505 = vld [vmem:[%s1 + $0x610] sm:$0xff]
      %v506 = vld [vmem:[%s1 + $0x618] sm:$0xff]
      %v507 = vld [vmem:[%s1 + $0x620] sm:$0xff]
      %v508 = vld [vmem:[%s1 + $0x628] sm:$0xff]
      %v509 = vld [vmem:[%s1 + $0x630] sm:$0xff]
      %v510 = vld [vmem:[%s1 + $0x638] sm:$0xff]
      %v511 = vld [vmem:[%s1 + $0x640] sm:$0xff]
      %v512 = vld [vmem:[%s1 + $0x648] sm:$0xff]
      %v513 = vld [vmem:[%s1 + $0x650] sm:$0xff]
      %v514 = vld [vmem:[%s1 + $0x658] sm:$0xff]
      %v515 = vld [vmem:[%s1 + $0x660] sm:$0xff]
      %v516 = vld [vmem:[%s1 + $0x668] sm:$0xff]
      %v517 = vld [vmem:[%s1 + $0x670] sm:$0xff]
      %v518 = vld [vmem:[%s1 + $0x678] sm:$0xff]
      %v519 = vld [vmem:[%s1 + $0x680] sm:$0xff]
      %v520 = vld [vmem:[%s1 + $0x688] sm:$0xff]
      %v521 = vld [vmem:[%s1 + $0x690] sm:$0xff]
      %v522 = vld [vmem:[%s1 + $0x698] sm:$0xff]
      %v523 = vld [vmem:[%s1 + $0x6a0] sm:$0xff]
      %v524 = vld [vmem:[%s1 + $0x6a8] sm:$0xff]
      %v525 = vld [vmem:[%s1 + $0x6b0] sm:$0xff]
      %v526 = vld [vmem:[%s1 + $0x6b8] sm:$0xff]
      %v527 = vld [vmem:[%s1 + $0x6c0] sm:$0xff]
      %v528 = vld [vmem:[%s1 + $0x6c8] sm:$0xff]
      %v529 = vld [vmem:[%s1 + $0x6d0] sm:$0xff]
      %v530 = vld [vmem:[%s1 + $0x6d8] sm:$0xff]
      %v531 = vld [vmem:[%s1 + $0x6e0] sm:$0xff]
      %v532 = vld [vmem:[%s1 + $0x6e8] sm:$0xff]
      %v533 = vld [vmem:[%s1 + $0x6f0] sm:$0xff]
      %v534 = vld [vmem:[%s1 + $0x6f8] sm:$0xff]
      %v535 = vld [vmem:[%s1 + $0x700] sm:$0xff]
      %v536 = vld [vmem:[%s1 + $0x708] sm:$0xff]
      %v537 = vld [vmem:[%s1 + $0x710] sm:$0xff]
      %v538 = vld [vmem:[%s1 + $0x718] sm:$0xff]
      %v539 = vld [vmem:[%s1 + $0x720] sm:$0xff]
      %v540 = vld [vmem:[%s1 + $0x728] sm:$0xff]
      %v541 = vld [vmem:[%s1 + $0x730] sm:$0xff]
      %v542 = vld [vmem:[%s1 + $0x738] sm:$0xff]
      %v543 = vld [vmem:[%s1 + $0x740] sm:$0xff]
      %v544 = vld [vmem:[%s1 + $0x748] sm:$0xff]
      %v545 = vld [vmem:[%s1 + $0x750] sm:$0xff]
      %v546 = vld [vmem:[%s1 + $0x758] sm:$0xff]
      %v547 = vld [vmem:[%s1 + $0x760] sm:$0xff]
      %v548 = vld [vmem:[%s1 + $0x768] sm:$0xff]
      %v549 = vld [vmem:[%s1 + $0x770] sm:$0xff]
      %v550 = vld [vmem:[%s1 + $0x778] sm:$0xff]
      %v551 = vld [vmem:[%s1 + $0x780] sm:$0xff]
      %v552 = vld [vmem:[%s1 + $0x788] sm:$0xff]
      %v553 = vld [vmem:[%s1 + $0x790] sm:$0xff]
      %v554 = vld [vmem:[%s1 + $0x798] sm:$0xff]
      %v555 = vld [vmem:[%s1 + $0x7a0] sm:$0xff]
      %v556 = vld [vmem:[%s1 + $0x7a8] sm:$0xff]
      %v557 = vld [vmem:[%s1 + $0x7b0] sm:$0xff]
      %v558 = vld [vmem:[%s1 + $0x7b8] sm:$0xff]
      %v559 = vld [vmem:[%s1 + $0x7c0] sm:$0xff]
      %v560 = vld [vmem:[%s1 + $0x7c8] sm:$0xff]
      %v561 = vld [vmem:[%s1 + $0x7d0] sm:$0xff]
      %v562 = vld [vmem:[%s1 + $0x7d8] sm:$0xff]
      %v563 = vld [vmem:[%s1 + $0x7e0] sm:$0xff]
      %v564 = vld [vmem:[%s1 + $0x7e8] sm:$0xff]
      %v565 = vld [vmem:[%s1 + $0x7f0] sm:$0xff]
      %v566 = vld [vmem:[%s1 + $0x7f8] sm:$0xff]
      %567 = vmatprep.subr.mxu0 %v312
      %568 = vmatpush1.msra.mxu0 %v311
      %569 = vmatprep.subr.mxu0 %v320
      %570 = vmatpush1.msra.mxu0 %v319
      %571 = vmatprep.subr.mxu0 %v328
      %572 = vmatpush1.msra.mxu0 %v327
      %573 = vmatprep.subr.mxu0 %v336
      %574 = vmatpush1.msra.mxu0 %v335
      %575 = vmatprep.subr.mxu0 %v344
      %576 = vmatpush1.msra.mxu0 %v343
      %577 = vmatprep.subr.mxu0 %v352
      %578 = vmatpush1.msra.mxu0 %v351
      %579 = vmatprep.subr.mxu0 %v360
      %580 = vmatpush1.msra.mxu0 %v359
      %581 = vmatprep.subr.mxu0 %v368
      %582 = vmatpush1.msra.mxu0 %v367
      %583 = vmatprep.subr.mxu0 %v376
      %584 = vmatpush1.msra.mxu0 %v375
      %585 = vmatprep.subr.mxu0 %v384
      %586 = vmatpush1.msra.mxu0 %v383
      %587 = vmatprep.subr.mxu0 %v392
      %588 = vmatpush1.msra.mxu0 %v391
      %589 = vmatprep.subr.mxu0 %v400
      %590 = vmatpush1.msra.mxu0 %v399
      %591 = vmatprep.subr.mxu0 %v408
      %592 = vmatpush1.msra.mxu0 %v407
      %593 = vmatprep.subr.mxu0 %v416
      %594 = vmatpush1.msra.mxu0 %v415
      %595 = vmatprep.subr.mxu0 %v424
      %596 = vmatpush1.msra.mxu0 %v423
      %597 = vmatprep.subr.mxu0 %v432
      %598 = vmatpush1.msra.mxu0 %v431
      %599 = vmatprep.subr.mxu0 %v440
      %600 = vmatpush1.msra.mxu0 %v439
      %601 = vmatprep.subr.mxu0 %v448
      %602 = vmatpush1.msra.mxu0 %v447
      %603 = vmatprep.subr.mxu0 %v456
      %604 = vmatpush1.msra.mxu0 %v455
      %605 = vmatprep.subr.mxu0 %v464
      %606 = vmatpush1.msra.mxu0 %v463
      %607 = vmatprep.subr.mxu0 %v472
      %608 = vmatpush1.msra.mxu0 %v471
      %609 = vmatprep.subr.mxu0 %v480
      %610 = vmatpush1.msra.mxu0 %v479
      %611 = vmatprep.subr.mxu0 %v488
      %612 = vmatpush1.msra.mxu0 %v487
      %613 = vmatprep.subr.mxu0 %v496
      %614 = vmatpush1.msra.mxu0 %v495
      %615 = vmatprep.subr.mxu0 %v504
      %616 = vmatpush1.msra.mxu0 %v503
      %617 = vmatprep.subr.mxu0 %v512
      %618 = vmatpush1.msra.mxu0 %v511
      %619 = vmatprep.subr.mxu0 %v520
      %620 = vmatpush1.msra.mxu0 %v519
      %621 = vmatprep.subr.mxu0 %v528
      %622 = vmatpush1.msra.mxu0 %v527
      %623 = vmatprep.subr.mxu0 %v536
      %624 = vmatpush1.msra.mxu0 %v535
      %625 = vmatprep.subr.mxu0 %v544
      %626 = vmatpush1.msra.mxu0 %v543
      %627 = vmatprep.subr.mxu0 %v552
      %628 = vmatpush1.msra.mxu0 %v551
      %629 = vmatprep.subr.mxu0 %v560
      %630 = vmatpush1.msra.mxu0 %v559
      %631 = vmatprep.mubr.f32.mxu0 %v304
      %632 = vmatmul.mubr.f32.gmra.mrb[0].mxu0 %v303
      %v633 = vpop.f32.mrb[0].mxu0
      %v634 = vadd.f32 0.0, %v633
      %v635 = vpop.f32.mrb[0].mxu0
      %v636 = vadd.f32 0.0, %v635
      %637 = vmatprep.mubr.f32.mxu0 %v306
      %638 = vmatmul.mubr.f32.gmra.mrb[0].mxu0 %v305
      %v639 = vpop.f32.mrb[0].mxu0
      %v640 = vadd.f32 0.0, %v639
      %v641 = vpop.f32.mrb[0].mxu0
      %v642 = vadd.f32 0.0, %v641
      %643 = vmatprep.mubr.f32.mxu0 %v308
      %644 = vmatmul.mubr.f32.gmra.mrb[0].mxu0 %v307
      %v645 = vpop.f32.mrb[0].mxu0
      %v646 = vadd.f32 0.0, %v645
      %v647 = vpop.f32.mrb[0].mxu0
      %v648 = vadd.f32 0.0, %v647
      %649 = vmatprep.mubr.f32.mxu0 %v310
      %650 = vmatmul.mubr.f32.gmra.mrb[0].mxu0 %v309
      %v651 = vpop.f32.mrb[0].mxu0
      %v652 = vadd.f32 0.0, %v651
      %v653 = vpop.f32.mrb[0].mxu0
      %v654 = vadd.f32 0.0, %v653
      %655 = vdwg.mxu0
      %656 = vmatprep.subr.mxu0 %v314
      %657 = vmatpush1.msra.mxu0 %v313
      %658 = vmatprep.subr.mxu0 %v322
      %659 = vmatpush1.msra.mxu0 %v321
      %660 = vmatprep.subr.mxu0 %v330
      %661 = vmatpush1.msra.mxu0 %v329
      %662 = vmatprep.subr.mxu0 %v338
      %663 = vmatpush1.msra.mxu0 %v337
      %664 = vmatprep.subr.mxu0 %v346
      %665 = vmatpush1.msra.mxu0 %v345
      %666 = vmatprep.subr.mxu0 %v354
      %667 = vmatpush1.msra.mxu0 %v353
      %668 = vmatprep.subr.mxu0 %v362
      %669 = vmatpush1.msra.mxu0 %v361
      %670 = vmatprep.subr.mxu0 %v370
      %671 = vmatpush1.msra.mxu0 %v369
      %672 = vmatprep.subr.mxu0 %v378
      %673 = vmatpush1.msra.mxu0 %v377
      %674 = vmatprep.subr.mxu0 %v386
      %675 = vmatpush1.msra.mxu0 %v385
      %676 = vmatprep.subr.mxu0 %v394
      %677 = vmatpush1.msra.mxu0 %v393
      %678 = vmatprep.subr.mxu0 %v402
      %679 = vmatpush1.msra.mxu0 %v401
      %680 = vmatprep.subr.mxu0 %v410
      %681 = vmatpush1.msra.mxu0 %v409
      %682 = vmatprep.subr.mxu0 %v418
      %683 = vmatpush1.msra.mxu0 %v417
      %684 = vmatprep.subr.mxu0 %v426
      %685 = vmatpush1.msra.mxu0 %v425
      %686 = vmatprep.subr.mxu0 %v434
      %687 = vmatpush1.msra.mxu0 %v433
      %688 = vmatprep.subr.mxu0 %v442
      %689 = vmatpush1.msra.mxu0 %v441
      %690 = vmatprep.subr.mxu0 %v450
      %691 = vmatpush1.msra.mxu0 %v449
      %692 = vmatprep.subr.mxu0 %v458
      %693 = vmatpush1.msra.mxu0 %v457
      %694 = vmatprep.subr.mxu0 %v466
      %695 = vmatpush1.msra.mxu0 %v465
      %696 = vmatprep.subr.mxu0 %v474
      %697 = vmatpush1.msra.mxu0 %v473
      %698 = vmatprep.subr.mxu0 %v482
      %699 = vmatpush1.msra.mxu0 %v481
      %700 = vmatprep.subr.mxu0 %v490
      %701 = vmatpush1.msra.mxu0 %v489
      %702 = vmatprep.subr.mxu0 %v498
      %703 = vmatpush1.msra.mxu0 %v497
      %704 = vmatprep.subr.mxu0 %v506
      %705 = vmatpush1.msra.mxu0 %v505
      %706 = vmatprep.subr.mxu0 %v514
      %707 = vmatpush1.msra.mxu0 %v513
      %708 = vmatprep.subr.mxu0 %v522
      %709 = vmatpush1.msra.mxu0 %v521
      %710 = vmatprep.subr.mxu0 %v530
      %711 = vmatpush1.msra.mxu0 %v529
      %712 = vmatprep.subr.mxu0 %v538
      %713 = vmatpush1.msra.mxu0 %v537
      %714 = vmatprep.subr.mxu0 %v546
      %715 = vmatpush1.msra.mxu0 %v545
      %716 = vmatprep.subr.mxu0 %v554
      %717 = vmatpush1.msra.mxu0 %v553
      %718 = vmatprep.subr.mxu0 %v562
      %719 = vmatpush1.msra.mxu0 %v561
      %720 = vmatprep.mubr.f32.mxu0 %v304
      %721 = vmatmul.mubr.f32.gmra.mrb[0].mxu0 %v303
      %v722 = vpop.f32.mrb[0].mxu0
      %v723 = vadd.f32 0.0, %v722
      %v724 = vpop.f32.mrb[0].mxu0
      %v725 = vadd.f32 0.0, %v724
      %726 = vmatprep.mubr.f32.mxu0 %v306
      %727 = vmatmul.mubr.f32.gmra.mrb[0].mxu0 %v305
      %v728 = vpop.f32.mrb[0].mxu0
      %v729 = vadd.f32 0.0, %v728
      %v730 = vpop.f32.mrb[0].mxu0
      %v731 = vadd.f32 0.0, %v730
      %732 = vmatprep.mubr.f32.mxu0 %v308
      %733 = vmatmul.mubr.f32.gmra.mrb[0].mxu0 %v307
      %v734 = vpop.f32.mrb[0].mxu0
      %v735 = vadd.f32 0.0, %v734
      %v736 = vpop.f32.mrb[0].mxu0
      %v737 = vadd.f32 0.0, %v736
      %738 = vmatprep.mubr.f32.mxu0 %v310
      %739 = vmatmul.mubr.f32.gmra.mrb[0].mxu0 %v309
      %v740 = vpop.f32.mrb[0].mxu0
      %v741 = vadd.f32 0.0, %v740
      %v742 = vpop.f32.mrb[0].mxu0
      %v743 = vadd.f32 0.0, %v742
      %744 = vdwg.mxu0
      %745 = vmatprep.subr.mxu0 %v316
      %746 = vmatpush1.msra.mxu0 %v315
      %747 = vmatprep.subr.mxu0 %v324
      %748 = vmatpush1.msra.mxu0 %v323
      %749 = vmatprep.subr.mxu0 %v332
      %750 = vmatpush1.msra.mxu0 %v331
      %751 = vmatprep.subr.mxu0 %v340
      %752 = vmatpush1.msra.mxu0 %v339
      %753 = vmatprep.subr.mxu0 %v348
      %754 = vmatpush1.msra.mxu0 %v347
      %755 = vmatprep.subr.mxu0 %v356
      %756 = vmatpush1.msra.mxu0 %v355
      %757 = vmatprep.subr.mxu0 %v364
      %758 = vmatpush1.msra.mxu0 %v363
      %759 = vmatprep.subr.mxu0 %v372
      %760 = vmatpush1.msra.mxu0 %v371
      %761 = vmatprep.subr.mxu0 %v380
      %762 = vmatpush1.msra.mxu0 %v379
      %763 = vmatprep.subr.mxu0 %v388
      %764 = vmatpush1.msra.mxu0 %v387
      %765 = vmatprep.subr.mxu0 %v396
      %766 = vmatpush1.msra.mxu0 %v395
      %767 = vmatprep.subr.mxu0 %v404
      %768 = vmatpush1.msra.mxu0 %v403
      %769 = vmatprep.subr.mxu0 %v412
      %770 = vmatpush1.msra.mxu0 %v411
      %771 = vmatprep.subr.mxu0 %v420
      %772 = vmatpush1.msra.mxu0 %v419
      %773 = vmatprep.subr.mxu0 %v428
      %774 = vmatpush1.msra.mxu0 %v427
      %775 = vmatprep.subr.mxu0 %v436
      %776 = vmatpush1.msra.mxu0 %v435
      %777 = vmatprep.subr.mxu0 %v444
      %778 = vmatpush1.msra.mxu0 %v443
      %779 = vmatprep.subr.mxu0 %v452
      %780 = vmatpush1.msra.mxu0 %v451
      %781 = vmatprep.subr.mxu0 %v460
      %782 = vmatpush1.msra.mxu0 %v459
      %783 = vmatprep.subr.mxu0 %v468
      %784 = vmatpush1.msra.mxu0 %v467
      %785 = vmatprep.subr.mxu0 %v476
      %786 = vmatpush1.msra.mxu0 %v475
      %787 = vmatprep.subr.mxu0 %v484
      %788 = vmatpush1.msra.mxu0 %v483
      %789 = vmatprep.subr.mxu0 %v492
      %790 = vmatpush1.msra.mxu0 %v491
      %791 = vmatprep.subr.mxu0 %v500
      %792 = vmatpush1.msra.mxu0 %v499
      %793 = vmatprep.subr.mxu0 %v508
      %794 = vmatpush1.msra.mxu0 %v507
      %795 = vmatprep.subr.mxu0 %v516
      %796 = vmatpush1.msra.mxu0 %v515
      %797 = vmatprep.subr.mxu0 %v524
      %798 = vmatpush1.msra.mxu0 %v523
      %799 = vmatprep.subr.mxu0 %v532
      %800 = vmatpush1.msra.mxu0 %v531
      %801 = vmatprep.subr.mxu0 %v540
      %802 = vmatpush1.msra.mxu0 %v539
      %803 = vmatprep.subr.mxu0 %v548
      %804 = vmatpush1.msra.mxu0 %v547
      %805 = vmatprep.subr.mxu0 %v556
      %806 = vmatpush1.msra.mxu0 %v555
      %807 = vmatprep.subr.mxu0 %v564
      %808 = vmatpush1.msra.mxu0 %v563
      %809 = vmatprep.mubr.f32.mxu0 %v304
      %810 = vmatmul.mubr.f32.gmra.mrb[0].mxu0 %v303
      %v811 = vpop.f32.mrb[0].mxu0
      %v812 = vadd.f32 0.0, %v811
      %v813 = vpop.f32.mrb[0].mxu0
      %v814 = vadd.f32 0.0, %v813
      %815 = vmatprep.mubr.f32.mxu0 %v306
      %816 = vmatmul.mubr.f32.gmra.mrb[0].mxu0 %v305
      %v817 = vpop.f32.mrb[0].mxu0
      %v818 = vadd.f32 0.0, %v817
      %v819 = vpop.f32.mrb[0].mxu0
      %v820 = vadd.f32 0.0, %v819
      %821 = vmatprep.mubr.f32.mxu0 %v308
      %822 = vmatmul.mubr.f32.gmra.mrb[0].mxu0 %v307
      %v823 = vpop.f32.mrb[0].mxu0
      %v824 = vadd.f32 0.0, %v823
      %v825 = vpop.f32.mrb[0].mxu0
      %v826 = vadd.f32 0.0, %v825
      %827 = vmatprep.mubr.f32.mxu0 %v310
      %828 = vmatmul.mubr.f32.gmra.mrb[0].mxu0 %v309
      %v829 = vpop.f32.mrb[0].mxu0
      %v830 = vadd.f32 0.0, %v829
      %v831 = vpop.f32.mrb[0].mxu0
      %v832 = vadd.f32 0.0, %v831
      %833 = vdwg.mxu0
      %834 = vmatprep.subr.mxu0 %v318
      %835 = vmatpush1.msra.mxu0 %v317
      %836 = vmatprep.subr.mxu0 %v326
      %837 = vmatpush1.msra.mxu0 %v325
      %838 = vmatprep.subr.mxu0 %v334
      %839 = vmatpush1.msra.mxu0 %v333
      %840 = vmatprep.subr.mxu0 %v342
      %841 = vmatpush1.msra.mxu0 %v341
      %842 = vmatprep.subr.mxu0 %v350
      %843 = vmatpush1.msra.mxu0 %v349
      %844 = vmatprep.subr.mxu0 %v358
      %845 = vmatpush1.msra.mxu0 %v357
      %846 = vmatprep.subr.mxu0 %v366
      %847 = vmatpush1.msra.mxu0 %v365
      %848 = vmatprep.subr.mxu0 %v374
      %849 = vmatpush1.msra.mxu0 %v373
      %850 = vmatprep.subr.mxu0 %v382
      %851 = vmatpush1.msra.mxu0 %v381
      %852 = vmatprep.subr.mxu0 %v390
      %853 = vmatpush1.msra.mxu0 %v389
      %854 = vmatprep.subr.mxu0 %v398
      %855 = vmatpush1.msra.mxu0 %v397
      %856 = vmatprep.subr.mxu0 %v406
      %857 = vmatpush1.msra.mxu0 %v405
      %858 = vmatprep.subr.mxu0 %v414
      %859 = vmatpush1.msra.mxu0 %v413
      %860 = vmatprep.subr.mxu0 %v422
      %861 = vmatpush1.msra.mxu0 %v421
      %862 = vmatprep.subr.mxu0 %v430
      %863 = vmatpush1.msra.mxu0 %v429
      %864 = vmatprep.subr.mxu0 %v438
      %865 = vmatpush1.msra.mxu0 %v437
      %866 = vmatprep.subr.mxu0 %v446
      %867 = vmatpush1.msra.mxu0 %v445
      %868 = vmatprep.subr.mxu0 %v454
      %869 = vmatpush1.msra.mxu0 %v453
      %870 = vmatprep.subr.mxu0 %v462
      %871 = vmatpush1.msra.mxu0 %v461
      %872 = vmatprep.subr.mxu0 %v470
      %873 = vmatpush1.msra.mxu0 %v469
      %874 = vmatprep.subr.mxu0 %v478
      %875 = vmatpush1.msra.mxu0 %v477
      %876 = vmatprep.subr.mxu0 %v486
      %877 = vmatpush1.msra.mxu0 %v485
      %878 = vmatprep.subr.mxu0 %v494
      %879 = vmatpush1.msra.mxu0 %v493
      %880 = vmatprep.subr.mxu0 %v502
      %881 = vmatpush1.msra.mxu0 %v501
      %882 = vmatprep.subr.mxu0 %v510
      %883 = vmatpush1.msra.mxu0 %v509
      %884 = vmatprep.subr.mxu0 %v518
      %885 = vmatpush1.msra.mxu0 %v517
      %886 = vmatprep.subr.mxu0 %v526
      %887 = vmatpush1.msra.mxu0 %v525
      %888 = vmatprep.subr.mxu0 %v534
      %889 = vmatpush1.msra.mxu0 %v533
      %890 = vmatprep.subr.mxu0 %v542
      %891 = vmatpush1.msra.mxu0 %v541
      %892 = vmatprep.subr.mxu0 %v550
      %893 = vmatpush1.msra.mxu0 %v549
      %894 = vmatprep.subr.mxu0 %v558
      %895 = vmatpush1.msra.mxu0 %v557
      %896 = vmatprep.subr.mxu0 %v566
      %897 = vmatpush1.msra.mxu0 %v565
      %898 = vmatprep.mubr.f32.mxu0 %v304
      %899 = vmatmul.mubr.f32.gmra.mrb[0].mxu0 %v303
      %v900 = vpop.f32.mrb[0].mxu0
      %v901 = vadd.f32 0.0, %v900
      %v902 = vpop.f32.mrb[0].mxu0
      %v903 = vadd.f32 0.0, %v902
      %904 = vmatprep.mubr.f32.mxu0 %v306
      %905 = vmatmul.mubr.f32.gmra.mrb[0].mxu0 %v305
      %v906 = vpop.f32.mrb[0].mxu0
      %v907 = vadd.f32 0.0, %v906
      %v908 = vpop.f32.mrb[0].mxu0
      %v909 = vadd.f32 0.0, %v908
      %910 = vmatprep.mubr.f32.mxu0 %v308
      %911 = vmatmul.mubr.f32.gmra.mrb[0].mxu0 %v307
      %v912 = vpop.f32.mrb[0].mxu0
      %v913 = vadd.f32 0.0, %v912
      %v914 = vpop.f32.mrb[0].mxu0
      %v915 = vadd.f32 0.0, %v914
      %916 = vmatprep.mubr.f32.mxu0 %v310
      %917 = vmatmul.mubr.f32.gmra.mrb[0].mxu0 %v309
      %v918 = vpop.f32.mrb[0].mxu0
      %v919 = vadd.f32 0.0, %v918
      %v920 = vpop.f32.mrb[0].mxu0
      %v921 = vadd.f32 0.0, %v920
      %922 = vdwg.mxu0
      %v923 = vld [vmem:[%s2] sm:$0xff]
      %v924 = vld [vmem:[%s2 + $0x8] sm:$0xff]
      %v925 = vld [vmem:[%s2 + $0x10] sm:$0xff]
      %v926 = vld [vmem:[%s2 + $0x18] sm:$0xff]
      %v927 = vld [vmem:[%s2 + $0x20] sm:$0xff]
      %v928 = vld [vmem:[%s2 + $0x28] sm:$0xff]
      %v929 = vld [vmem:[%s2 + $0x30] sm:$0xff]
      %v930 = vld [vmem:[%s2 + $0x38] sm:$0xff]
      %v931 = vld [vmem:[%s2 + $0x40] sm:$0xff]
      %v932 = vld [vmem:[%s2 + $0x48] sm:$0xff]
      %v933 = vld [vmem:[%s2 + $0x50] sm:$0xff]
      %v934 = vld [vmem:[%s2 + $0x58] sm:$0xff]
      %935 = vst [vmem:[#allocation2] sm:$0xff] 0.0
      %936 = vst [vmem:[#allocation2 + $0x8] sm:$0xff] 0.0
      %937 = vst [vmem:[#allocation2 + $0x10] sm:$0xff] 0.0
      %938 = vst [vmem:[#allocation2 + $0x18] sm:$0xff] 0.0
      %939 = vst [vmem:[#allocation2 + $0x20] sm:$0xff] 0.0
      %940 = vst [vmem:[#allocation2 + $0x28] sm:$0xff] 0.0
      %941 = vst [vmem:[#allocation2 + $0x30] sm:$0xff] 0.0
      %942 = vst [vmem:[#allocation2 + $0x38] sm:$0xff] 0.0
      %943 = vst [vmem:[#allocation2 + $0x40] sm:$0xff] 0.0
      %944 = vst [vmem:[#allocation2 + $0x48] sm:$0xff] 0.0
      %945 = vst [vmem:[#allocation2 + $0x50] sm:$0xff] 0.0
      %946 = vst [vmem:[#allocation2 + $0x58] sm:$0xff] 0.0
      %947 = vst [vmem:[#allocation2 + $0x60] sm:$0xff] 0.0
      %948 = vst [vmem:[#allocation2 + $0x68] sm:$0xff] 0.0
      %949 = vst [vmem:[#allocation2 + $0x70] sm:$0xff] 0.0
      %950 = vst [vmem:[#allocation2 + $0x78] sm:$0xff] 0.0
      %951 = vst [vmem:[#allocation2 + $0x80] sm:$0xff] 0.0
      %952 = vst [vmem:[#allocation2 + $0x88] sm:$0xff] 0.0
      %953 = vst [vmem:[#allocation2 + $0x90] sm:$0xff] 0.0
      %954 = vst [vmem:[#allocation2 + $0x98] sm:$0xff] 0.0
      %955 = vst [vmem:[#allocation2 + $0xa0] sm:$0xff] 0.0
      %956 = vst [vmem:[#allocation2 + $0xa8] sm:$0xff] 0.0
      %957 = vst [vmem:[#allocation2 + $0xb0] sm:$0xff] 0.0
      %958 = vst [vmem:[#allocation2 + $0xb8] sm:$0xff] 0.0
      %959 = vst [vmem:[#allocation2 + $0xc0] sm:$0xff] 0.0
      %960 = vst [vmem:[#allocation2 + $0xc8] sm:$0xff] 0.0
      %961 = vst [vmem:[#allocation2 + $0xd0] sm:$0xff] 0.0
      %962 = vst [vmem:[#allocation2 + $0xd8] sm:$0xff] 0.0
      %963 = vst [vmem:[#allocation2 + $0xe0] sm:$0xff] 0.0
      %964 = vst [vmem:[#allocation2 + $0xe8] sm:$0xff] 0.0
      %965 = vst [vmem:[#allocation2 + $0xf0] sm:$0xff] 0.0
      %966 = vst [vmem:[#allocation2 + $0xf8] sm:$0xff] 0.0
      %967 = vst [vmem:[#allocation2 + $0x100] sm:$0xff] 0.0
      %968 = vst [vmem:[#allocation2 + $0x108] sm:$0xff] 0.0
      %969 = vst [vmem:[#allocation2 + $0x110] sm:$0xff] 0.0
      %970 = vst [vmem:[#allocation2 + $0x118] sm:$0xff] 0.0
      %971 = vst [vmem:[#allocation2 + $0x120] sm:$0xff] 0.0
      %972 = vst [vmem:[#allocation2 + $0x128] sm:$0xff] 0.0
      %973 = vst [vmem:[#allocation2 + $0x130] sm:$0xff] 0.0
      %974 = vst [vmem:[#allocation2 + $0x138] sm:$0xff] 0.0
      %975 = vst [vmem:[#allocation2 + $0x8] sm:$0xff] %v634
      %976 = vst [vmem:[#allocation2 + $0x10] sm:$0xff] %v636
      %977 = vst [vmem:[#allocation2 + $0x18] sm:$0xff] %v723
      %978 = vst [vmem:[#allocation2 + $0x20] sm:$0xff] %v725
      %979 = vst [vmem:[#allocation2 + $0x28] sm:$0xff] %v812
      %980 = vst [vmem:[#allocation2 + $0x30] sm:$0xff] %v814
      %981 = vst [vmem:[#allocation2 + $0x38] sm:$0xff] %v901
      %982 = vst [vmem:[#allocation2 + $0x40] sm:$0xff] %v903
      %983 = vst [vmem:[#allocation2 + $0x58] sm:$0xff] %v640
      %984 = vst [vmem:[#allocation2 + $0x60] sm:$0xff] %v642
      %985 = vst [vmem:[#allocation2 + $0x68] sm:$0xff] %v729
      %986 = vst [vmem:[#allocation2 + $0x70] sm:$0xff] %v731
      %987 = vst [vmem:[#allocation2 + $0x78] sm:$0xff] %v818
      %988 = vst [vmem:[#allocation2 + $0x80] sm:$0xff] %v820
      %989 = vst [vmem:[#allocation2 + $0x88] sm:$0xff] %v907
      %990 = vst [vmem:[#allocation2 + $0x90] sm:$0xff] %v909
      %991 = vst [vmem:[#allocation2 + $0xa8] sm:$0xff] %v646
      %992 = vst [vmem:[#allocation2 + $0xb0] sm:$0xff] %v648
      %993 = vst [vmem:[#allocation2 + $0xb8] sm:$0xff] %v735
      %994 = vst [vmem:[#allocation2 + $0xc0] sm:$0xff] %v737
      %995 = vst [vmem:[#allocation2 + $0xc8] sm:$0xff] %v824
      %996 = vst [vmem:[#allocation2 + $0xd0] sm:$0xff] %v826
      %997 = vst [vmem:[#allocation2 + $0xd8] sm:$0xff] %v913
      %998 = vst [vmem:[#allocation2 + $0xe0] sm:$0xff] %v915
      %999 = vst [vmem:[#allocation2 + $0xf8] sm:$0xff] %v652
      %1000 = vst [vmem:[#allocation2 + $0x100] sm:$0xff] %v654
      %1001 = vst [vmem:[#allocation2 + $0x108] sm:$0xff] %v741
      %1002 = vst [vmem:[#allocation2 + $0x110] sm:$0xff] %v743
      %1003 = vst [vmem:[#allocation2 + $0x118] sm:$0xff] %v830
      %1004 = vst [vmem:[#allocation2 + $0x120] sm:$0xff] %v832
      %1005 = vst [vmem:[#allocation2 + $0x128] sm:$0xff] %v919
      %1006 = vst [vmem:[#allocation2 + $0x130] sm:$0xff] %v921
      %v1007 = vld [vmem:[#allocation2] sm:$0xff]
      %v1008 = vld [vmem:[#allocation2 + $0x8] sm:$0xff]
      %v1009 = vld [vmem:[#allocation2 + $0x10] sm:$0xff]
      %v1010 = vld [vmem:[#allocation2 + $0x18] sm:$0xff]
      %v1011 = vld [vmem:[#allocation2 + $0x20] sm:$0xff]
      %v1012 = vld [vmem:[#allocation2 + $0x28] sm:$0xff]
      %v1013 = vld [vmem:[#allocation2 + $0x30] sm:$0xff]
      %v1014 = vld [vmem:[#allocation2 + $0x38] sm:$0xff]
      %v1015 = vld [vmem:[#allocation2 + $0x40] sm:$0xff]
      %v1016 = vld [vmem:[#allocation2 + $0x50] sm:$0xff]
      %v1017 = vld [vmem:[#allocation2 + $0x58] sm:$0xff]
      %v1018 = vld [vmem:[#allocation2 + $0x60] sm:$0xff]
      %v1019 = vld [vmem:[#allocation2 + $0x68] sm:$0xff]
      %v1020 = vld [vmem:[#allocation2 + $0x70] sm:$0xff]
      %v1021 = vld [vmem:[#allocation2 + $0x78] sm:$0xff]
      %v1022 = vld [vmem:[#allocation2 + $0x80] sm:$0xff]
      %v1023 = vld [vmem:[#allocation2 + $0x88] sm:$0xff]
      %v1024 = vld [vmem:[#allocation2 + $0x90] sm:$0xff]
      %v1025 = vld [vmem:[#allocation2 + $0xa0] sm:$0xff]
      %v1026 = vld [vmem:[#allocation2 + $0xa8] sm:$0xff]
      %v1027 = vld [vmem:[#allocation2 + $0xb0] sm:$0xff]
      %v1028 = vld [vmem:[#allocation2 + $0xb8] sm:$0xff]
      %v1029 = vld [vmem:[#allocation2 + $0xc0] sm:$0xff]
      %v1030 = vld [vmem:[#allocation2 + $0xc8] sm:$0xff]
      %v1031 = vld [vmem:[#allocation2 + $0xd0] sm:$0xff]
      %v1032 = vld [vmem:[#allocation2 + $0xd8] sm:$0xff]
      %v1033 = vld [vmem:[#allocation2 + $0xe0] sm:$0xff]
      %v1034 = vld [vmem:[#allocation2 + $0xf0] sm:$0xff]
      %v1035 = vld [vmem:[#allocation2 + $0xf8] sm:$0xff]
      %v1036 = vld [vmem:[#allocation2 + $0x100] sm:$0xff]
      %v1037 = vld [vmem:[#allocation2 + $0x108] sm:$0xff]
      %v1038 = vld [vmem:[#allocation2 + $0x110] sm:$0xff]
      %v1039 = vld [vmem:[#allocation2 + $0x118] sm:$0xff]
      %v1040 = vld [vmem:[#allocation2 + $0x120] sm:$0xff]
      %v1041 = vld [vmem:[#allocation2 + $0x128] sm:$0xff]
      %v1042 = vld [vmem:[#allocation2 + $0x130] sm:$0xff]
      %vm1043 = vcmp.ge.s32.totalorder %v295, 1
      %vm1044 = vcmp.ge.s32.totalorder %v296, 1
      %vm1045 = vcmp.ge.s32.totalorder %v297, 1
      %vm1046 = vcmp.ge.s32.totalorder %v298, 1
      %vm1047 = vcmp.ge.s32.totalorder %v299, 1
      %vm1048 = vcmp.ge.s32.totalorder %v300, 1
      %vm1049 = vcmp.ge.s32.totalorder %v301, 1
      %vm1050 = vcmp.ge.s32.totalorder %v302, 1
      %v1051 = vsel %vm1043, 1, 0
      %v1052 = vsel %vm1044, 1, 0
      %v1053 = vsel %vm1045, 1, 0
      %v1054 = vsel %vm1046, 1, 0
      %v1055 = vsel %vm1047, 1, 0
      %v1056 = vsel %vm1048, 1, 0
      %v1057 = vsel %vm1049, 1, 0
      %v1058 = vsel %vm1050, 1, 0
      %vm1059 = vcmp.eq.s32.totalorder %v1051, 1
      %vm1060 = vcmp.eq.s32.totalorder %v1052, 1
      %vm1061 = vcmp.eq.s32.totalorder %v1053, 1
      %vm1062 = vcmp.eq.s32.totalorder %v1054, 1
      %vm1063 = vcmp.eq.s32.totalorder %v1055, 1
      %vm1064 = vcmp.eq.s32.totalorder %v1056, 1
      %vm1065 = vcmp.eq.s32.totalorder %v1057, 1
      %vm1066 = vcmp.eq.s32.totalorder %v1058, 1
      %1103 = vrot.lane.b32.xlu0 %v1007, 33
      %v1104 = vpop.permute.xlu0 %1103
      %1105 = vrot.lane.b32.xlu0 %v1008, 33
      %v1106 = vpop.permute.xlu0 %1105
      %1107 = vrot.lane.b32.xlu0 %v1009, 33
      %v1108 = vpop.permute.xlu0 %1107
      %1109 = vrot.lane.b32.xlu0 %v1010, 33
      %v1110 = vpop.permute.xlu0 %1109
      %1111 = vrot.lane.b32.xlu0 %v1011, 33
      %v1112 = vpop.permute.xlu0 %1111
      %1113 = vrot.lane.b32.xlu0 %v1012, 33
      %v1114 = vpop.permute.xlu0 %1113
      %1115 = vrot.lane.b32.xlu0 %v1013, 33
      %v1116 = vpop.permute.xlu0 %1115
      %1117 = vrot.lane.b32.xlu0 %v1014, 33
      %v1118 = vpop.permute.xlu0 %1117
      %1119 = vrot.lane.b32.xlu0 %v1015, 33
      %v1120 = vpop.permute.xlu0 %1119
      %1121 = vrot.lane.b32.xlu0 %v1016, 33
      %v1122 = vpop.permute.xlu0 %1121
      %1123 = vrot.lane.b32.xlu0 %v1017, 33
      %v1124 = vpop.permute.xlu0 %1123
      %1125 = vrot.lane.b32.xlu0 %v1018, 33
      %v1126 = vpop.permute.xlu0 %1125
      %1127 = vrot.lane.b32.xlu0 %v1019, 33
      %v1128 = vpop.permute.xlu0 %1127
      %1129 = vrot.lane.b32.xlu0 %v1020, 33
      %v1130 = vpop.permute.xlu0 %1129
      %1131 = vrot.lane.b32.xlu0 %v1021, 33
      %v1132 = vpop.permute.xlu0 %1131
      %1133 = vrot.lane.b32.xlu0 %v1022, 33
      %v1134 = vpop.permute.xlu0 %1133
      %1135 = vrot.lane.b32.xlu0 %v1023, 33
      %v1136 = vpop.permute.xlu0 %1135
      %1137 = vrot.lane.b32.xlu0 %v1024, 33
      %v1138 = vpop.permute.xlu0 %1137
      %1139 = vrot.lane.b32.xlu0 %v1025, 33
      %v1140 = vpop.permute.xlu0 %1139
      %1141 = vrot.lane.b32.xlu0 %v1026, 33
      %v1142 = vpop.permute.xlu0 %1141
      %1143 = vrot.lane.b32.xlu0 %v1027, 33
      %v1144 = vpop.permute.xlu0 %1143
      %1145 = vrot.lane.b32.xlu0 %v1028, 33
      %v1146 = vpop.permute.xlu0 %1145
      %1147 = vrot.lane.b32.xlu0 %v1029, 33
      %v1148 = vpop.permute.xlu0 %1147
      %1149 = vrot.lane.b32.xlu0 %v1030, 33
      %v1150 = vpop.permute.xlu0 %1149
      %1151 = vrot.lane.b32.xlu0 %v1031, 33
      %v1152 = vpop.permute.xlu0 %1151
      %1153 = vrot.lane.b32.xlu0 %v1032, 33
      %v1154 = vpop.permute.xlu0 %1153
      %1155 = vrot.lane.b32.xlu0 %v1033, 33
      %v1156 = vpop.permute.xlu0 %1155
      %1157 = vrot.lane.b32.xlu0 %v1034, 33
      %v1158 = vpop.permute.xlu0 %1157
      %1159 = vrot.lane.b32.xlu0 %v1035, 33
      %v1160 = vpop.permute.xlu0 %1159
      %1161 = vrot.lane.b32.xlu0 %v1036, 33
      %v1162 = vpop.permute.xlu0 %1161
      %1163 = vrot.lane.b32.xlu0 %v1037, 33
      %v1164 = vpop.permute.xlu0 %1163
      %1165 = vrot.lane.b32.xlu0 %v1038, 33
      %v1166 = vpop.permute.xlu0 %1165
      %1167 = vrot.lane.b32.xlu0 %v1039, 33
      %v1168 = vpop.permute.xlu0 %1167
      %1169 = vrot.lane.b32.xlu0 %v1040, 33
      %v1170 = vpop.permute.xlu0 %1169
      %1171 = vrot.lane.b32.xlu0 %v1041, 33
      %v1172 = vpop.permute.xlu0 %1171
      %1173 = vrot.lane.b32.xlu0 %v1042, 33
      %v1174 = vpop.permute.xlu0 %1173
      %vm1175 = vcmask 269312
      %v1176 = vsel %vm1175, %v1104, %v1106
      %v1177 = vsel %vm1175, %v1106, %v1108
      %v1178 = vsel %vm1175, %v1108, %v1110
      %v1179 = vsel %vm1175, %v1110, %v1112
      %v1180 = vsel %vm1175, %v1112, %v1114
      %v1181 = vsel %vm1175, %v1114, %v1116
      %v1182 = vsel %vm1175, %v1116, %v1118
      %v1183 = vsel %vm1175, %v1118, %v1120
      %v1184 = vsel %vm1175, %v1122, %v1124
      %v1185 = vsel %vm1175, %v1124, %v1126
      %v1186 = vsel %vm1175, %v1126, %v1128
      %v1187 = vsel %vm1175, %v1128, %v1130
      %v1188 = vsel %vm1175, %v1130, %v1132
      %v1189 = vsel %vm1175, %v1132, %v1134
      %v1190 = vsel %vm1175, %v1134, %v1136
      %v1191 = vsel %vm1175, %v1136, %v1138
      %v1192 = vsel %vm1175, %v1140, %v1142
      %v1193 = vsel %vm1175, %v1142, %v1144
      %v1194 = vsel %vm1175, %v1144, %v1146
      %v1195 = vsel %vm1175, %v1146, %v1148
      %v1196 = vsel %vm1175, %v1148, %v1150
      %v1197 = vsel %vm1175, %v1150, %v1152
      %v1198 = vsel %vm1175, %v1152, %v1154
      %v1199 = vsel %vm1175, %v1154, %v1156
      %v1200 = vsel %vm1175, %v1158, %v1160
      %v1201 = vsel %vm1175, %v1160, %v1162
      %v1202 = vsel %vm1175, %v1162, %v1164
      %v1203 = vsel %vm1175, %v1164, %v1166
      %v1204 = vsel %vm1175, %v1166, %v1168
      %v1205 = vsel %vm1175, %v1168, %v1170
      %v1206 = vsel %vm1175, %v1170, %v1172
      %v1207 = vsel %vm1175, %v1172, %v1174
      %v1240 = vsel %vm1059, %v1176, 0.0
      %v1241 = vsel %vm1060, %v1177, 0.0
      %v1242 = vsel %vm1061, %v1178, 0.0
      %v1243 = vsel %vm1062, %v1179, 0.0
      %v1244 = vsel %vm1063, %v1180, 0.0
      %v1245 = vsel %vm1064, %v1181, 0.0
      %v1246 = vsel %vm1065, %v1182, 0.0
      %v1247 = vsel %vm1066, %v1183, 0.0
      %v1248 = vsel %vm1059, %v1184, 0.0
      %v1249 = vsel %vm1060, %v1185, 0.0
      %v1250 = vsel %vm1061, %v1186, 0.0
      %v1251 = vsel %vm1062, %v1187, 0.0
      %v1252 = vsel %vm1063, %v1188, 0.0
      %v1253 = vsel %vm1064, %v1189, 0.0
      %v1254 = vsel %vm1065, %v1190, 0.0
      %v1255 = vsel %vm1066, %v1191, 0.0
      %v1256 = vsel %vm1059, %v1192, 0.0
      %v1257 = vsel %vm1060, %v1193, 0.0
      %v1258 = vsel %vm1061, %v1194, 0.0
      %v1259 = vsel %vm1062, %v1195, 0.0
      %v1260 = vsel %vm1063, %v1196, 0.0
      %v1261 = vsel %vm1064, %v1197, 0.0
      %v1262 = vsel %vm1065, %v1198, 0.0
      %v1263 = vsel %vm1066, %v1199, 0.0
      %v1264 = vsel %vm1059, %v1200, 0.0
      %v1265 = vsel %vm1060, %v1201, 0.0
      %v1266 = vsel %vm1061, %v1202, 0.0
      %v1267 = vsel %vm1062, %v1203, 0.0
      %v1268 = vsel %vm1063, %v1204, 0.0
      %v1269 = vsel %vm1064, %v1205, 0.0
      %v1270 = vsel %vm1065, %v1206, 0.0
      %v1271 = vsel %vm1066, %v1207, 0.0
      %vm1272 = vcmp.le.s32.totalorder %v295, 30
      %vm1273 = vcmp.le.s32.totalorder %v296, 30
      %vm1274 = vcmp.le.s32.totalorder %v297, 30
      %vm1275 = vcmp.le.s32.totalorder %v298, 30
      %vm1276 = vcmp.le.s32.totalorder %v299, 30
      %vm1277 = vcmp.le.s32.totalorder %v300, 30
      %vm1278 = vcmp.le.s32.totalorder %v301, 30
      %vm1279 = vcmp.le.s32.totalorder %v302, 30
      %v1280 = vsel %vm1272, 1, 0
      %v1281 = vsel %vm1273, 1, 0
      %v1282 = vsel %vm1274, 1, 0
      %v1283 = vsel %vm1275, 1, 0
      %v1284 = vsel %vm1276, 1, 0
      %v1285 = vsel %vm1277, 1, 0
      %v1286 = vsel %vm1278, 1, 0
      %v1287 = vsel %vm1279, 1, 0
      %vm1288 = vcmp.eq.s32.totalorder %v1280, 1
      %vm1289 = vcmp.eq.s32.totalorder %v1281, 1
      %vm1290 = vcmp.eq.s32.totalorder %v1282, 1
      %vm1291 = vcmp.eq.s32.totalorder %v1283, 1
      %vm1292 = vcmp.eq.s32.totalorder %v1284, 1
      %vm1293 = vcmp.eq.s32.totalorder %v1285, 1
      %vm1294 = vcmp.eq.s32.totalorder %v1286, 1
      %vm1295 = vcmp.eq.s32.totalorder %v1287, 1
      %1296 = vrot.lane.b32.xlu0 %v1007, 31
      %v1297 = vpop.permute.xlu0 %1296
      %1298 = vrot.lane.b32.xlu0 %v1008, 31
      %v1299 = vpop.permute.xlu0 %1298
      %1300 = vrot.lane.b32.xlu0 %v1009, 31
      %v1301 = vpop.permute.xlu0 %1300
      %1302 = vrot.lane.b32.xlu0 %v1010, 31
      %v1303 = vpop.permute.xlu0 %1302
      %1304 = vrot.lane.b32.xlu0 %v1011, 31
      %v1305 = vpop.permute.xlu0 %1304
      %1306 = vrot.lane.b32.xlu0 %v1012, 31
      %v1307 = vpop.permute.xlu0 %1306
      %1308 = vrot.lane.b32.xlu0 %v1013, 31
      %v1309 = vpop.permute.xlu0 %1308
      %1310 = vrot.lane.b32.xlu0 %v1014, 31
      %v1311 = vpop.permute.xlu0 %1310
      %1312 = vrot.lane.b32.xlu0 %v1015, 31
      %v1313 = vpop.permute.xlu0 %1312
      %1314 = vrot.lane.b32.xlu0 %v1016, 31
      %v1315 = vpop.permute.xlu0 %1314
      %1316 = vrot.lane.b32.xlu0 %v1017, 31
      %v1317 = vpop.permute.xlu0 %1316
      %1318 = vrot.lane.b32.xlu0 %v1018, 31
      %v1319 = vpop.permute.xlu0 %1318
      %1320 = vrot.lane.b32.xlu0 %v1019, 31
      %v1321 = vpop.permute.xlu0 %1320
      %1322 = vrot.lane.b32.xlu0 %v1020, 31
      %v1323 = vpop.permute.xlu0 %1322
      %1324 = vrot.lane.b32.xlu0 %v1021, 31
      %v1325 = vpop.permute.xlu0 %1324
      %1326 = vrot.lane.b32.xlu0 %v1022, 31
      %v1327 = vpop.permute.xlu0 %1326
      %1328 = vrot.lane.b32.xlu0 %v1023, 31
      %v1329 = vpop.permute.xlu0 %1328
      %1330 = vrot.lane.b32.xlu0 %v1024, 31
      %v1331 = vpop.permute.xlu0 %1330
      %1332 = vrot.lane.b32.xlu0 %v1025, 31
      %v1333 = vpop.permute.xlu0 %1332
      %1334 = vrot.lane.b32.xlu0 %v1026, 31
      %v1335 = vpop.permute.xlu0 %1334
      %1336 = vrot.lane.b32.xlu0 %v1027, 31
      %v1337 = vpop.permute.xlu0 %1336
      %1338 = vrot.lane.b32.xlu0 %v1028, 31
      %v1339 = vpop.permute.xlu0 %1338
      %1340 = vrot.lane.b32.xlu0 %v1029, 31
      %v1341 = vpop.permute.xlu0 %1340
      %1342 = vrot.lane.b32.xlu0 %v1030, 31
      %v1343 = vpop.permute.xlu0 %1342
      %1344 = vrot.lane.b32.xlu0 %v1031, 31
      %v1345 = vpop.permute.xlu0 %1344
      %1346 = vrot.lane.b32.xlu0 %v1032, 31
      %v1347 = vpop.permute.xlu0 %1346
      %1348 = vrot.lane.b32.xlu0 %v1033, 31
      %v1349 = vpop.permute.xlu0 %1348
      %1350 = vrot.lane.b32.xlu0 %v1034, 31
      %v1351 = vpop.permute.xlu0 %1350
      %1352 = vrot.lane.b32.xlu0 %v1035, 31
      %v1353 = vpop.permute.xlu0 %1352
      %1354 = vrot.lane.b32.xlu0 %v1036, 31
      %v1355 = vpop.permute.xlu0 %1354
      %1356 = vrot.lane.b32.xlu0 %v1037, 31
      %v1357 = vpop.permute.xlu0 %1356
      %1358 = vrot.lane.b32.xlu0 %v1038, 31
      %v1359 = vpop.permute.xlu0 %1358
      %1360 = vrot.lane.b32.xlu0 %v1039, 31
      %v1361 = vpop.permute.xlu0 %1360
      %1362 = vrot.lane.b32.xlu0 %v1040, 31
      %v1363 = vpop.permute.xlu0 %1362
      %1364 = vrot.lane.b32.xlu0 %v1041, 31
      %v1365 = vpop.permute.xlu0 %1364
      %1366 = vrot.lane.b32.xlu0 %v1042, 31
      %v1367 = vpop.permute.xlu0 %1366
      %vm1368 = vcmask 252928
      %v1369 = vsel %vm1368, %v1297, %v1299
      %v1370 = vsel %vm1368, %v1299, %v1301
      %v1371 = vsel %vm1368, %v1301, %v1303
      %v1372 = vsel %vm1368, %v1303, %v1305
      %v1373 = vsel %vm1368, %v1305, %v1307
      %v1374 = vsel %vm1368, %v1307, %v1309
      %v1375 = vsel %vm1368, %v1309, %v1311
      %v1376 = vsel %vm1368, %v1311, %v1313
      %v1377 = vsel %vm1368, %v1315, %v1317
      %v1378 = vsel %vm1368, %v1317, %v1319
      %v1379 = vsel %vm1368, %v1319, %v1321
      %v1380 = vsel %vm1368, %v1321, %v1323
      %v1381 = vsel %vm1368, %v1323, %v1325
      %v1382 = vsel %vm1368, %v1325, %v1327
      %v1383 = vsel %vm1368, %v1327, %v1329
      %v1384 = vsel %vm1368, %v1329, %v1331
      %v1385 = vsel %vm1368, %v1333, %v1335
      %v1386 = vsel %vm1368, %v1335, %v1337
      %v1387 = vsel %vm1368, %v1337, %v1339
      %v1388 = vsel %vm1368, %v1339, %v1341
      %v1389 = vsel %vm1368, %v1341, %v1343
      %v1390 = vsel %vm1368, %v1343, %v1345
      %v1391 = vsel %vm1368, %v1345, %v1347
      %v1392 = vsel %vm1368, %v1347, %v1349
      %v1393 = vsel %vm1368, %v1351, %v1353
      %v1394 = vsel %vm1368, %v1353, %v1355
      %v1395 = vsel %vm1368, %v1355, %v1357
      %v1396 = vsel %vm1368, %v1357, %v1359
      %v1397 = vsel %vm1368, %v1359, %v1361
      %v1398 = vsel %vm1368, %v1361, %v1363
      %v1399 = vsel %vm1368, %v1363, %v1365
      %v1400 = vsel %vm1368, %v1365, %v1367
      %v1433 = vsel %vm1288, %v1369, 0.0
      %v1434 = vsel %vm1289, %v1370, 0.0
      %v1435 = vsel %vm1290, %v1371, 0.0
      %v1436 = vsel %vm1291, %v1372, 0.0
      %v1437 = vsel %vm1292, %v1373, 0.0
      %v1438 = vsel %vm1293, %v1374, 0.0
      %v1439 = vsel %vm1294, %v1375, 0.0
      %v1440 = vsel %vm1295, %v1376, 0.0
      %v1441 = vsel %vm1288, %v1377, 0.0
      %v1442 = vsel %vm1289, %v1378, 0.0
      %v1443 = vsel %vm1290, %v1379, 0.0
      %v1444 = vsel %vm1291, %v1380, 0.0
      %v1445 = vsel %vm1292, %v1381, 0.0
      %v1446 = vsel %vm1293, %v1382, 0.0
      %v1447 = vsel %vm1294, %v1383, 0.0
      %v1448 = vsel %vm1295, %v1384, 0.0
      %v1449 = vsel %vm1288, %v1385, 0.0
      %v1450 = vsel %vm1289, %v1386, 0.0
      %v1451 = vsel %vm1290, %v1387, 0.0
      %v1452 = vsel %vm1291, %v1388, 0.0
      %v1453 = vsel %vm1292, %v1389, 0.0
      %v1454 = vsel %vm1293, %v1390, 0.0
      %v1455 = vsel %vm1294, %v1391, 0.0
      %v1456 = vsel %vm1295, %v1392, 0.0
      %v1457 = vsel %vm1288, %v1393, 0.0
      %v1458 = vsel %vm1289, %v1394, 0.0
      %v1459 = vsel %vm1290, %v1395, 0.0
      %v1460 = vsel %vm1291, %v1396, 0.0
      %v1461 = vsel %vm1292, %v1397, 0.0
      %v1462 = vsel %vm1293, %v1398, 0.0
      %v1463 = vsel %vm1294, %v1399, 0.0
      %v1464 = vsel %vm1295, %v1400, 0.0
      %1465 = vrot.lane.b32.xlu0 %v1007, 1
      %v1466 = vpop.permute.xlu0 %1465
      %1467 = vrot.lane.b32.xlu0 %v1008, 1
      %v1468 = vpop.permute.xlu0 %1467
      %1469 = vrot.lane.b32.xlu0 %v1009, 1
      %v1470 = vpop.permute.xlu0 %1469
      %1471 = vrot.lane.b32.xlu0 %v1010, 1
      %v1472 = vpop.permute.xlu0 %1471
      %1473 = vrot.lane.b32.xlu0 %v1011, 1
      %v1474 = vpop.permute.xlu0 %1473
      %1475 = vrot.lane.b32.xlu0 %v1012, 1
      %v1476 = vpop.permute.xlu0 %1475
      %1477 = vrot.lane.b32.xlu0 %v1013, 1
      %v1478 = vpop.permute.xlu0 %1477
      %1479 = vrot.lane.b32.xlu0 %v1014, 1
      %v1480 = vpop.permute.xlu0 %1479
      %1481 = vrot.lane.b32.xlu0 %v1015, 1
      %v1482 = vpop.permute.xlu0 %1481
      %1483 = vrot.lane.b32.xlu0 %v1016, 1
      %v1484 = vpop.permute.xlu0 %1483
      %1485 = vrot.lane.b32.xlu0 %v1017, 1
      %v1486 = vpop.permute.xlu0 %1485
      %1487 = vrot.lane.b32.xlu0 %v1018, 1
      %v1488 = vpop.permute.xlu0 %1487
      %1489 = vrot.lane.b32.xlu0 %v1019, 1
      %v1490 = vpop.permute.xlu0 %1489
      %1491 = vrot.lane.b32.xlu0 %v1020, 1
      %v1492 = vpop.permute.xlu0 %1491
      %1493 = vrot.lane.b32.xlu0 %v1021, 1
      %v1494 = vpop.permute.xlu0 %1493
      %1495 = vrot.lane.b32.xlu0 %v1022, 1
      %v1496 = vpop.permute.xlu0 %1495
      %1497 = vrot.lane.b32.xlu0 %v1023, 1
      %v1498 = vpop.permute.xlu0 %1497
      %1499 = vrot.lane.b32.xlu0 %v1024, 1
      %v1500 = vpop.permute.xlu0 %1499
      %1501 = vrot.lane.b32.xlu0 %v1025, 1
      %v1502 = vpop.permute.xlu0 %1501
      %1503 = vrot.lane.b32.xlu0 %v1026, 1
      %v1504 = vpop.permute.xlu0 %1503
      %1505 = vrot.lane.b32.xlu0 %v1027, 1
      %v1506 = vpop.permute.xlu0 %1505
      %1507 = vrot.lane.b32.xlu0 %v1028, 1
      %v1508 = vpop.permute.xlu0 %1507
      %1509 = vrot.lane.b32.xlu0 %v1029, 1
      %v1510 = vpop.permute.xlu0 %1509
      %1511 = vrot.lane.b32.xlu0 %v1030, 1
      %v1512 = vpop.permute.xlu0 %1511
      %1513 = vrot.lane.b32.xlu0 %v1031, 1
      %v1514 = vpop.permute.xlu0 %1513
      %1515 = vrot.lane.b32.xlu0 %v1032, 1
      %v1516 = vpop.permute.xlu0 %1515
      %1517 = vrot.lane.b32.xlu0 %v1033, 1
      %v1518 = vpop.permute.xlu0 %1517
      %1519 = vrot.lane.b32.xlu0 %v1034, 1
      %v1520 = vpop.permute.xlu0 %1519
      %1521 = vrot.lane.b32.xlu0 %v1035, 1
      %v1522 = vpop.permute.xlu0 %1521
      %1523 = vrot.lane.b32.xlu0 %v1036, 1
      %v1524 = vpop.permute.xlu0 %1523
      %1525 = vrot.lane.b32.xlu0 %v1037, 1
      %v1526 = vpop.permute.xlu0 %1525
      %1527 = vrot.lane.b32.xlu0 %v1038, 1
      %v1528 = vpop.permute.xlu0 %1527
      %1529 = vrot.lane.b32.xlu0 %v1039, 1
      %v1530 = vpop.permute.xlu0 %1529
      %1531 = vrot.lane.b32.xlu0 %v1040, 1
      %v1532 = vpop.permute.xlu0 %1531
      %1533 = vrot.lane.b32.xlu0 %v1041, 1
      %v1534 = vpop.permute.xlu0 %1533
      %1535 = vrot.lane.b32.xlu0 %v1042, 1
      %v1536 = vpop.permute.xlu0 %1535
      %vm1537 = vcmask 7168
      %v1538 = vsel %vm1537, %v1466, %v1468
      %v1539 = vsel %vm1537, %v1468, %v1470
      %v1540 = vsel %vm1537, %v1470, %v1472
      %v1541 = vsel %vm1537, %v1472, %v1474
      %v1542 = vsel %vm1537, %v1474, %v1476
      %v1543 = vsel %vm1537, %v1476, %v1478
      %v1544 = vsel %vm1537, %v1478, %v1480
      %v1545 = vsel %vm1537, %v1480, %v1482
      %v1546 = vsel %vm1537, %v1484, %v1486
      %v1547 = vsel %vm1537, %v1486, %v1488
      %v1548 = vsel %vm1537, %v1488, %v1490
      %v1549 = vsel %vm1537, %v1490, %v1492
      %v1550 = vsel %vm1537, %v1492, %v1494
      %v1551 = vsel %vm1537, %v1494, %v1496
      %v1552 = vsel %vm1537, %v1496, %v1498
      %v1553 = vsel %vm1537, %v1498, %v1500
      %v1554 = vsel %vm1537, %v1502, %v1504
      %v1555 = vsel %vm1537, %v1504, %v1506
      %v1556 = vsel %vm1537, %v1506, %v1508
      %v1557 = vsel %vm1537, %v1508, %v1510
      %v1558 = vsel %vm1537, %v1510, %v1512
      %v1559 = vsel %vm1537, %v1512, %v1514
      %v1560 = vsel %vm1537, %v1514, %v1516
      %v1561 = vsel %vm1537, %v1516, %v1518
      %v1562 = vsel %vm1537, %v1520, %v1522
      %v1563 = vsel %vm1537, %v1522, %v1524
      %v1564 = vsel %vm1537, %v1524, %v1526
      %v1565 = vsel %vm1537, %v1526, %v1528
      %v1566 = vsel %vm1537, %v1528, %v1530
      %v1567 = vsel %vm1537, %v1530, %v1532
      %v1568 = vsel %vm1537, %v1532, %v1534
      %v1569 = vsel %vm1537, %v1534, %v1536
      %v1602 = vsel %vm1059, %v1538, 0.0
      %v1603 = vsel %vm1060, %v1539, 0.0
      %v1604 = vsel %vm1061, %v1540, 0.0
      %v1605 = vsel %vm1062, %v1541, 0.0
      %v1606 = vsel %vm1063, %v1542, 0.0
      %v1607 = vsel %vm1064, %v1543, 0.0
      %v1608 = vsel %vm1065, %v1544, 0.0
      %v1609 = vsel %vm1066, %v1545, 0.0
      %v1610 = vsel %vm1059, %v1546, 0.0
      %v1611 = vsel %vm1060, %v1547, 0.0
      %v1612 = vsel %vm1061, %v1548, 0.0
      %v1613 = vsel %vm1062, %v1549, 0.0
      %v1614 = vsel %vm1063, %v1550, 0.0
      %v1615 = vsel %vm1064, %v1551, 0.0
      %v1616 = vsel %vm1065, %v1552, 0.0
      %v1617 = vsel %vm1066, %v1553, 0.0
      %v1618 = vsel %vm1059, %v1554, 0.0
      %v1619 = vsel %vm1060, %v1555, 0.0
      %v1620 = vsel %vm1061, %v1556, 0.0
      %v1621 = vsel %vm1062, %v1557, 0.0
      %v1622 = vsel %vm1063, %v1558, 0.0
      %v1623 = vsel %vm1064, %v1559, 0.0
      %v1624 = vsel %vm1065, %v1560, 0.0
      %v1625 = vsel %vm1066, %v1561, 0.0
      %v1626 = vsel %vm1059, %v1562, 0.0
      %v1627 = vsel %vm1060, %v1563, 0.0
      %v1628 = vsel %vm1061, %v1564, 0.0
      %v1629 = vsel %vm1062, %v1565, 0.0
      %v1630 = vsel %vm1063, %v1566, 0.0
      %v1631 = vsel %vm1064, %v1567, 0.0
      %v1632 = vsel %vm1065, %v1568, 0.0
      %v1633 = vsel %vm1066, %v1569, 0.0
      %v1634 = vld [vmem:[#allocation2 + $0x8] sm:$0xff]
      %v1635 = vld [vmem:[#allocation2 + $0x10] sm:$0xff]
      %v1636 = vld [vmem:[#allocation2 + $0x18] sm:$0xff]
      %v1637 = vld [vmem:[#allocation2 + $0x20] sm:$0xff]
      %v1638 = vld [vmem:[#allocation2 + $0x28] sm:$0xff]
      %v1639 = vld [vmem:[#allocation2 + $0x30] sm:$0xff]
      %v1640 = vld [vmem:[#allocation2 + $0x38] sm:$0xff]
      %v1641 = vld [vmem:[#allocation2 + $0x40] sm:$0xff]
      %v1642 = vld [vmem:[#allocation2 + $0x48] sm:$0xff]
      %v1643 = vld [vmem:[#allocation2 + $0x58] sm:$0xff]
      %v1644 = vld [vmem:[#allocation2 + $0x60] sm:$0xff]
      %v1645 = vld [vmem:[#allocation2 + $0x68] sm:$0xff]
      %v1646 = vld [vmem:[#allocation2 + $0x70] sm:$0xff]
      %v1647 = vld [vmem:[#allocation2 + $0x78] sm:$0xff]
      %v1648 = vld [vmem:[#allocation2 + $0x80] sm:$0xff]
      %v1649 = vld [vmem:[#allocation2 + $0x88] sm:$0xff]
      %v1650 = vld [vmem:[#allocation2 + $0x90] sm:$0xff]
      %v1651 = vld [vmem:[#allocation2 + $0x98] sm:$0xff]
      %v1652 = vld [vmem:[#allocation2 + $0xa8] sm:$0xff]
      %v1653 = vld [vmem:[#allocation2 + $0xb0] sm:$0xff]
      %v1654 = vld [vmem:[#allocation2 + $0xb8] sm:$0xff]
      %v1655 = vld [vmem:[#allocation2 + $0xc0] sm:$0xff]
      %v1656 = vld [vmem:[#allocation2 + $0xc8] sm:$0xff]
      %v1657 = vld [vmem:[#allocation2 + $0xd0] sm:$0xff]
      %v1658 = vld [vmem:[#allocation2 + $0xd8] sm:$0xff]
      %v1659 = vld [vmem:[#allocation2 + $0xe0] sm:$0xff]
      %v1660 = vld [vmem:[#allocation2 + $0xe8] sm:$0xff]
      %v1661 = vld [vmem:[#allocation2 + $0xf8] sm:$0xff]
      %v1662 = vld [vmem:[#allocation2 + $0x100] sm:$0xff]
      %v1663 = vld [vmem:[#allocation2 + $0x108] sm:$0xff]
      %v1664 = vld [vmem:[#allocation2 + $0x110] sm:$0xff]
      %v1665 = vld [vmem:[#allocation2 + $0x118] sm:$0xff]
      %v1666 = vld [vmem:[#allocation2 + $0x120] sm:$0xff]
      %v1667 = vld [vmem:[#allocation2 + $0x128] sm:$0xff]
      %v1668 = vld [vmem:[#allocation2 + $0x130] sm:$0xff]
      %v1669 = vld [vmem:[#allocation2 + $0x138] sm:$0xff]
      %1706 = vrot.lane.b32.xlu0 %v1634, 127
      %v1707 = vpop.permute.xlu0 %1706
      %1708 = vrot.lane.b32.xlu0 %v1635, 127
      %v1709 = vpop.permute.xlu0 %1708
      %1710 = vrot.lane.b32.xlu0 %v1636, 127
      %v1711 = vpop.permute.xlu0 %1710
      %1712 = vrot.lane.b32.xlu0 %v1637, 127
      %v1713 = vpop.permute.xlu0 %1712
      %1714 = vrot.lane.b32.xlu0 %v1638, 127
      %v1715 = vpop.permute.xlu0 %1714
      %1716 = vrot.lane.b32.xlu0 %v1639, 127
      %v1717 = vpop.permute.xlu0 %1716
      %1718 = vrot.lane.b32.xlu0 %v1640, 127
      %v1719 = vpop.permute.xlu0 %1718
      %1720 = vrot.lane.b32.xlu0 %v1641, 127
      %v1721 = vpop.permute.xlu0 %1720
      %1722 = vrot.lane.b32.xlu0 %v1642, 127
      %v1723 = vpop.permute.xlu0 %1722
      %1724 = vrot.lane.b32.xlu0 %v1643, 127
      %v1725 = vpop.permute.xlu0 %1724
      %1726 = vrot.lane.b32.xlu0 %v1644, 127
      %v1727 = vpop.permute.xlu0 %1726
      %1728 = vrot.lane.b32.xlu0 %v1645, 127
      %v1729 = vpop.permute.xlu0 %1728
      %1730 = vrot.lane.b32.xlu0 %v1646, 127
      %v1731 = vpop.permute.xlu0 %1730
      %1732 = vrot.lane.b32.xlu0 %v1647, 127
      %v1733 = vpop.permute.xlu0 %1732
      %1734 = vrot.lane.b32.xlu0 %v1648, 127
      %v1735 = vpop.permute.xlu0 %1734
      %1736 = vrot.lane.b32.xlu0 %v1649, 127
      %v1737 = vpop.permute.xlu0 %1736
      %1738 = vrot.lane.b32.xlu0 %v1650, 127
      %v1739 = vpop.permute.xlu0 %1738
      %1740 = vrot.lane.b32.xlu0 %v1651, 127
      %v1741 = vpop.permute.xlu0 %1740
      %1742 = vrot.lane.b32.xlu0 %v1652, 127
      %v1743 = vpop.permute.xlu0 %1742
      %1744 = vrot.lane.b32.xlu0 %v1653, 127
      %v1745 = vpop.permute.xlu0 %1744
      %1746 = vrot.lane.b32.xlu0 %v1654, 127
      %v1747 = vpop.permute.xlu0 %1746
      %1748 = vrot.lane.b32.xlu0 %v1655, 127
      %v1749 = vpop.permute.xlu0 %1748
      %1750 = vrot.lane.b32.xlu0 %v1656, 127
      %v1751 = vpop.permute.xlu0 %1750
      %1752 = vrot.lane.b32.xlu0 %v1657, 127
      %v1753 = vpop.permute.xlu0 %1752
      %1754 = vrot.lane.b32.xlu0 %v1658, 127
      %v1755 = vpop.permute.xlu0 %1754
      %1756 = vrot.lane.b32.xlu0 %v1659, 127
      %v1757 = vpop.permute.xlu0 %1756
      %1758 = vrot.lane.b32.xlu0 %v1660, 127
      %v1759 = vpop.permute.xlu0 %1758
      %1760 = vrot.lane.b32.xlu0 %v1661, 127
      %v1761 = vpop.permute.xlu0 %1760
      %1762 = vrot.lane.b32.xlu0 %v1662, 127
      %v1763 = vpop.permute.xlu0 %1762
      %1764 = vrot.lane.b32.xlu0 %v1663, 127
      %v1765 = vpop.permute.xlu0 %1764
      %1766 = vrot.lane.b32.xlu0 %v1664, 127
      %v1767 = vpop.permute.xlu0 %1766
      %1768 = vrot.lane.b32.xlu0 %v1665, 127
      %v1769 = vpop.permute.xlu0 %1768
      %1770 = vrot.lane.b32.xlu0 %v1666, 127
      %v1771 = vpop.permute.xlu0 %1770
      %1772 = vrot.lane.b32.xlu0 %v1667, 127
      %v1773 = vpop.permute.xlu0 %1772
      %1774 = vrot.lane.b32.xlu0 %v1668, 127
      %v1775 = vpop.permute.xlu0 %1774
      %1776 = vrot.lane.b32.xlu0 %v1669, 127
      %v1777 = vpop.permute.xlu0 %1776
      %vm1778 = vcmask 1039360
      %v1779 = vsel %vm1778, %v1707, %v1709
      %v1780 = vsel %vm1778, %v1709, %v1711
      %v1781 = vsel %vm1778, %v1711, %v1713
      %v1782 = vsel %vm1778, %v1713, %v1715
      %v1783 = vsel %vm1778, %v1715, %v1717
      %v1784 = vsel %vm1778, %v1717, %v1719
      %v1785 = vsel %vm1778, %v1719, %v1721
      %v1786 = vsel %vm1778, %v1721, %v1723
      %v1787 = vsel %vm1778, %v1725, %v1727
      %v1788 = vsel %vm1778, %v1727, %v1729
      %v1789 = vsel %vm1778, %v1729, %v1731
      %v1790 = vsel %vm1778, %v1731, %v1733
      %v1791 = vsel %vm1778, %v1733, %v1735
      %v1792 = vsel %vm1778, %v1735, %v1737
      %v1793 = vsel %vm1778, %v1737, %v1739
      %v1794 = vsel %vm1778, %v1739, %v1741
      %v1795 = vsel %vm1778, %v1743, %v1745
      %v1796 = vsel %vm1778, %v1745, %v1747
      %v1797 = vsel %vm1778, %v1747, %v1749
      %v1798 = vsel %vm1778, %v1749, %v1751
      %v1799 = vsel %vm1778, %v1751, %v1753
      %v1800 = vsel %vm1778, %v1753, %v1755
      %v1801 = vsel %vm1778, %v1755, %v1757
      %v1802 = vsel %vm1778, %v1757, %v1759
      %v1803 = vsel %vm1778, %v1761, %v1763
      %v1804 = vsel %vm1778, %v1763, %v1765
      %v1805 = vsel %vm1778, %v1765, %v1767
      %v1806 = vsel %vm1778, %v1767, %v1769
      %v1807 = vsel %vm1778, %v1769, %v1771
      %v1808 = vsel %vm1778, %v1771, %v1773
      %v1809 = vsel %vm1778, %v1773, %v1775
      %v1810 = vsel %vm1778, %v1775, %v1777
      %v1843 = vsel %vm1288, %v1779, 0.0
      %v1844 = vsel %vm1289, %v1780, 0.0
      %v1845 = vsel %vm1290, %v1781, 0.0
      %v1846 = vsel %vm1291, %v1782, 0.0
      %v1847 = vsel %vm1292, %v1783, 0.0
      %v1848 = vsel %vm1293, %v1784, 0.0
      %v1849 = vsel %vm1294, %v1785, 0.0
      %v1850 = vsel %vm1295, %v1786, 0.0
      %v1851 = vsel %vm1288, %v1787, 0.0
      %v1852 = vsel %vm1289, %v1788, 0.0
      %v1853 = vsel %vm1290, %v1789, 0.0
      %v1854 = vsel %vm1291, %v1790, 0.0
      %v1855 = vsel %vm1292, %v1791, 0.0
      %v1856 = vsel %vm1293, %v1792, 0.0
      %v1857 = vsel %vm1294, %v1793, 0.0
      %v1858 = vsel %vm1295, %v1794, 0.0
      %v1859 = vsel %vm1288, %v1795, 0.0
      %v1860 = vsel %vm1289, %v1796, 0.0
      %v1861 = vsel %vm1290, %v1797, 0.0
      %v1862 = vsel %vm1291, %v1798, 0.0
      %v1863 = vsel %vm1292, %v1799, 0.0
      %v1864 = vsel %vm1293, %v1800, 0.0
      %v1865 = vsel %vm1294, %v1801, 0.0
      %v1866 = vsel %vm1295, %v1802, 0.0
      %v1867 = vsel %vm1288, %v1803, 0.0
      %v1868 = vsel %vm1289, %v1804, 0.0
      %v1869 = vsel %vm1290, %v1805, 0.0
      %v1870 = vsel %vm1291, %v1806, 0.0
      %v1871 = vsel %vm1292, %v1807, 0.0
      %v1872 = vsel %vm1293, %v1808, 0.0
      %v1873 = vsel %vm1294, %v1809, 0.0
      %v1874 = vsel %vm1295, %v1810, 0.0
      %1875 = vrot.lane.b32.xlu0 %v1634, 97
      %v1876 = vpop.permute.xlu0 %1875
      %1877 = vrot.lane.b32.xlu0 %v1635, 97
      %v1878 = vpop.permute.xlu0 %1877
      %1879 = vrot.lane.b32.xlu0 %v1636, 97
      %v1880 = vpop.permute.xlu0 %1879
      %1881 = vrot.lane.b32.xlu0 %v1637, 97
      %v1882 = vpop.permute.xlu0 %1881
      %1883 = vrot.lane.b32.xlu0 %v1638, 97
      %v1884 = vpop.permute.xlu0 %1883
      %1885 = vrot.lane.b32.xlu0 %v1639, 97
      %v1886 = vpop.permute.xlu0 %1885
      %1887 = vrot.lane.b32.xlu0 %v1640, 97
      %v1888 = vpop.permute.xlu0 %1887
      %1889 = vrot.lane.b32.xlu0 %v1641, 97
      %v1890 = vpop.permute.xlu0 %1889
      %1891 = vrot.lane.b32.xlu0 %v1642, 97
      %v1892 = vpop.permute.xlu0 %1891
      %1893 = vrot.lane.b32.xlu0 %v1643, 97
      %v1894 = vpop.permute.xlu0 %1893
      %1895 = vrot.lane.b32.xlu0 %v1644, 97
      %v1896 = vpop.permute.xlu0 %1895
      %1897 = vrot.lane.b32.xlu0 %v1645, 97
      %v1898 = vpop.permute.xlu0 %1897
      %1899 = vrot.lane.b32.xlu0 %v1646, 97
      %v1900 = vpop.permute.xlu0 %1899
      %1901 = vrot.lane.b32.xlu0 %v1647, 97
      %v1902 = vpop.permute.xlu0 %1901
      %1903 = vrot.lane.b32.xlu0 %v1648, 97
      %v1904 = vpop.permute.xlu0 %1903
      %1905 = vrot.lane.b32.xlu0 %v1649, 97
      %v1906 = vpop.permute.xlu0 %1905
      %1907 = vrot.lane.b32.xlu0 %v1650, 97
      %v1908 = vpop.permute.xlu0 %1907
      %1909 = vrot.lane.b32.xlu0 %v1651, 97
      %v1910 = vpop.permute.xlu0 %1909
      %1911 = vrot.lane.b32.xlu0 %v1652, 97
      %v1912 = vpop.permute.xlu0 %1911
      %1913 = vrot.lane.b32.xlu0 %v1653, 97
      %v1914 = vpop.permute.xlu0 %1913
      %1915 = vrot.lane.b32.xlu0 %v1654, 97
      %v1916 = vpop.permute.xlu0 %1915
      %1917 = vrot.lane.b32.xlu0 %v1655, 97
      %v1918 = vpop.permute.xlu0 %1917
      %1919 = vrot.lane.b32.xlu0 %v1656, 97
      %v1920 = vpop.permute.xlu0 %1919
      %1921 = vrot.lane.b32.xlu0 %v1657, 97
      %v1922 = vpop.permute.xlu0 %1921
      %1923 = vrot.lane.b32.xlu0 %v1658, 97
      %v1924 = vpop.permute.xlu0 %1923
      %1925 = vrot.lane.b32.xlu0 %v1659, 97
      %v1926 = vpop.permute.xlu0 %1925
      %1927 = vrot.lane.b32.xlu0 %v1660, 97
      %v1928 = vpop.permute.xlu0 %1927
      %1929 = vrot.lane.b32.xlu0 %v1661, 97
      %v1930 = vpop.permute.xlu0 %1929
      %1931 = vrot.lane.b32.xlu0 %v1662, 97
      %v1932 = vpop.permute.xlu0 %1931
      %1933 = vrot.lane.b32.xlu0 %v1663, 97
      %v1934 = vpop.permute.xlu0 %1933
      %1935 = vrot.lane.b32.xlu0 %v1664, 97
      %v1936 = vpop.permute.xlu0 %1935
      %1937 = vrot.lane.b32.xlu0 %v1665, 97
      %v1938 = vpop.permute.xlu0 %1937
      %1939 = vrot.lane.b32.xlu0 %v1666, 97
      %v1940 = vpop.permute.xlu0 %1939
      %1941 = vrot.lane.b32.xlu0 %v1667, 97
      %v1942 = vpop.permute.xlu0 %1941
      %1943 = vrot.lane.b32.xlu0 %v1668, 97
      %v1944 = vpop.permute.xlu0 %1943
      %1945 = vrot.lane.b32.xlu0 %v1669, 97
      %v1946 = vpop.permute.xlu0 %1945
      %vm1947 = vcmask 793600
      %v1948 = vsel %vm1947, %v1876, %v1878
      %v1949 = vsel %vm1947, %v1878, %v1880
      %v1950 = vsel %vm1947, %v1880, %v1882
      %v1951 = vsel %vm1947, %v1882, %v1884
      %v1952 = vsel %vm1947, %v1884, %v1886
      %v1953 = vsel %vm1947, %v1886, %v1888
      %v1954 = vsel %vm1947, %v1888, %v1890
      %v1955 = vsel %vm1947, %v1890, %v1892
      %v1956 = vsel %vm1947, %v1894, %v1896
      %v1957 = vsel %vm1947, %v1896, %v1898
      %v1958 = vsel %vm1947, %v1898, %v1900
      %v1959 = vsel %vm1947, %v1900, %v1902
      %v1960 = vsel %vm1947, %v1902, %v1904
      %v1961 = vsel %vm1947, %v1904, %v1906
      %v1962 = vsel %vm1947, %v1906, %v1908
      %v1963 = vsel %vm1947, %v1908, %v1910
      %v1964 = vsel %vm1947, %v1912, %v1914
      %v1965 = vsel %vm1947, %v1914, %v1916
      %v1966 = vsel %vm1947, %v1916, %v1918
      %v1967 = vsel %vm1947, %v1918, %v1920
      %v1968 = vsel %vm1947, %v1920, %v1922
      %v1969 = vsel %vm1947, %v1922, %v1924
      %v1970 = vsel %vm1947, %v1924, %v1926
      %v1971 = vsel %vm1947, %v1926, %v1928
      %v1972 = vsel %vm1947, %v1930, %v1932
      %v1973 = vsel %vm1947, %v1932, %v1934
      %v1974 = vsel %vm1947, %v1934, %v1936
      %v1975 = vsel %vm1947, %v1936, %v1938
      %v1976 = vsel %vm1947, %v1938, %v1940
      %v1977 = vsel %vm1947, %v1940, %v1942
      %v1978 = vsel %vm1947, %v1942, %v1944
      %v1979 = vsel %vm1947, %v1944, %v1946
      %v2012 = vsel %vm1059, %v1948, 0.0
      %v2013 = vsel %vm1060, %v1949, 0.0
      %v2014 = vsel %vm1061, %v1950, 0.0
      %v2015 = vsel %vm1062, %v1951, 0.0
      %v2016 = vsel %vm1063, %v1952, 0.0
      %v2017 = vsel %vm1064, %v1953, 0.0
      %v2018 = vsel %vm1065, %v1954, 0.0
      %v2019 = vsel %vm1066, %v1955, 0.0
      %v2020 = vsel %vm1059, %v1956, 0.0
      %v2021 = vsel %vm1060, %v1957, 0.0
      %v2022 = vsel %vm1061, %v1958, 0.0
      %v2023 = vsel %vm1062, %v1959, 0.0
      %v2024 = vsel %vm1063, %v1960, 0.0
      %v2025 = vsel %vm1064, %v1961, 0.0
      %v2026 = vsel %vm1065, %v1962, 0.0
      %v2027 = vsel %vm1066, %v1963, 0.0
      %v2028 = vsel %vm1059, %v1964, 0.0
      %v2029 = vsel %vm1060, %v1965, 0.0
      %v2030 = vsel %vm1061, %v1966, 0.0
      %v2031 = vsel %vm1062, %v1967, 0.0
      %v2032 = vsel %vm1063, %v1968, 0.0
      %v2033 = vsel %vm1064, %v1969, 0.0
      %v2034 = vsel %vm1065, %v1970, 0.0
      %v2035 = vsel %vm1066, %v1971, 0.0
      %v2036 = vsel %vm1059, %v1972, 0.0
      %v2037 = vsel %vm1060, %v1973, 0.0
      %v2038 = vsel %vm1061, %v1974, 0.0
      %v2039 = vsel %vm1062, %v1975, 0.0
      %v2040 = vsel %vm1063, %v1976, 0.0
      %v2041 = vsel %vm1064, %v1977, 0.0
      %v2042 = vsel %vm1065, %v1978, 0.0
      %v2043 = vsel %vm1066, %v1979, 0.0
      %2044 = vrot.lane.b32.xlu0 %v1634, 95
      %v2045 = vpop.permute.xlu0 %2044
      %2046 = vrot.lane.b32.xlu0 %v1635, 95
      %v2047 = vpop.permute.xlu0 %2046
      %2048 = vrot.lane.b32.xlu0 %v1636, 95
      %v2049 = vpop.permute.xlu0 %2048
      %2050 = vrot.lane.b32.xlu0 %v1637, 95
      %v2051 = vpop.permute.xlu0 %2050
      %2052 = vrot.lane.b32.xlu0 %v1638, 95
      %v2053 = vpop.permute.xlu0 %2052
      %2054 = vrot.lane.b32.xlu0 %v1639, 95
      %v2055 = vpop.permute.xlu0 %2054
      %2056 = vrot.lane.b32.xlu0 %v1640, 95
      %v2057 = vpop.permute.xlu0 %2056
      %2058 = vrot.lane.b32.xlu0 %v1641, 95
      %v2059 = vpop.permute.xlu0 %2058
      %2060 = vrot.lane.b32.xlu0 %v1642, 95
      %v2061 = vpop.permute.xlu0 %2060
      %2062 = vrot.lane.b32.xlu0 %v1643, 95
      %v2063 = vpop.permute.xlu0 %2062
      %2064 = vrot.lane.b32.xlu0 %v1644, 95
      %v2065 = vpop.permute.xlu0 %2064
      %2066 = vrot.lane.b32.xlu0 %v1645, 95
      %v2067 = vpop.permute.xlu0 %2066
      %2068 = vrot.lane.b32.xlu0 %v1646, 95
      %v2069 = vpop.permute.xlu0 %2068
      %2070 = vrot.lane.b32.xlu0 %v1647, 95
      %v2071 = vpop.permute.xlu0 %2070
      %2072 = vrot.lane.b32.xlu0 %v1648, 95
      %v2073 = vpop.permute.xlu0 %2072
      %2074 = vrot.lane.b32.xlu0 %v1649, 95
      %v2075 = vpop.permute.xlu0 %2074
      %2076 = vrot.lane.b32.xlu0 %v1650, 95
      %v2077 = vpop.permute.xlu0 %2076
      %2078 = vrot.lane.b32.xlu0 %v1651, 95
      %v2079 = vpop.permute.xlu0 %2078
      %2080 = vrot.lane.b32.xlu0 %v1652, 95
      %v2081 = vpop.permute.xlu0 %2080
      %2082 = vrot.lane.b32.xlu0 %v1653, 95
      %v2083 = vpop.permute.xlu0 %2082
      %2084 = vrot.lane.b32.xlu0 %v1654, 95
      %v2085 = vpop.permute.xlu0 %2084
      %2086 = vrot.lane.b32.xlu0 %v1655, 95
      %v2087 = vpop.permute.xlu0 %2086
      %2088 = vrot.lane.b32.xlu0 %v1656, 95
      %v2089 = vpop.permute.xlu0 %2088
      %2090 = vrot.lane.b32.xlu0 %v1657, 95
      %v2091 = vpop.permute.xlu0 %2090
      %2092 = vrot.lane.b32.xlu0 %v1658, 95
      %v2093 = vpop.permute.xlu0 %2092
      %2094 = vrot.lane.b32.xlu0 %v1659, 95
      %v2095 = vpop.permute.xlu0 %2094
      %2096 = vrot.lane.b32.xlu0 %v1660, 95
      %v2097 = vpop.permute.xlu0 %2096
      %2098 = vrot.lane.b32.xlu0 %v1661, 95
      %v2099 = vpop.permute.xlu0 %2098
      %2100 = vrot.lane.b32.xlu0 %v1662, 95
      %v2101 = vpop.permute.xlu0 %2100
      %2102 = vrot.lane.b32.xlu0 %v1663, 95
      %v2103 = vpop.permute.xlu0 %2102
      %2104 = vrot.lane.b32.xlu0 %v1664, 95
      %v2105 = vpop.permute.xlu0 %2104
      %2106 = vrot.lane.b32.xlu0 %v1665, 95
      %v2107 = vpop.permute.xlu0 %2106
      %2108 = vrot.lane.b32.xlu0 %v1666, 95
      %v2109 = vpop.permute.xlu0 %2108
      %2110 = vrot.lane.b32.xlu0 %v1667, 95
      %v2111 = vpop.permute.xlu0 %2110
      %2112 = vrot.lane.b32.xlu0 %v1668, 95
      %v2113 = vpop.permute.xlu0 %2112
      %2114 = vrot.lane.b32.xlu0 %v1669, 95
      %v2115 = vpop.permute.xlu0 %2114
      %vm2116 = vcmask 777216
      %v2117 = vsel %vm2116, %v2045, %v2047
      %v2118 = vsel %vm2116, %v2047, %v2049
      %v2119 = vsel %vm2116, %v2049, %v2051
      %v2120 = vsel %vm2116, %v2051, %v2053
      %v2121 = vsel %vm2116, %v2053, %v2055
      %v2122 = vsel %vm2116, %v2055, %v2057
      %v2123 = vsel %vm2116, %v2057, %v2059
      %v2124 = vsel %vm2116, %v2059, %v2061
      %v2125 = vsel %vm2116, %v2063, %v2065
      %v2126 = vsel %vm2116, %v2065, %v2067
      %v2127 = vsel %vm2116, %v2067, %v2069
      %v2128 = vsel %vm2116, %v2069, %v2071
      %v2129 = vsel %vm2116, %v2071, %v2073
      %v2130 = vsel %vm2116, %v2073, %v2075
      %v2131 = vsel %vm2116, %v2075, %v2077
      %v2132 = vsel %vm2116, %v2077, %v2079
      %v2133 = vsel %vm2116, %v2081, %v2083
      %v2134 = vsel %vm2116, %v2083, %v2085
      %v2135 = vsel %vm2116, %v2085, %v2087
      %v2136 = vsel %vm2116, %v2087, %v2089
      %v2137 = vsel %vm2116, %v2089, %v2091
      %v2138 = vsel %vm2116, %v2091, %v2093
      %v2139 = vsel %vm2116, %v2093, %v2095
      %v2140 = vsel %vm2116, %v2095, %v2097
      %v2141 = vsel %vm2116, %v2099, %v2101
      %v2142 = vsel %vm2116, %v2101, %v2103
      %v2143 = vsel %vm2116, %v2103, %v2105
      %v2144 = vsel %vm2116, %v2105, %v2107
      %v2145 = vsel %vm2116, %v2107, %v2109
      %v2146 = vsel %vm2116, %v2109, %v2111
      %v2147 = vsel %vm2116, %v2111, %v2113
      %v2148 = vsel %vm2116, %v2113, %v2115
      %v2181 = vsel %vm1288, %v2117, 0.0
      %v2182 = vsel %vm1289, %v2118, 0.0
      %v2183 = vsel %vm1290, %v2119, 0.0
      %v2184 = vsel %vm1291, %v2120, 0.0
      %v2185 = vsel %vm1292, %v2121, 0.0
      %v2186 = vsel %vm1293, %v2122, 0.0
      %v2187 = vsel %vm1294, %v2123, 0.0
      %v2188 = vsel %vm1295, %v2124, 0.0
      %v2189 = vsel %vm1288, %v2125, 0.0
      %v2190 = vsel %vm1289, %v2126, 0.0
      %v2191 = vsel %vm1290, %v2127, 0.0
      %v2192 = vsel %vm1291, %v2128, 0.0
      %v2193 = vsel %vm1292, %v2129, 0.0
      %v2194 = vsel %vm1293, %v2130, 0.0
      %v2195 = vsel %vm1294, %v2131, 0.0
      %v2196 = vsel %vm1295, %v2132, 0.0
      %v2197 = vsel %vm1288, %v2133, 0.0
      %v2198 = vsel %vm1289, %v2134, 0.0
      %v2199 = vsel %vm1290, %v2135, 0.0
      %v2200 = vsel %vm1291, %v2136, 0.0
      %v2201 = vsel %vm1292, %v2137, 0.0
      %v2202 = vsel %vm1293, %v2138, 0.0
      %v2203 = vsel %vm1294, %v2139, 0.0
      %v2204 = vsel %vm1295, %v2140, 0.0
      %v2205 = vsel %vm1288, %v2141, 0.0
      %v2206 = vsel %vm1289, %v2142, 0.0
      %v2207 = vsel %vm1290, %v2143, 0.0
      %v2208 = vsel %vm1291, %v2144, 0.0
      %v2209 = vsel %vm1292, %v2145, 0.0
      %v2210 = vsel %vm1293, %v2146, 0.0
      %v2211 = vsel %vm1294, %v2147, 0.0
      %v2212 = vsel %vm1295, %v2148, 0.0
      %2213 = vrot.lane.b32.xlu0 %v1007, 32
      %v2214 = vpop.permute.xlu0 %2213
      %2215 = vrot.lane.b32.xlu0 %v1008, 32
      %v2216 = vpop.permute.xlu0 %2215
      %2217 = vrot.lane.b32.xlu0 %v1009, 32
      %v2218 = vpop.permute.xlu0 %2217
      %2219 = vrot.lane.b32.xlu0 %v1010, 32
      %v2220 = vpop.permute.xlu0 %2219
      %2221 = vrot.lane.b32.xlu0 %v1011, 32
      %v2222 = vpop.permute.xlu0 %2221
      %2223 = vrot.lane.b32.xlu0 %v1012, 32
      %v2224 = vpop.permute.xlu0 %2223
      %2225 = vrot.lane.b32.xlu0 %v1013, 32
      %v2226 = vpop.permute.xlu0 %2225
      %2227 = vrot.lane.b32.xlu0 %v1014, 32
      %v2228 = vpop.permute.xlu0 %2227
      %2229 = vrot.lane.b32.xlu0 %v1015, 32
      %v2230 = vpop.permute.xlu0 %2229
      %2231 = vrot.lane.b32.xlu0 %v1016, 32
      %v2232 = vpop.permute.xlu0 %2231
      %2233 = vrot.lane.b32.xlu0 %v1017, 32
      %v2234 = vpop.permute.xlu0 %2233
      %2235 = vrot.lane.b32.xlu0 %v1018, 32
      %v2236 = vpop.permute.xlu0 %2235
      %2237 = vrot.lane.b32.xlu0 %v1019, 32
      %v2238 = vpop.permute.xlu0 %2237
      %2239 = vrot.lane.b32.xlu0 %v1020, 32
      %v2240 = vpop.permute.xlu0 %2239
      %2241 = vrot.lane.b32.xlu0 %v1021, 32
      %v2242 = vpop.permute.xlu0 %2241
      %2243 = vrot.lane.b32.xlu0 %v1022, 32
      %v2244 = vpop.permute.xlu0 %2243
      %2245 = vrot.lane.b32.xlu0 %v1023, 32
      %v2246 = vpop.permute.xlu0 %2245
      %2247 = vrot.lane.b32.xlu0 %v1024, 32
      %v2248 = vpop.permute.xlu0 %2247
      %2249 = vrot.lane.b32.xlu0 %v1025, 32
      %v2250 = vpop.permute.xlu0 %2249
      %2251 = vrot.lane.b32.xlu0 %v1026, 32
      %v2252 = vpop.permute.xlu0 %2251
      %2253 = vrot.lane.b32.xlu0 %v1027, 32
      %v2254 = vpop.permute.xlu0 %2253
      %2255 = vrot.lane.b32.xlu0 %v1028, 32
      %v2256 = vpop.permute.xlu0 %2255
      %2257 = vrot.lane.b32.xlu0 %v1029, 32
      %v2258 = vpop.permute.xlu0 %2257
      %2259 = vrot.lane.b32.xlu0 %v1030, 32
      %v2260 = vpop.permute.xlu0 %2259
      %2261 = vrot.lane.b32.xlu0 %v1031, 32
      %v2262 = vpop.permute.xlu0 %2261
      %2263 = vrot.lane.b32.xlu0 %v1032, 32
      %v2264 = vpop.permute.xlu0 %2263
      %2265 = vrot.lane.b32.xlu0 %v1033, 32
      %v2266 = vpop.permute.xlu0 %2265
      %2267 = vrot.lane.b32.xlu0 %v1034, 32
      %v2268 = vpop.permute.xlu0 %2267
      %2269 = vrot.lane.b32.xlu0 %v1035, 32
      %v2270 = vpop.permute.xlu0 %2269
      %2271 = vrot.lane.b32.xlu0 %v1036, 32
      %v2272 = vpop.permute.xlu0 %2271
      %2273 = vrot.lane.b32.xlu0 %v1037, 32
      %v2274 = vpop.permute.xlu0 %2273
      %2275 = vrot.lane.b32.xlu0 %v1038, 32
      %v2276 = vpop.permute.xlu0 %2275
      %2277 = vrot.lane.b32.xlu0 %v1039, 32
      %v2278 = vpop.permute.xlu0 %2277
      %2279 = vrot.lane.b32.xlu0 %v1040, 32
      %v2280 = vpop.permute.xlu0 %2279
      %2281 = vrot.lane.b32.xlu0 %v1041, 32
      %v2282 = vpop.permute.xlu0 %2281
      %2283 = vrot.lane.b32.xlu0 %v1042, 32
      %v2284 = vpop.permute.xlu0 %2283
      %vm2285 = vcmask 261120
      %v2286 = vsel %vm2285, %v2214, %v2216
      %v2287 = vsel %vm2285, %v2216, %v2218
      %v2288 = vsel %vm2285, %v2218, %v2220
      %v2289 = vsel %vm2285, %v2220, %v2222
      %v2290 = vsel %vm2285, %v2222, %v2224
      %v2291 = vsel %vm2285, %v2224, %v2226
      %v2292 = vsel %vm2285, %v2226, %v2228
      %v2293 = vsel %vm2285, %v2228, %v2230
      %v2294 = vsel %vm2285, %v2232, %v2234
      %v2295 = vsel %vm2285, %v2234, %v2236
      %v2296 = vsel %vm2285, %v2236, %v2238
      %v2297 = vsel %vm2285, %v2238, %v2240
      %v2298 = vsel %vm2285, %v2240, %v2242
      %v2299 = vsel %vm2285, %v2242, %v2244
      %v2300 = vsel %vm2285, %v2244, %v2246
      %v2301 = vsel %vm2285, %v2246, %v2248
      %v2302 = vsel %vm2285, %v2250, %v2252
      %v2303 = vsel %vm2285, %v2252, %v2254
      %v2304 = vsel %vm2285, %v2254, %v2256
      %v2305 = vsel %vm2285, %v2256, %v2258
      %v2306 = vsel %vm2285, %v2258, %v2260
      %v2307 = vsel %vm2285, %v2260, %v2262
      %v2308 = vsel %vm2285, %v2262, %v2264
      %v2309 = vsel %vm2285, %v2264, %v2266
      %v2310 = vsel %vm2285, %v2268, %v2270
      %v2311 = vsel %vm2285, %v2270, %v2272
      %v2312 = vsel %vm2285, %v2272, %v2274
      %v2313 = vsel %vm2285, %v2274, %v2276
      %v2314 = vsel %vm2285, %v2276, %v2278
      %v2315 = vsel %vm2285, %v2278, %v2280
      %v2316 = vsel %vm2285, %v2280, %v2282
      %v2317 = vsel %vm2285, %v2282, %v2284
      %2350 = vrot.lane.b32.xlu0 %v1634, 96
      %v2351 = vpop.permute.xlu0 %2350
      %2352 = vrot.lane.b32.xlu0 %v1635, 96
      %v2353 = vpop.permute.xlu0 %2352
      %2354 = vrot.lane.b32.xlu0 %v1636, 96
      %v2355 = vpop.permute.xlu0 %2354
      %2356 = vrot.lane.b32.xlu0 %v1637, 96
      %v2357 = vpop.permute.xlu0 %2356
      %2358 = vrot.lane.b32.xlu0 %v1638, 96
      %v2359 = vpop.permute.xlu0 %2358
      %2360 = vrot.lane.b32.xlu0 %v1639, 96
      %v2361 = vpop.permute.xlu0 %2360
      %2362 = vrot.lane.b32.xlu0 %v1640, 96
      %v2363 = vpop.permute.xlu0 %2362
      %2364 = vrot.lane.b32.xlu0 %v1641, 96
      %v2365 = vpop.permute.xlu0 %2364
      %2366 = vrot.lane.b32.xlu0 %v1642, 96
      %v2367 = vpop.permute.xlu0 %2366
      %2368 = vrot.lane.b32.xlu0 %v1643, 96
      %v2369 = vpop.permute.xlu0 %2368
      %2370 = vrot.lane.b32.xlu0 %v1644, 96
      %v2371 = vpop.permute.xlu0 %2370
      %2372 = vrot.lane.b32.xlu0 %v1645, 96
      %v2373 = vpop.permute.xlu0 %2372
      %2374 = vrot.lane.b32.xlu0 %v1646, 96
      %v2375 = vpop.permute.xlu0 %2374
      %2376 = vrot.lane.b32.xlu0 %v1647, 96
      %v2377 = vpop.permute.xlu0 %2376
      %2378 = vrot.lane.b32.xlu0 %v1648, 96
      %v2379 = vpop.permute.xlu0 %2378
      %2380 = vrot.lane.b32.xlu0 %v1649, 96
      %v2381 = vpop.permute.xlu0 %2380
      %2382 = vrot.lane.b32.xlu0 %v1650, 96
      %v2383 = vpop.permute.xlu0 %2382
      %2384 = vrot.lane.b32.xlu0 %v1651, 96
      %v2385 = vpop.permute.xlu0 %2384
      %2386 = vrot.lane.b32.xlu0 %v1652, 96
      %v2387 = vpop.permute.xlu0 %2386
      %2388 = vrot.lane.b32.xlu0 %v1653, 96
      %v2389 = vpop.permute.xlu0 %2388
      %2390 = vrot.lane.b32.xlu0 %v1654, 96
      %v2391 = vpop.permute.xlu0 %2390
      %2392 = vrot.lane.b32.xlu0 %v1655, 96
      %v2393 = vpop.permute.xlu0 %2392
      %2394 = vrot.lane.b32.xlu0 %v1656, 96
      %v2395 = vpop.permute.xlu0 %2394
      %2396 = vrot.lane.b32.xlu0 %v1657, 96
      %v2397 = vpop.permute.xlu0 %2396
      %2398 = vrot.lane.b32.xlu0 %v1658, 96
      %v2399 = vpop.permute.xlu0 %2398
      %2400 = vrot.lane.b32.xlu0 %v1659, 96
      %v2401 = vpop.permute.xlu0 %2400
      %2402 = vrot.lane.b32.xlu0 %v1660, 96
      %v2403 = vpop.permute.xlu0 %2402
      %2404 = vrot.lane.b32.xlu0 %v1661, 96
      %v2405 = vpop.permute.xlu0 %2404
      %2406 = vrot.lane.b32.xlu0 %v1662, 96
      %v2407 = vpop.permute.xlu0 %2406
      %2408 = vrot.lane.b32.xlu0 %v1663, 96
      %v2409 = vpop.permute.xlu0 %2408
      %2410 = vrot.lane.b32.xlu0 %v1664, 96
      %v2411 = vpop.permute.xlu0 %2410
      %2412 = vrot.lane.b32.xlu0 %v1665, 96
      %v2413 = vpop.permute.xlu0 %2412
      %2414 = vrot.lane.b32.xlu0 %v1666, 96
      %v2415 = vpop.permute.xlu0 %2414
      %2416 = vrot.lane.b32.xlu0 %v1667, 96
      %v2417 = vpop.permute.xlu0 %2416
      %2418 = vrot.lane.b32.xlu0 %v1668, 96
      %v2419 = vpop.permute.xlu0 %2418
      %2420 = vrot.lane.b32.xlu0 %v1669, 96
      %v2421 = vpop.permute.xlu0 %2420
      %vm2422 = vcmask 785408
      %v2423 = vsel %vm2422, %v2351, %v2353
      %v2424 = vsel %vm2422, %v2353, %v2355
      %v2425 = vsel %vm2422, %v2355, %v2357
      %v2426 = vsel %vm2422, %v2357, %v2359
      %v2427 = vsel %vm2422, %v2359, %v2361
      %v2428 = vsel %vm2422, %v2361, %v2363
      %v2429 = vsel %vm2422, %v2363, %v2365
      %v2430 = vsel %vm2422, %v2365, %v2367
      %v2431 = vsel %vm2422, %v2369, %v2371
      %v2432 = vsel %vm2422, %v2371, %v2373
      %v2433 = vsel %vm2422, %v2373, %v2375
      %v2434 = vsel %vm2422, %v2375, %v2377
      %v2435 = vsel %vm2422, %v2377, %v2379
      %v2436 = vsel %vm2422, %v2379, %v2381
      %v2437 = vsel %vm2422, %v2381, %v2383
      %v2438 = vsel %vm2422, %v2383, %v2385
      %v2439 = vsel %vm2422, %v2387, %v2389
      %v2440 = vsel %vm2422, %v2389, %v2391
      %v2441 = vsel %vm2422, %v2391, %v2393
      %v2442 = vsel %vm2422, %v2393, %v2395
      %v2443 = vsel %vm2422, %v2395, %v2397
      %v2444 = vsel %vm2422, %v2397, %v2399
      %v2445 = vsel %vm2422, %v2399, %v2401
      %v2446 = vsel %vm2422, %v2401, %v2403
      %v2447 = vsel %vm2422, %v2405, %v2407
      %v2448 = vsel %vm2422, %v2407, %v2409
      %v2449 = vsel %vm2422, %v2409, %v2411
      %v2450 = vsel %vm2422, %v2411, %v2413
      %v2451 = vsel %vm2422, %v2413, %v2415
      %v2452 = vsel %vm2422, %v2415, %v2417
      %v2453 = vsel %vm2422, %v2417, %v2419
      %v2454 = vsel %vm2422, %v2419, %v2421
      %v2487 = vmul.f32 %v923, 0.058925565
      %v2488 = vmul.f32 %v924, 0.058925565
      %v2489 = vmul.f32 %v925, 0.058925565
      %v2490 = vmul.f32 %v926, 0.058925565
      %v2491 = vmul.f32 %v927, 0.058925565
      %v2492 = vmul.f32 %v928, 0.058925565
      %v2493 = vmul.f32 %v929, 0.058925565
      %v2494 = vmul.f32 %v930, 0.058925565
      %v2495 = vmul.f32 %v931, 0.058925565
      %v2496 = vmul.f32 %v932, 0.058925565
      %v2497 = vmul.f32 %v933, 0.058925565
      %v2498 = vmul.f32 %v934, 0.058925565
      %v2500 = vsel %vm2285, %v2489, 0
      %v2503 = vsel %vm2285, %v2492, 0
      %v2506 = vsel %vm2285, %v2495, 0
      %v2509 = vsel %vm2285, %v2498, 0
      %2511 = vmatprep.subr.mxu0 %v1241
      %2512 = vmatpush1.msra.mxu0 %v1240
      %2513 = vmatprep.subr.mxu0 %v1249
      %2514 = vmatpush1.msra.mxu0 %v1248
      %2515 = vmatprep.subr.mxu0 %v1257
      %2516 = vmatpush1.msra.mxu0 %v1256
      %2517 = vmatprep.subr.mxu0 %v1265
      %2518 = vmatpush1.msra.mxu0 %v1264
      %2519 = vmatprep.subr.mxu0 %v2287
      %2520 = vmatpush1.msra.mxu0 %v2286
      %2521 = vmatprep.subr.mxu0 %v2295
      %2522 = vmatpush1.msra.mxu0 %v2294
      %2523 = vmatprep.subr.mxu0 %v2303
      %2524 = vmatpush1.msra.mxu0 %v2302
      %2525 = vmatprep.subr.mxu0 %v2311
      %2526 = vmatpush1.msra.mxu0 %v2310
      %2527 = vmatprep.subr.mxu0 %v1434
      %2528 = vmatpush1.msra.mxu0 %v1433
      %2529 = vmatprep.subr.mxu0 %v1442
      %2530 = vmatpush1.msra.mxu0 %v1441
      %2531 = vmatprep.subr.mxu0 %v1450
      %2532 = vmatpush1.msra.mxu0 %v1449
      %2533 = vmatprep.subr.mxu0 %v1458
      %2534 = vmatpush1.msra.mxu0 %v1457
      %2535 = vmatprep.subr.mxu0 %v1603
      %2536 = vmatpush1.msra.mxu0 %v1602
      %2537 = vmatprep.subr.mxu0 %v1611
      %2538 = vmatpush1.msra.mxu0 %v1610
      %2539 = vmatprep.subr.mxu0 %v1619
      %2540 = vmatpush1.msra.mxu0 %v1618
      %2541 = vmatprep.subr.mxu0 %v1627
      %2542 = vmatpush1.msra.mxu0 %v1626
      %2543 = vmatprep.subr.mxu0 %v1009
      %2544 = vmatpush1.msra.mxu0 %v1008
      %2545 = vmatprep.subr.mxu0 %v1018
      %2546 = vmatpush1.msra.mxu0 %v1017
      %2547 = vmatprep.subr.mxu0 %v1027
      %2548 = vmatpush1.msra.mxu0 %v1026
      %2549 = vmatprep.subr.mxu0 %v1036
      %2550 = vmatpush1.msra.mxu0 %v1035
      %2551 = vmatprep.subr.mxu0 %v1844
      %2552 = vmatpush1.msra.mxu0 %v1843
      %2553 = vmatprep.subr.mxu0 %v1852
      %2554 = vmatpush1.msra.mxu0 %v1851
      %2555 = vmatprep.subr.mxu0 %v1860
      %2556 = vmatpush1.msra.mxu0 %v1859
      %2557 = vmatprep.subr.mxu0 %v1868
      %2558 = vmatpush1.msra.mxu0 %v1867
      %2559 = vmatprep.subr.mxu0 %v2013
      %2560 = vmatpush1.msra.mxu0 %v2012
      %2561 = vmatprep.subr.mxu0 %v2021
      %2562 = vmatpush1.msra.mxu0 %v2020
      %2563 = vmatprep.subr.mxu0 %v2029
      %2564 = vmatpush1.msra.mxu0 %v2028
      %2565 = vmatprep.subr.mxu0 %v2037
      %2566 = vmatpush1.msra.mxu0 %v2036
      %2567 = vmatprep.subr.mxu0 %v2424
      %2568 = vmatpush1.msra.mxu0 %v2423
      %2569 = vmatprep.subr.mxu0 %v2432
      %2570 = vmatpush1.msra.mxu0 %v2431
      %2571 = vmatprep.subr.mxu0 %v2440
      %2572 = vmatpush1.msra.mxu0 %v2439
      %2573 = vmatprep.subr.mxu0 %v2448
      %2574 = vmatpush1.msra.mxu0 %v2447
      %2575 = vmatprep.mubr.f32.mxu0 %v2488
      %2576 = vmatmul.mubr.f32.gmra.mrb[0].mxu0 %v2487
      %v2577 = vpop.f32.mrb[0].mxu0
      %v2578 = vadd.f32 0.0, %v2577
      %v2579 = vpop.f32.mrb[0].mxu0
      %v2580 = vadd.f32 0.0, %v2579
      %2581 = vmatprep.mubr.f32.mxu0 %v2491
      %2582 = vmatmul.mubr.f32.gmra.mrb[0].mxu0 %v2490
      %v2583 = vpop.f32.mrb[0].mxu0
      %v2584 = vadd.f32 0.0, %v2583
      %v2585 = vpop.f32.mrb[0].mxu0
      %v2586 = vadd.f32 0.0, %v2585
      %2587 = vmatprep.mubr.f32.mxu0 %v2494
      %2588 = vmatmul.mubr.f32.gmra.mrb[0].mxu0 %v2493
      %v2589 = vpop.f32.mrb[0].mxu0
      %v2590 = vadd.f32 0.0, %v2589
      %v2591 = vpop.f32.mrb[0].mxu0
      %v2592 = vadd.f32 0.0, %v2591
      %2593 = vmatprep.mubr.f32.mxu0 %v2497
      %2594 = vmatmul.mubr.f32.gmra.mrb[0].mxu0 %v2496
      %v2595 = vpop.f32.mrb[0].mxu0
      %v2596 = vadd.f32 0.0, %v2595
      %v2597 = vpop.f32.mrb[0].mxu0
      %v2598 = vadd.f32 0.0, %v2597
      %2599 = vdwg.mxu0
      %2600 = vmatprep.subr.mxu0 %v2182
      %2601 = vmatpush1.msra.mxu0 %v2181
      %2602 = vmatprep.subr.mxu0 %v2190
      %2603 = vmatpush1.msra.mxu0 %v2189
      %2604 = vmatprep.subr.mxu0 %v2198
      %2605 = vmatpush1.msra.mxu0 %v2197
      %2606 = vmatprep.subr.mxu0 %v2206
      %2607 = vmatpush1.msra.mxu0 %v2205
      %2608 = vmatprep.subr.mxu0 0.0
      %2609 = vmatpush1.msra.mxu0 0.0
      %2610 = vmatprep.subr.mxu0 0.0
      %2611 = vmatpush1.msra.mxu0 0.0
      %2612 = vmatprep.subr.mxu0 0.0
      %2613 = vmatpush1.msra.mxu0 0.0
      %2614 = vmatprep.subr.mxu0 0.0
      %2615 = vmatpush1.msra.mxu0 0.0
      %2616 = vmatprep.subr.mxu0 0.0
      %2617 = vmatpush1.msra.mxu0 0.0
      %2618 = vmatprep.subr.mxu0 0.0
      %2619 = vmatpush1.msra.mxu0 0.0
      %2620 = vmatprep.subr.mxu0 0.0
      %2621 = vmatpush1.msra.mxu0 0.0
      %2622 = vmatprep.subr.mxu0 0.0
      %2623 = vmatpush1.msra.mxu0 0.0
      %2624 = vmatprep.subr.mxu0 0.0
      %2625 = vmatpush1.msra.mxu0 0.0
      %2626 = vmatprep.subr.mxu0 0.0
      %2627 = vmatpush1.msra.mxu0 0.0
      %2628 = vmatprep.subr.mxu0 0.0
      %2629 = vmatpush1.msra.mxu0 0.0
      %2630 = vmatprep.subr.mxu0 0.0
      %2631 = vmatpush1.msra.mxu0 0.0
      %2632 = vmatprep.subr.mxu0 0.0
      %2633 = vmatpush1.msra.mxu0 0.0
      %2634 = vmatprep.subr.mxu0 0.0
      %2635 = vmatpush1.msra.mxu0 0.0
      %2636 = vmatprep.subr.mxu0 0.0
      %2637 = vmatpush1.msra.mxu0 0.0
      %2638 = vmatprep.subr.mxu0 0.0
      %2639 = vmatpush1.msra.mxu0 0.0
      %2640 = vmatprep.subr.mxu0 0.0
      %2641 = vmatpush1.msra.mxu0 0.0
      %2642 = vmatprep.subr.mxu0 0.0
      %2643 = vmatpush1.msra.mxu0 0.0
      %2644 = vmatprep.subr.mxu0 0.0
      %2645 = vmatpush1.msra.mxu0 0.0
      %2646 = vmatprep.subr.mxu0 0.0
      %2647 = vmatpush1.msra.mxu0 0.0
      %2648 = vmatprep.subr.mxu0 0.0
      %2649 = vmatpush1.msra.mxu0 0.0
      %2650 = vmatprep.subr.mxu0 0.0
      %2651 = vmatpush1.msra.mxu0 0.0
      %2652 = vmatprep.subr.mxu0 0.0
      %2653 = vmatpush1.msra.mxu0 0.0
      %2654 = vmatprep.subr.mxu0 0.0
      %2655 = vmatpush1.msra.mxu0 0.0
      %2656 = vmatprep.subr.mxu0 0.0
      %2657 = vmatpush1.msra.mxu0 0.0
      %2658 = vmatprep.subr.mxu0 0.0
      %2659 = vmatpush1.msra.mxu0 0.0
      %2660 = vmatprep.subr.mxu0 0.0
      %2661 = vmatpush1.msra.mxu0 0.0
      %2662 = vmatprep.subr.mxu0 0.0
      %2663 = vmatpush1.msra.mxu0 0.0
      %2664 = vmatprep.mubr.f32.mxu0 0.0
      %2665 = vmatmul.mubr.f32.gmra.mrb[0].mxu0 %v2500
      %v2666 = vpop.f32.mrb[0].mxu0
      %v2667 = vadd.f32 %v2578, %v2666
      %v2668 = vpop.f32.mrb[0].mxu0
      %v2669 = vadd.f32 %v2580, %v2668
      %2670 = vmatprep.mubr.f32.mxu0 0.0
      %2671 = vmatmul.mubr.f32.gmra.mrb[0].mxu0 %v2503
      %v2672 = vpop.f32.mrb[0].mxu0
      %v2673 = vadd.f32 %v2584, %v2672
      %v2674 = vpop.f32.mrb[0].mxu0
      %v2675 = vadd.f32 %v2586, %v2674
      %2676 = vmatprep.mubr.f32.mxu0 0.0
      %2677 = vmatmul.mubr.f32.gmra.mrb[0].mxu0 %v2506
      %v2678 = vpop.f32.mrb[0].mxu0
      %v2679 = vadd.f32 %v2590, %v2678
      %v2680 = vpop.f32.mrb[0].mxu0
      %v2681 = vadd.f32 %v2592, %v2680
      %2682 = vmatprep.mubr.f32.mxu0 0.0
      %2683 = vmatmul.mubr.f32.gmra.mrb[0].mxu0 %v2509
      %v2684 = vpop.f32.mrb[0].mxu0
      %v2685 = vadd.f32 %v2596, %v2684
      %v2686 = vpop.f32.mrb[0].mxu0
      %v2687 = vadd.f32 %v2598, %v2686
      %2688 = vdwg.mxu0
      %2689 = vmatprep.subr.mxu0 %v1243
      %2690 = vmatpush1.msra.mxu0 %v1242
      %2691 = vmatprep.subr.mxu0 %v1251
      %2692 = vmatpush1.msra.mxu0 %v1250
      %2693 = vmatprep.subr.mxu0 %v1259
      %2694 = vmatpush1.msra.mxu0 %v1258
      %2695 = vmatprep.subr.mxu0 %v1267
      %2696 = vmatpush1.msra.mxu0 %v1266
      %2697 = vmatprep.subr.mxu0 %v2289
      %2698 = vmatpush1.msra.mxu0 %v2288
      %2699 = vmatprep.subr.mxu0 %v2297
      %2700 = vmatpush1.msra.mxu0 %v2296
      %2701 = vmatprep.subr.mxu0 %v2305
      %2702 = vmatpush1.msra.mxu0 %v2304
      %2703 = vmatprep.subr.mxu0 %v2313
      %2704 = vmatpush1.msra.mxu0 %v2312
      %2705 = vmatprep.subr.mxu0 %v1436
      %2706 = vmatpush1.msra.mxu0 %v1435
      %2707 = vmatprep.subr.mxu0 %v1444
      %2708 = vmatpush1.msra.mxu0 %v1443
      %2709 = vmatprep.subr.mxu0 %v1452
      %2710 = vmatpush1.msra.mxu0 %v1451
      %2711 = vmatprep.subr.mxu0 %v1460
      %2712 = vmatpush1.msra.mxu0 %v1459
      %2713 = vmatprep.subr.mxu0 %v1605
      %2714 = vmatpush1.msra.mxu0 %v1604
      %2715 = vmatprep.subr.mxu0 %v1613
      %2716 = vmatpush1.msra.mxu0 %v1612
      %2717 = vmatprep.subr.mxu0 %v1621
      %2718 = vmatpush1.msra.mxu0 %v1620
      %2719 = vmatprep.subr.mxu0 %v1629
      %2720 = vmatpush1.msra.mxu0 %v1628
      %2721 = vmatprep.subr.mxu0 %v1011
      %2722 = vmatpush1.msra.mxu0 %v1010
      %2723 = vmatprep.subr.mxu0 %v1020
      %2724 = vmatpush1.msra.mxu0 %v1019
      %2725 = vmatprep.subr.mxu0 %v1029
      %2726 = vmatpush1.msra.mxu0 %v1028
      %2727 = vmatprep.subr.mxu0 %v1038
      %2728 = vmatpush1.msra.mxu0 %v1037
      %2729 = vmatprep.subr.mxu0 %v1846
      %2730 = vmatpush1.msra.mxu0 %v1845
      %2731 = vmatprep.subr.mxu0 %v1854
      %2732 = vmatpush1.msra.mxu0 %v1853
      %2733 = vmatprep.subr.mxu0 %v1862
      %2734 = vmatpush1.msra.mxu0 %v1861
      %2735 = vmatprep.subr.mxu0 %v1870
      %2736 = vmatpush1.msra.mxu0 %v1869
      %2737 = vmatprep.subr.mxu0 %v2015
      %2738 = vmatpush1.msra.mxu0 %v2014
      %2739 = vmatprep.subr.mxu0 %v2023
      %2740 = vmatpush1.msra.mxu0 %v2022
      %2741 = vmatprep.subr.mxu0 %v2031
      %2742 = vmatpush1.msra.mxu0 %v2030
      %2743 = vmatprep.subr.mxu0 %v2039
      %2744 = vmatpush1.msra.mxu0 %v2038
      %2745 = vmatprep.subr.mxu0 %v2426
      %2746 = vmatpush1.msra.mxu0 %v2425
      %2747 = vmatprep.subr.mxu0 %v2434
      %2748 = vmatpush1.msra.mxu0 %v2433
      %2749 = vmatprep.subr.mxu0 %v2442
      %2750 = vmatpush1.msra.mxu0 %v2441
      %2751 = vmatprep.subr.mxu0 %v2450
      %2752 = vmatpush1.msra.mxu0 %v2449
      %2753 = vmatprep.mubr.f32.mxu0 %v2488
      %2754 = vmatmul.mubr.f32.gmra.mrb[0].mxu0 %v2487
      %v2755 = vpop.f32.mrb[0].mxu0
      %v2756 = vadd.f32 0.0, %v2755
      %v2757 = vpop.f32.mrb[0].mxu0
      %v2758 = vadd.f32 0.0, %v2757
      %2759 = vmatprep.mubr.f32.mxu0 %v2491
      %2760 = vmatmul.mubr.f32.gmra.mrb[0].mxu0 %v2490
      %v2761 = vpop.f32.mrb[0].mxu0
      %v2762 = vadd.f32 0.0, %v2761
      %v2763 = vpop.f32.mrb[0].mxu0
      %v2764 = vadd.f32 0.0, %v2763
      %2765 = vmatprep.mubr.f32.mxu0 %v2494
      %2766 = vmatmul.mubr.f32.gmra.mrb[0].mxu0 %v2493
      %v2767 = vpop.f32.mrb[0].mxu0
      %v2768 = vadd.f32 0.0, %v2767
      %v2769 = vpop.f32.mrb[0].mxu0
      %v2770 = vadd.f32 0.0, %v2769
      %2771 = vmatprep.mubr.f32.mxu0 %v2497
      %2772 = vmatmul.mubr.f32.gmra.mrb[0].mxu0 %v2496
      %v2773 = vpop.f32.mrb[0].mxu0
      %v2774 = vadd.f32 0.0, %v2773
      %v2775 = vpop.f32.mrb[0].mxu0
      %v2776 = vadd.f32 0.0, %v2775
      %2777 = vdwg.mxu0
      %2778 = vmatprep.subr.mxu0 %v2184
      %2779 = vmatpush1.msra.mxu0 %v2183
      %2780 = vmatprep.subr.mxu0 %v2192
      %2781 = vmatpush1.msra.mxu0 %v2191
      %2782 = vmatprep.subr.mxu0 %v2200
      %2783 = vmatpush1.msra.mxu0 %v2199
      %2784 = vmatprep.subr.mxu0 %v2208
      %2785 = vmatpush1.msra.mxu0 %v2207
      %2786 = vmatprep.subr.mxu0 0.0
      %2787 = vmatpush1.msra.mxu0 0.0
      %2788 = vmatprep.subr.mxu0 0.0
      %2789 = vmatpush1.msra.mxu0 0.0
      %2790 = vmatprep.subr.mxu0 0.0
      %2791 = vmatpush1.msra.mxu0 0.0
      %2792 = vmatprep.subr.mxu0 0.0
      %2793 = vmatpush1.msra.mxu0 0.0
      %2794 = vmatprep.subr.mxu0 0.0
      %2795 = vmatpush1.msra.mxu0 0.0
      %2796 = vmatprep.subr.mxu0 0.0
      %2797 = vmatpush1.msra.mxu0 0.0
      %2798 = vmatprep.subr.mxu0 0.0
      %2799 = vmatpush1.msra.mxu0 0.0
      %2800 = vmatprep.subr.mxu0 0.0
      %2801 = vmatpush1.msra.mxu0 0.0
      %2802 = vmatprep.subr.mxu0 0.0
      %2803 = vmatpush1.msra.mxu0 0.0
      %2804 = vmatprep.subr.mxu0 0.0
      %2805 = vmatpush1.msra.mxu0 0.0
      %2806 = vmatprep.subr.mxu0 0.0
      %2807 = vmatpush1.msra.mxu0 0.0
      %2808 = vmatprep.subr.mxu0 0.0
      %2809 = vmatpush1.msra.mxu0 0.0
      %2810 = vmatprep.subr.mxu0 0.0
      %2811 = vmatpush1.msra.mxu0 0.0
      %2812 = vmatprep.subr.mxu0 0.0
      %2813 = vmatpush1.msra.mxu0 0.0
      %2814 = vmatprep.subr.mxu0 0.0
      %2815 = vmatpush1.msra.mxu0 0.0
      %2816 = vmatprep.subr.mxu0 0.0
      %2817 = vmatpush1.msra.mxu0 0.0
      %2818 = vmatprep.subr.mxu0 0.0
      %2819 = vmatpush1.msra.mxu0 0.0
      %2820 = vmatprep.subr.mxu0 0.0
      %2821 = vmatpush1.msra.mxu0 0.0
      %2822 = vmatprep.subr.mxu0 0.0
      %2823 = vmatpush1.msra.mxu0 0.0
      %2824 = vmatprep.subr.mxu0 0.0
      %2825 = vmatpush1.msra.mxu0 0.0
      %2826 = vmatprep.subr.mxu0 0.0
      %2827 = vmatpush1.msra.mxu0 0.0
      %2828 = vmatprep.subr.mxu0 0.0
      %2829 = vmatpush1.msra.mxu0 0.0
      %2830 = vmatprep.subr.mxu0 0.0
      %2831 = vmatpush1.msra.mxu0 0.0
      %2832 = vmatprep.subr.mxu0 0.0
      %2833 = vmatpush1.msra.mxu0 0.0
      %2834 = vmatprep.subr.mxu0 0.0
      %2835 = vmatpush1.msra.mxu0 0.0
      %2836 = vmatprep.subr.mxu0 0.0
      %2837 = vmatpush1.msra.mxu0 0.0
      %2838 = vmatprep.subr.mxu0 0.0
      %2839 = vmatpush1.msra.mxu0 0.0
      %2840 = vmatprep.subr.mxu0 0.0
      %2841 = vmatpush1.msra.mxu0 0.0
      %2842 = vmatprep.mubr.f32.mxu0 0.0
      %2843 = vmatmul.mubr.f32.gmra.mrb[0].mxu0 %v2500
      %v2844 = vpop.f32.mrb[0].mxu0
      %v2845 = vadd.f32 %v2756, %v2844
      %v2846 = vpop.f32.mrb[0].mxu0
      %v2847 = vadd.f32 %v2758, %v2846
      %2848 = vmatprep.mubr.f32.mxu0 0.0
      %2849 = vmatmul.mubr.f32.gmra.mrb[0].mxu0 %v2503
      %v2850 = vpop.f32.mrb[0].mxu0
      %v2851 = vadd.f32 %v2762, %v2850
      %v2852 = vpop.f32.mrb[0].mxu0
      %v2853 = vadd.f32 %v2764, %v2852
      %2854 = vmatprep.mubr.f32.mxu0 0.0
      %2855 = vmatmul.mubr.f32.gmra.mrb[0].mxu0 %v2506
      %v2856 = vpop.f32.mrb[0].mxu0
      %v2857 = vadd.f32 %v2768, %v2856
      %v2858 = vpop.f32.mrb[0].mxu0
      %v2859 = vadd.f32 %v2770, %v2858
      %2860 = vmatprep.mubr.f32.mxu0 0.0
      %2861 = vmatmul.mubr.f32.gmra.mrb[0].mxu0 %v2509
      %v2862 = vpop.f32.mrb[0].mxu0
      %v2863 = vadd.f32 %v2774, %v2862
      %v2864 = vpop.f32.mrb[0].mxu0
      %v2865 = vadd.f32 %v2776, %v2864
      %2866 = vdwg.mxu0
      %2867 = vmatprep.subr.mxu0 %v1245
      %2868 = vmatpush1.msra.mxu0 %v1244
      %2869 = vmatprep.subr.mxu0 %v1253
      %2870 = vmatpush1.msra.mxu0 %v1252
      %2871 = vmatprep.subr.mxu0 %v1261
      %2872 = vmatpush1.msra.mxu0 %v1260
      %2873 = vmatprep.subr.mxu0 %v1269
      %2874 = vmatpush1.msra.mxu0 %v1268
      %2875 = vmatprep.subr.mxu0 %v2291
      %2876 = vmatpush1.msra.mxu0 %v2290
      %2877 = vmatprep.subr.mxu0 %v2299
      %2878 = vmatpush1.msra.mxu0 %v2298
      %2879 = vmatprep.subr.mxu0 %v2307
      %2880 = vmatpush1.msra.mxu0 %v2306
      %2881 = vmatprep.subr.mxu0 %v2315
      %2882 = vmatpush1.msra.mxu0 %v2314
      %2883 = vmatprep.subr.mxu0 %v1438
      %2884 = vmatpush1.msra.mxu0 %v1437
      %2885 = vmatprep.subr.mxu0 %v1446
      %2886 = vmatpush1.msra.mxu0 %v1445
      %2887 = vmatprep.subr.mxu0 %v1454
      %2888 = vmatpush1.msra.mxu0 %v1453
      %2889 = vmatprep.subr.mxu0 %v1462
      %2890 = vmatpush1.msra.mxu0 %v1461
      %2891 = vmatprep.subr.mxu0 %v1607
      %2892 = vmatpush1.msra.mxu0 %v1606
      %2893 = vmatprep.subr.mxu0 %v1615
      %2894 = vmatpush1.msra.mxu0 %v1614
      %2895 = vmatprep.subr.mxu0 %v1623
      %2896 = vmatpush1.msra.mxu0 %v1622
      %2897 = vmatprep.subr.mxu0 %v1631
      %2898 = vmatpush1.msra.mxu0 %v1630
      %2899 = vmatprep.subr.mxu0 %v1013
      %2900 = vmatpush1.msra.mxu0 %v1012
      %2901 = vmatprep.subr.mxu0 %v1022
      %2902 = vmatpush1.msra.mxu0 %v1021
      %2903 = vmatprep.subr.mxu0 %v1031
      %2904 = vmatpush1.msra.mxu0 %v1030
      %2905 = vmatprep.subr.mxu0 %v1040
      %2906 = vmatpush1.msra.mxu0 %v1039
      %2907 = vmatprep.subr.mxu0 %v1848
      %2908 = vmatpush1.msra.mxu0 %v1847
      %2909 = vmatprep.subr.mxu0 %v1856
      %2910 = vmatpush1.msra.mxu0 %v1855
      %2911 = vmatprep.subr.mxu0 %v1864
      %2912 = vmatpush1.msra.mxu0 %v1863
      %2913 = vmatprep.subr.mxu0 %v1872
      %2914 = vmatpush1.msra.mxu0 %v1871
      %2915 = vmatprep.subr.mxu0 %v2017
      %2916 = vmatpush1.msra.mxu0 %v2016
      %2917 = vmatprep.subr.mxu0 %v2025
      %2918 = vmatpush1.msra.mxu0 %v2024
      %2919 = vmatprep.subr.mxu0 %v2033
      %2920 = vmatpush1.msra.mxu0 %v2032
      %2921 = vmatprep.subr.mxu0 %v2041
      %2922 = vmatpush1.msra.mxu0 %v2040
      %2923 = vmatprep.subr.mxu0 %v2428
      %2924 = vmatpush1.msra.mxu0 %v2427
      %2925 = vmatprep.subr.mxu0 %v2436
      %2926 = vmatpush1.msra.mxu0 %v2435
      %2927 = vmatprep.subr.mxu0 %v2444
      %2928 = vmatpush1.msra.mxu0 %v2443
      %2929 = vmatprep.subr.mxu0 %v2452
      %2930 = vmatpush1.msra.mxu0 %v2451
      %2931 = vmatprep.mubr.f32.mxu0 %v2488
      %2932 = vmatmul.mubr.f32.gmra.mrb[0].mxu0 %v2487
      %v2933 = vpop.f32.mrb[0].mxu0
      %v2934 = vadd.f32 0.0, %v2933
      %v2935 = vpop.f32.mrb[0].mxu0
      %v2936 = vadd.f32 0.0, %v2935
      %2937 = vmatprep.mubr.f32.mxu0 %v2491
      %2938 = vmatmul.mubr.f32.gmra.mrb[0].mxu0 %v2490
      %v2939 = vpop.f32.mrb[0].mxu0
      %v2940 = vadd.f32 0.0, %v2939
      %v2941 = vpop.f32.mrb[0].mxu0
      %v2942 = vadd.f32 0.0, %v2941
      %2943 = vmatprep.mubr.f32.mxu0 %v2494
      %2944 = vmatmul.mubr.f32.gmra.mrb[0].mxu0 %v2493
      %v2945 = vpop.f32.mrb[0].mxu0
      %v2946 = vadd.f32 0.0, %v2945
      %v2947 = vpop.f32.mrb[0].mxu0
      %v2948 = vadd.f32 0.0, %v2947
      %2949 = vmatprep.mubr.f32.mxu0 %v2497
      %2950 = vmatmul.mubr.f32.gmra.mrb[0].mxu0 %v2496
      %v2951 = vpop.f32.mrb[0].mxu0
      %v2952 = vadd.f32 0.0, %v2951
      %v2953 = vpop.f32.mrb[0].mxu0
      %v2954 = vadd.f32 0.0, %v2953
      %2955 = vdwg.mxu0
      %2956 = vmatprep.subr.mxu0 %v2186
      %2957 = vmatpush1.msra.mxu0 %v2185
      %2958 = vmatprep.subr.mxu0 %v2194
      %2959 = vmatpush1.msra.mxu0 %v2193
      %2960 = vmatprep.subr.mxu0 %v2202
      %2961 = vmatpush1.msra.mxu0 %v2201
      %2962 = vmatprep.subr.mxu0 %v2210
      %2963 = vmatpush1.msra.mxu0 %v2209
      %2964 = vmatprep.subr.mxu0 0.0
      %2965 = vmatpush1.msra.mxu0 0.0
      %2966 = vmatprep.subr.mxu0 0.0
      %2967 = vmatpush1.msra.mxu0 0.0
      %2968 = vmatprep.subr.mxu0 0.0
      %2969 = vmatpush1.msra.mxu0 0.0
      %2970 = vmatprep.subr.mxu0 0.0
      %2971 = vmatpush1.msra.mxu0 0.0
      %2972 = vmatprep.subr.mxu0 0.0
      %2973 = vmatpush1.msra.mxu0 0.0
      %2974 = vmatprep.subr.mxu0 0.0
      %2975 = vmatpush1.msra.mxu0 0.0
      %2976 = vmatprep.subr.mxu0 0.0
      %2977 = vmatpush1.msra.mxu0 0.0
      %2978 = vmatprep.subr.mxu0 0.0
      %2979 = vmatpush1.msra.mxu0 0.0
      %2980 = vmatprep.subr.mxu0 0.0
      %2981 = vmatpush1.msra.mxu0 0.0
      %2982 = vmatprep.subr.mxu0 0.0
      %2983 = vmatpush1.msra.mxu0 0.0
      %2984 = vmatprep.subr.mxu0 0.0
      %2985 = vmatpush1.msra.mxu0 0.0
      %2986 = vmatprep.subr.mxu0 0.0
      %2987 = vmatpush1.msra.mxu0 0.0
      %2988 = vmatprep.subr.mxu0 0.0
      %2989 = vmatpush1.msra.mxu0 0.0
      %2990 = vmatprep.subr.mxu0 0.0
      %2991 = vmatpush1.msra.mxu0 0.0
      %2992 = vmatprep.subr.mxu0 0.0
      %2993 = vmatpush1.msra.mxu0 0.0
      %2994 = vmatprep.subr.mxu0 0.0
      %2995 = vmatpush1.msra.mxu0 0.0
      %2996 = vmatprep.subr.mxu0 0.0
      %2997 = vmatpush1.msra.mxu0 0.0
      %2998 = vmatprep.subr.mxu0 0.0
      %2999 = vmatpush1.msra.mxu0 0.0
      %3000 = vmatprep.subr.mxu0 0.0
      %3001 = vmatpush1.msra.mxu0 0.0
      %3002 = vmatprep.subr.mxu0 0.0
      %3003 = vmatpush1.msra.mxu0 0.0
      %3004 = vmatprep.subr.mxu0 0.0
      %3005 = vmatpush1.msra.mxu0 0.0
      %3006 = vmatprep.subr.mxu0 0.0
      %3007 = vmatpush1.msra.mxu0 0.0
      %3008 = vmatprep.subr.mxu0 0.0
      %3009 = vmatpush1.msra.mxu0 0.0
      %3010 = vmatprep.subr.mxu0 0.0
      %3011 = vmatpush1.msra.mxu0 0.0
      %3012 = vmatprep.subr.mxu0 0.0
      %3013 = vmatpush1.msra.mxu0 0.0
      %3014 = vmatprep.subr.mxu0 0.0
      %3015 = vmatpush1.msra.mxu0 0.0
      %3016 = vmatprep.subr.mxu0 0.0
      %3017 = vmatpush1.msra.mxu0 0.0
      %3018 = vmatprep.subr.mxu0 0.0
      %3019 = vmatpush1.msra.mxu0 0.0
      %3020 = vmatprep.mubr.f32.mxu0 0.0
      %3021 = vmatmul.mubr.f32.gmra.mrb[0].mxu0 %v2500
      %v3022 = vpop.f32.mrb[0].mxu0
      %v3023 = vadd.f32 %v2934, %v3022
      %v3024 = vpop.f32.mrb[0].mxu0
      %v3025 = vadd.f32 %v2936, %v3024
      %3026 = vmatprep.mubr.f32.mxu0 0.0
      %3027 = vmatmul.mubr.f32.gmra.mrb[0].mxu0 %v2503
      %v3028 = vpop.f32.mrb[0].mxu0
      %v3029 = vadd.f32 %v2940, %v3028
      %v3030 = vpop.f32.mrb[0].mxu0
      %v3031 = vadd.f32 %v2942, %v3030
      %3032 = vmatprep.mubr.f32.mxu0 0.0
      %3033 = vmatmul.mubr.f32.gmra.mrb[0].mxu0 %v2506
      %v3034 = vpop.f32.mrb[0].mxu0
      %v3035 = vadd.f32 %v2946, %v3034
      %v3036 = vpop.f32.mrb[0].mxu0
      %v3037 = vadd.f32 %v2948, %v3036
      %3038 = vmatprep.mubr.f32.mxu0 0.0
      %3039 = vmatmul.mubr.f32.gmra.mrb[0].mxu0 %v2509
      %v3040 = vpop.f32.mrb[0].mxu0
      %v3041 = vadd.f32 %v2952, %v3040
      %v3042 = vpop.f32.mrb[0].mxu0
      %v3043 = vadd.f32 %v2954, %v3042
      %3044 = vdwg.mxu0
      %3045 = vmatprep.subr.mxu0 %v1247
      %3046 = vmatpush1.msra.mxu0 %v1246
      %3047 = vmatprep.subr.mxu0 %v1255
      %3048 = vmatpush1.msra.mxu0 %v1254
      %3049 = vmatprep.subr.mxu0 %v1263
      %3050 = vmatpush1.msra.mxu0 %v1262
      %3051 = vmatprep.subr.mxu0 %v1271
      %3052 = vmatpush1.msra.mxu0 %v1270
      %3053 = vmatprep.subr.mxu0 %v2293
      %3054 = vmatpush1.msra.mxu0 %v2292
      %3055 = vmatprep.subr.mxu0 %v2301
      %3056 = vmatpush1.msra.mxu0 %v2300
      %3057 = vmatprep.subr.mxu0 %v2309
      %3058 = vmatpush1.msra.mxu0 %v2308
      %3059 = vmatprep.subr.mxu0 %v2317
      %3060 = vmatpush1.msra.mxu0 %v2316
      %3061 = vmatprep.subr.mxu0 %v1440
      %3062 = vmatpush1.msra.mxu0 %v1439
      %3063 = vmatprep.subr.mxu0 %v1448
      %3064 = vmatpush1.msra.mxu0 %v1447
      %3065 = vmatprep.subr.mxu0 %v1456
      %3066 = vmatpush1.msra.mxu0 %v1455
      %3067 = vmatprep.subr.mxu0 %v1464
      %3068 = vmatpush1.msra.mxu0 %v1463
      %3069 = vmatprep.subr.mxu0 %v1609
      %3070 = vmatpush1.msra.mxu0 %v1608
      %3071 = vmatprep.subr.mxu0 %v1617
      %3072 = vmatpush1.msra.mxu0 %v1616
      %3073 = vmatprep.subr.mxu0 %v1625
      %3074 = vmatpush1.msra.mxu0 %v1624
      %3075 = vmatprep.subr.mxu0 %v1633
      %3076 = vmatpush1.msra.mxu0 %v1632
      %3077 = vmatprep.subr.mxu0 %v1015
      %3078 = vmatpush1.msra.mxu0 %v1014
      %3079 = vmatprep.subr.mxu0 %v1024
      %3080 = vmatpush1.msra.mxu0 %v1023
      %3081 = vmatprep.subr.mxu0 %v1033
      %3082 = vmatpush1.msra.mxu0 %v1032
      %3083 = vmatprep.subr.mxu0 %v1042
      %3084 = vmatpush1.msra.mxu0 %v1041
      %3085 = vmatprep.subr.mxu0 %v1850
      %3086 = vmatpush1.msra.mxu0 %v1849
      %3087 = vmatprep.subr.mxu0 %v1858
      %3088 = vmatpush1.msra.mxu0 %v1857
      %3089 = vmatprep.subr.mxu0 %v1866
      %3090 = vmatpush1.msra.mxu0 %v1865
      %3091 = vmatprep.subr.mxu0 %v1874
      %3092 = vmatpush1.msra.mxu0 %v1873
      %3093 = vmatprep.subr.mxu0 %v2019
      %3094 = vmatpush1.msra.mxu0 %v2018
      %3095 = vmatprep.subr.mxu0 %v2027
      %3096 = vmatpush1.msra.mxu0 %v2026
      %3097 = vmatprep.subr.mxu0 %v2035
      %3098 = vmatpush1.msra.mxu0 %v2034
      %3099 = vmatprep.subr.mxu0 %v2043
      %3100 = vmatpush1.msra.mxu0 %v2042
      %3101 = vmatprep.subr.mxu0 %v2430
      %3102 = vmatpush1.msra.mxu0 %v2429
      %3103 = vmatprep.subr.mxu0 %v2438
      %3104 = vmatpush1.msra.mxu0 %v2437
      %3105 = vmatprep.subr.mxu0 %v2446
      %3106 = vmatpush1.msra.mxu0 %v2445
      %3107 = vmatprep.subr.mxu0 %v2454
      %3108 = vmatpush1.msra.mxu0 %v2453
      %3109 = vmatprep.mubr.f32.mxu0 %v2488
      %3110 = vmatmul.mubr.f32.gmra.mrb[0].mxu0 %v2487
      %v3111 = vpop.f32.mrb[0].mxu0
      %v3112 = vadd.f32 0.0, %v3111
      %v3113 = vpop.f32.mrb[0].mxu0
      %v3114 = vadd.f32 0.0, %v3113
      %3115 = vmatprep.mubr.f32.mxu0 %v2491
      %3116 = vmatmul.mubr.f32.gmra.mrb[0].mxu0 %v2490
      %v3117 = vpop.f32.mrb[0].mxu0
      %v3118 = vadd.f32 0.0, %v3117
      %v3119 = vpop.f32.mrb[0].mxu0
      %v3120 = vadd.f32 0.0, %v3119
      %3121 = vmatprep.mubr.f32.mxu0 %v2494
      %3122 = vmatmul.mubr.f32.gmra.mrb[0].mxu0 %v2493
      %v3123 = vpop.f32.mrb[0].mxu0
      %v3124 = vadd.f32 0.0, %v3123
      %v3125 = vpop.f32.mrb[0].mxu0
      %v3126 = vadd.f32 0.0, %v3125
      %3127 = vmatprep.mubr.f32.mxu0 %v2497
      %3128 = vmatmul.mubr.f32.gmra.mrb[0].mxu0 %v2496
      %v3129 = vpop.f32.mrb[0].mxu0
      %v3130 = vadd.f32 0.0, %v3129
      %v3131 = vpop.f32.mrb[0].mxu0
      %v3132 = vadd.f32 0.0, %v3131
      %3133 = vdwg.mxu0
      %3134 = vmatprep.subr.mxu0 %v2188
      %3135 = vmatpush1.msra.mxu0 %v2187
      %3136 = vmatprep.subr.mxu0 %v2196
      %3137 = vmatpush1.msra.mxu0 %v2195
      %3138 = vmatprep.subr.mxu0 %v2204
      %3139 = vmatpush1.msra.mxu0 %v2203
      %3140 = vmatprep.subr.mxu0 %v2212
      %3141 = vmatpush1.msra.mxu0 %v2211
      %3142 = vmatprep.subr.mxu0 0.0
      %3143 = vmatpush1.msra.mxu0 0.0
      %3144 = vmatprep.subr.mxu0 0.0
      %3145 = vmatpush1.msra.mxu0 0.0
      %3146 = vmatprep.subr.mxu0 0.0
      %3147 = vmatpush1.msra.mxu0 0.0
      %3148 = vmatprep.subr.mxu0 0.0
      %3149 = vmatpush1.msra.mxu0 0.0
      %3150 = vmatprep.subr.mxu0 0.0
      %3151 = vmatpush1.msra.mxu0 0.0
      %3152 = vmatprep.subr.mxu0 0.0
      %3153 = vmatpush1.msra.mxu0 0.0
      %3154 = vmatprep.subr.mxu0 0.0
      %3155 = vmatpush1.msra.mxu0 0.0
      %3156 = vmatprep.subr.mxu0 0.0
      %3157 = vmatpush1.msra.mxu0 0.0
      %3158 = vmatprep.subr.mxu0 0.0
      %3159 = vmatpush1.msra.mxu0 0.0
      %3160 = vmatprep.subr.mxu0 0.0
      %3161 = vmatpush1.msra.mxu0 0.0
      %3162 = vmatprep.subr.mxu0 0.0
      %3163 = vmatpush1.msra.mxu0 0.0
      %3164 = vmatprep.subr.mxu0 0.0
      %3165 = vmatpush1.msra.mxu0 0.0
      %3166 = vmatprep.subr.mxu0 0.0
      %3167 = vmatpush1.msra.mxu0 0.0
      %3168 = vmatprep.subr.mxu0 0.0
      %3169 = vmatpush1.msra.mxu0 0.0
      %3170 = vmatprep.subr.mxu0 0.0
      %3171 = vmatpush1.msra.mxu0 0.0
      %3172 = vmatprep.subr.mxu0 0.0
      %3173 = vmatpush1.msra.mxu0 0.0
      %3174 = vmatprep.subr.mxu0 0.0
      %3175 = vmatpush1.msra.mxu0 0.0
      %3176 = vmatprep.subr.mxu0 0.0
      %3177 = vmatpush1.msra.mxu0 0.0
      %3178 = vmatprep.subr.mxu0 0.0
      %3179 = vmatpush1.msra.mxu0 0.0
      %3180 = vmatprep.subr.mxu0 0.0
      %3181 = vmatpush1.msra.mxu0 0.0
      %3182 = vmatprep.subr.mxu0 0.0
      %3183 = vmatpush1.msra.mxu0 0.0
      %3184 = vmatprep.subr.mxu0 0.0
      %3185 = vmatpush1.msra.mxu0 0.0
      %3186 = vmatprep.subr.mxu0 0.0
      %3187 = vmatpush1.msra.mxu0 0.0
      %3188 = vmatprep.subr.mxu0 0.0
      %3189 = vmatpush1.msra.mxu0 0.0
      %3190 = vmatprep.subr.mxu0 0.0
      %3191 = vmatpush1.msra.mxu0 0.0
      %3192 = vmatprep.subr.mxu0 0.0
      %3193 = vmatpush1.msra.mxu0 0.0
      %3194 = vmatprep.subr.mxu0 0.0
      %3195 = vmatpush1.msra.mxu0 0.0
      %3196 = vmatprep.subr.mxu0 0.0
      %3197 = vmatpush1.msra.mxu0 0.0
      %3198 = vmatprep.mubr.f32.mxu0 0.0
      %3199 = vmatmul.mubr.f32.gmra.mrb[0].mxu0 %v2500
      %v3200 = vpop.f32.mrb[0].mxu0
      %v3201 = vadd.f32 %v3112, %v3200
      %v3202 = vpop.f32.mrb[0].mxu0
      %v3203 = vadd.f32 %v3114, %v3202
      %3204 = vmatprep.mubr.f32.mxu0 0.0
      %3205 = vmatmul.mubr.f32.gmra.mrb[0].mxu0 %v2503
      %v3206 = vpop.f32.mrb[0].mxu0
      %v3207 = vadd.f32 %v3118, %v3206
      %v3208 = vpop.f32.mrb[0].mxu0
      %v3209 = vadd.f32 %v3120, %v3208
      %3210 = vmatprep.mubr.f32.mxu0 0.0
      %3211 = vmatmul.mubr.f32.gmra.mrb[0].mxu0 %v2506
      %v3212 = vpop.f32.mrb[0].mxu0
      %v3213 = vadd.f32 %v3124, %v3212
      %v3214 = vpop.f32.mrb[0].mxu0
      %v3215 = vadd.f32 %v3126, %v3214
      %3216 = vmatprep.mubr.f32.mxu0 0.0
      %3217 = vmatmul.mubr.f32.gmra.mrb[0].mxu0 %v2509
      %v3218 = vpop.f32.mrb[0].mxu0
      %v3219 = vadd.f32 %v3130, %v3218
      %v3220 = vpop.f32.mrb[0].mxu0
      %v3221 = vadd.f32 %v3132, %v3220
      %3222 = vdwg.mxu0
      %vm3223 = vcmp.ge.f32.partialorder %v2667, 0.0
      %vm3224 = vcmp.ge.f32.partialorder %v2669, 0.0
      %vm3225 = vcmp.ge.f32.partialorder %v2845, 0.0
      %vm3226 = vcmp.ge.f32.partialorder %v2847, 0.0
      %vm3227 = vcmp.ge.f32.partialorder %v3023, 0.0
      %vm3228 = vcmp.ge.f32.partialorder %v3025, 0.0
      %vm3229 = vcmp.ge.f32.partialorder %v3201, 0.0
      %vm3230 = vcmp.ge.f32.partialorder %v3203, 0.0
      %vm3231 = vcmp.ge.f32.partialorder %v2673, 0.0
      %vm3232 = vcmp.ge.f32.partialorder %v2675, 0.0
      %vm3233 = vcmp.ge.f32.partialorder %v2851, 0.0
      %vm3234 = vcmp.ge.f32.partialorder %v2853, 0.0
      %vm3235 = vcmp.ge.f32.partialorder %v3029, 0.0
      %vm3236 = vcmp.ge.f32.partialorder %v3031, 0.0
      %vm3237 = vcmp.ge.f32.partialorder %v3207, 0.0
      %vm3238 = vcmp.ge.f32.partialorder %v3209, 0.0
      %vm3239 = vcmp.ge.f32.partialorder %v2679, 0.0
      %vm3240 = vcmp.ge.f32.partialorder %v2681, 0.0
      %vm3241 = vcmp.ge.f32.partialorder %v2857, 0.0
      %vm3242 = vcmp.ge.f32.partialorder %v2859, 0.0
      %vm3243 = vcmp.ge.f32.partialorder %v3035, 0.0
      %vm3244 = vcmp.ge.f32.partialorder %v3037, 0.0
      %vm3245 = vcmp.ge.f32.partialorder %v3213, 0.0
      %vm3246 = vcmp.ge.f32.partialorder %v3215, 0.0
      %vm3247 = vcmp.ge.f32.partialorder %v2685, 0.0
      %vm3248 = vcmp.ge.f32.partialorder %v2687, 0.0
      %vm3249 = vcmp.ge.f32.partialorder %v2863, 0.0
      %vm3250 = vcmp.ge.f32.partialorder %v2865, 0.0
      %vm3251 = vcmp.ge.f32.partialorder %v3041, 0.0
      %vm3252 = vcmp.ge.f32.partialorder %v3043, 0.0
      %vm3253 = vcmp.ge.f32.partialorder %v3219, 0.0
      %vm3254 = vcmp.ge.f32.partialorder %v3221, 0.0
      %v3255 = vmul.f32 %v2667, 0.2
      %v3256 = vmul.f32 %v2669, 0.2
      %v3257 = vmul.f32 %v2845, 0.2
      %v3258 = vmul.f32 %v2847, 0.2
      %v3259 = vmul.f32 %v3023, 0.2
      %v3260 = vmul.f32 %v3025, 0.2
      %v3261 = vmul.f32 %v3201, 0.2
      %v3262 = vmul.f32 %v3203, 0.2
      %v3263 = vmul.f32 %v2673, 0.2
      %v3264 = vmul.f32 %v2675, 0.2
      %v3265 = vmul.f32 %v2851, 0.2
      %v3266 = vmul.f32 %v2853, 0.2
      %v3267 = vmul.f32 %v3029, 0.2
      %v3268 = vmul.f32 %v3031, 0.2
      %v3269 = vmul.f32 %v3207, 0.2
      %v3270 = vmul.f32 %v3209, 0.2
      %v3271 = vmul.f32 %v2679, 0.2
      %v3272 = vmul.f32 %v2681, 0.2
      %v3273 = vmul.f32 %v2857, 0.2
      %v3274 = vmul.f32 %v2859, 0.2
      %v3275 = vmul.f32 %v3035, 0.2
      %v3276 = vmul.f32 %v3037, 0.2
      %v3277 = vmul.f32 %v3213, 0.2
      %v3278 = vmul.f32 %v3215, 0.2
      %v3279 = vmul.f32 %v2685, 0.2
      %v3280 = vmul.f32 %v2687, 0.2
      %v3281 = vmul.f32 %v2863, 0.2
      %v3282 = vmul.f32 %v2865, 0.2
      %v3283 = vmul.f32 %v3041, 0.2
      %v3284 = vmul.f32 %v3043, 0.2
      %v3285 = vmul.f32 %v3219, 0.2
      %v3286 = vmul.f32 %v3221, 0.2
      %v3287 = vsel %vm3223, %v2667, %v3255
      %v3288 = vsel %vm3224, %v2669, %v3256
      %v3289 = vsel %vm3225, %v2845, %v3257
      %v3290 = vsel %vm3226, %v2847, %v3258
      %v3291 = vsel %vm3227, %v3023, %v3259
      %v3292 = vsel %vm3228, %v3025, %v3260
      %v3293 = vsel %vm3229, %v3201, %v3261
      %v3294 = vsel %vm3230, %v3203, %v3262
      %v3295 = vsel %vm3231, %v2673, %v3263
      %v3296 = vsel %vm3232, %v2675, %v3264
      %v3297 = vsel %vm3233, %v2851, %v3265
      %v3298 = vsel %vm3234, %v2853, %v3266
      %v3299 = vsel %vm3235, %v3029, %v3267
      %v3300 = vsel %vm3236, %v3031, %v3268
      %v3301 = vsel %vm3237, %v3207, %v3269
      %v3302 = vsel %vm3238, %v3209, %v3270
      %v3303 = vsel %vm3239, %v2679, %v3271
      %v3304 = vsel %vm3240, %v2681, %v3272
      %v3305 = vsel %vm3241, %v2857, %v3273
      %v3306 = vsel %vm3242, %v2859, %v3274
      %v3307 = vsel %vm3243, %v3035, %v3275
      %v3308 = vsel %vm3244, %v3037, %v3276
      %v3309 = vsel %vm3245, %v3213, %v3277
      %v3310 = vsel %vm3246, %v3215, %v3278
      %v3311 = vsel %vm3247, %v2685, %v3279
      %v3312 = vsel %vm3248, %v2687, %v3280
      %v3313 = vsel %vm3249, %v2863, %v3281
      %v3314 = vsel %vm3250, %v2865, %v3282
      %v3315 = vsel %vm3251, %v3041, %v3283
      %v3316 = vsel %vm3252, %v3043, %v3284
      %v3317 = vsel %vm3253, %v3219, %v3285
      %v3318 = vsel %vm3254, %v3221, %v3286
      %v3319 = vmul.f32 %v3287, 1.4142135
      %v3320 = vmul.f32 %v3288, 1.4142135
      %v3321 = vmul.f32 %v3289, 1.4142135
      %v3322 = vmul.f32 %v3290, 1.4142135
      %v3323 = vmul.f32 %v3291, 1.4142135
      %v3324 = vmul.f32 %v3292, 1.4142135
      %v3325 = vmul.f32 %v3293, 1.4142135
      %v3326 = vmul.f32 %v3294, 1.4142135
      %v3327 = vmul.f32 %v3295, 1.4142135
      %v3328 = vmul.f32 %v3296, 1.4142135
      %v3329 = vmul.f32 %v3297, 1.4142135
      %v3330 = vmul.f32 %v3298, 1.4142135
      %v3331 = vmul.f32 %v3299, 1.4142135
      %v3332 = vmul.f32 %v3300, 1.4142135
      %v3333 = vmul.f32 %v3301, 1.4142135
      %v3334 = vmul.f32 %v3302, 1.4142135
      %v3335 = vmul.f32 %v3303, 1.4142135
      %v3336 = vmul.f32 %v3304, 1.4142135
      %v3337 = vmul.f32 %v3305, 1.4142135
      %v3338 = vmul.f32 %v3306, 1.4142135
      %v3339 = vmul.f32 %v3307, 1.4142135
      %v3340 = vmul.f32 %v3308, 1.4142135
      %v3341 = vmul.f32 %v3309, 1.4142135
      %v3342 = vmul.f32 %v3310, 1.4142135
      %v3343 = vmul.f32 %v3311, 1.4142135
      %v3344 = vmul.f32 %v3312, 1.4142135
      %v3345 = vmul.f32 %v3313, 1.4142135
      %v3346 = vmul.f32 %v3314, 1.4142135
      %v3347 = vmul.f32 %v3315, 1.4142135
      %v3348 = vmul.f32 %v3316, 1.4142135
      %v3349 = vmul.f32 %v3317, 1.4142135
      %v3350 = vmul.f32 %v3318, 1.4142135
      %v3351 = vld [vmem:[%s3] sm:$0xff]
      %v3352 = vld [vmem:[%s3 + $0x8] sm:$0xff]
      %v3353 = vld [vmem:[%s3 + $0x10] sm:$0xff]
      %v3354 = vld [vmem:[%s3 + $0x18] sm:$0xff]
      %v3355 = vld [vmem:[%s3 + $0x20] sm:$0xff]
      %v3356 = vld [vmem:[%s3 + $0x28] sm:$0xff]
      %v3357 = vld [vmem:[%s3 + $0x30] sm:$0xff]
      %v3358 = vld [vmem:[%s3 + $0x38] sm:$0xff]
      %v3359 = vld [vmem:[%s3 + $0x40] sm:$0xff]
      %v3360 = vld [vmem:[%s3 + $0x48] sm:$0xff]
      %v3361 = vld [vmem:[%s3 + $0x50] sm:$0xff]
      %v3362 = vld [vmem:[%s3 + $0x58] sm:$0xff]
      %3363 = vst [vmem:[#allocation3] sm:$0xff] 0.0
      %3364 = vst [vmem:[#allocation3 + $0x8] sm:$0xff] 0.0
      %3365 = vst [vmem:[#allocation3 + $0x10] sm:$0xff] 0.0
      %3366 = vst [vmem:[#allocation3 + $0x18] sm:$0xff] 0.0
      %3367 = vst [vmem:[#allocation3 + $0x20] sm:$0xff] 0.0
      %3368 = vst [vmem:[#allocation3 + $0x28] sm:$0xff] 0.0
      %3369 = vst [vmem:[#allocation3 + $0x30] sm:$0xff] 0.0
      %3370 = vst [vmem:[#allocation3 + $0x38] sm:$0xff] 0.0
      %3371 = vst [vmem:[#allocation3 + $0x40] sm:$0xff] 0.0
      %3372 = vst [vmem:[#allocation3 + $0x48] sm:$0xff] 0.0
      %3373 = vst [vmem:[#allocation3 + $0x50] sm:$0xff] 0.0
      %3374 = vst [vmem:[#allocation3 + $0x58] sm:$0xff] 0.0
      %3375 = vst [vmem:[#allocation3 + $0x60] sm:$0xff] 0.0
      %3376 = vst [vmem:[#allocation3 + $0x68] sm:$0xff] 0.0
      %3377 = vst [vmem:[#allocation3 + $0x70] sm:$0xff] 0.0
      %3378 = vst [vmem:[#allocation3 + $0x78] sm:$0xff] 0.0
      %3379 = vst [vmem:[#allocation3 + $0x80] sm:$0xff] 0.0
      %3380 = vst [vmem:[#allocation3 + $0x88] sm:$0xff] 0.0
      %3381 = vst [vmem:[#allocation3 + $0x90] sm:$0xff] 0.0
      %3382 = vst [vmem:[#allocation3 + $0x98] sm:$0xff] 0.0
      %3383 = vst [vmem:[#allocation3 + $0xa0] sm:$0xff] 0.0
      %3384 = vst [vmem:[#allocation3 + $0xa8] sm:$0xff] 0.0
      %3385 = vst [vmem:[#allocation3 + $0xb0] sm:$0xff] 0.0
      %3386 = vst [vmem:[#allocation3 + $0xb8] sm:$0xff] 0.0
      %3387 = vst [vmem:[#allocation3 + $0xc0] sm:$0xff] 0.0
      %3388 = vst [vmem:[#allocation3 + $0xc8] sm:$0xff] 0.0
      %3389 = vst [vmem:[#allocation3 + $0xd0] sm:$0xff] 0.0
      %3390 = vst [vmem:[#allocation3 + $0xd8] sm:$0xff] 0.0
      %3391 = vst [vmem:[#allocation3 + $0xe0] sm:$0xff] 0.0
      %3392 = vst [vmem:[#allocation3 + $0xe8] sm:$0xff] 0.0
      %3393 = vst [vmem:[#allocation3 + $0xf0] sm:$0xff] 0.0
      %3394 = vst [vmem:[#allocation3 + $0xf8] sm:$0xff] 0.0
      %3395 = vst [vmem:[#allocation3 + $0x100] sm:$0xff] 0.0
      %3396 = vst [vmem:[#allocation3 + $0x108] sm:$0xff] 0.0
      %3397 = vst [vmem:[#allocation3 + $0x110] sm:$0xff] 0.0
      %3398 = vst [vmem:[#allocation3 + $0x118] sm:$0xff] 0.0
      %3399 = vst [vmem:[#allocation3 + $0x120] sm:$0xff] 0.0
      %3400 = vst [vmem:[#allocation3 + $0x128] sm:$0xff] 0.0
      %3401 = vst [vmem:[#allocation3 + $0x130] sm:$0xff] 0.0
      %3402 = vst [vmem:[#allocation3 + $0x138] sm:$0xff] 0.0
      %3403 = vst [vmem:[#allocation3 + $0x8] sm:$0xff] %v3319
      %3404 = vst [vmem:[#allocation3 + $0x10] sm:$0xff] %v3320
      %3405 = vst [vmem:[#allocation3 + $0x18] sm:$0xff] %v3321
      %3406 = vst [vmem:[#allocation3 + $0x20] sm:$0xff] %v3322
      %3407 = vst [vmem:[#allocation3 + $0x28] sm:$0xff] %v3323
      %3408 = vst [vmem:[#allocation3 + $0x30] sm:$0xff] %v3324
      %3409 = vst [vmem:[#allocation3 + $0x38] sm:$0xff] %v3325
      %3410 = vst [vmem:[#allocation3 + $0x40] sm:$0xff] %v3326
      %3411 = vst [vmem:[#allocation3 + $0x58] sm:$0xff] %v3327
      %3412 = vst [vmem:[#allocation3 + $0x60] sm:$0xff] %v3328
      %3413 = vst [vmem:[#allocation3 + $0x68] sm:$0xff] %v3329
      %3414 = vst [vmem:[#allocation3 + $0x70] sm:$0xff] %v3330
      %3415 = vst [vmem:[#allocation3 + $0x78] sm:$0xff] %v3331
      %3416 = vst [vmem:[#allocation3 + $0x80] sm:$0xff] %v3332
      %3417 = vst [vmem:[#allocation3 + $0x88] sm:$0xff] %v3333
      %3418 = vst [vmem:[#allocation3 + $0x90] sm:$0xff] %v3334
      %3419 = vst [vmem:[#allocation3 + $0xa8] sm:$0xff] %v3335
      %3420 = vst [vmem:[#allocation3 + $0xb0] sm:$0xff] %v3336
      %3421 = vst [vmem:[#allocation3 + $0xb8] sm:$0xff] %v3337
      %3422 = vst [vmem:[#allocation3 + $0xc0] sm:$0xff] %v3338
      %3423 = vst [vmem:[#allocation3 + $0xc8] sm:$0xff] %v3339
      %3424 = vst [vmem:[#allocation3 + $0xd0] sm:$0xff] %v3340
      %3425 = vst [vmem:[#allocation3 + $0xd8] sm:$0xff] %v3341
      %3426 = vst [vmem:[#allocation3 + $0xe0] sm:$0xff] %v3342
      %3427 = vst [vmem:[#allocation3 + $0xf8] sm:$0xff] %v3343
      %3428 = vst [vmem:[#allocation3 + $0x100] sm:$0xff] %v3344
      %3429 = vst [vmem:[#allocation3 + $0x108] sm:$0xff] %v3345
      %3430 = vst [vmem:[#allocation3 + $0x110] sm:$0xff] %v3346
      %3431 = vst [vmem:[#allocation3 + $0x118] sm:$0xff] %v3347
      %3432 = vst [vmem:[#allocation3 + $0x120] sm:$0xff] %v3348
      %3433 = vst [vmem:[#allocation3 + $0x128] sm:$0xff] %v3349
      %3434 = vst [vmem:[#allocation3 + $0x130] sm:$0xff] %v3350
      %v3435 = vld [vmem:[#allocation3] sm:$0xff]
      %v3436 = vld [vmem:[#allocation3 + $0x8] sm:$0xff]
      %v3437 = vld [vmem:[#allocation3 + $0x10] sm:$0xff]
      %v3438 = vld [vmem:[#allocation3 + $0x18] sm:$0xff]
      %v3439 = vld [vmem:[#allocation3 + $0x20] sm:$0xff]
      %v3440 = vld [vmem:[#allocation3 + $0x28] sm:$0xff]
      %v3441 = vld [vmem:[#allocation3 + $0x30] sm:$0xff]
      %v3442 = vld [vmem:[#allocation3 + $0x38] sm:$0xff]
      %v3443 = vld [vmem:[#allocation3 + $0x40] sm:$0xff]
      %v3444 = vld [vmem:[#allocation3 + $0x50] sm:$0xff]
      %v3445 = vld [vmem:[#allocation3 + $0x58] sm:$0xff]
      %v3446 = vld [vmem:[#allocation3 + $0x60] sm:$0xff]
      %v3447 = vld [vmem:[#allocation3 + $0x68] sm:$0xff]
      %v3448 = vld [vmem:[#allocation3 + $0x70] sm:$0xff]
      %v3449 = vld [vmem:[#allocation3 + $0x78] sm:$0xff]
      %v3450 = vld [vmem:[#allocation3 + $0x80] sm:$0xff]
      %v3451 = vld [vmem:[#allocation3 + $0x88] sm:$0xff]
      %v3452 = vld [vmem:[#allocation3 + $0x90] sm:$0xff]
      %v3453 = vld [vmem:[#allocation3 + $0xa0] sm:$0xff]
      %v3454 = vld [vmem:[#allocation3 + $0xa8] sm:$0xff]
      %v3455 = vld [vmem:[#allocation3 + $0xb0] sm:$0xff]
      %v3456 = vld [vmem:[#allocation3 + $0xb8] sm:$0xff]
      %v3457 = vld [vmem:[#allocation3 + $0xc0] sm:$0xff]
      %v3458 = vld [vmem:[#allocation3 + $0xc8] sm:$0xff]
      %v3459 = vld [vmem:[#allocation3 + $0xd0] sm:$0xff]
      %v3460 = vld [vmem:[#allocation3 + $0xd8] sm:$0xff]
      %v3461 = vld [vmem:[#allocation3 + $0xe0] sm:$0xff]
      %v3462 = vld [vmem:[#allocation3 + $0xf0] sm:$0xff]
      %v3463 = vld [vmem:[#allocation3 + $0xf8] sm:$0xff]
      %v3464 = vld [vmem:[#allocation3 + $0x100] sm:$0xff]
      %v3465 = vld [vmem:[#allocation3 + $0x108] sm:$0xff]
      %v3466 = vld [vmem:[#allocation3 + $0x110] sm:$0xff]
      %v3467 = vld [vmem:[#allocation3 + $0x118] sm:$0xff]
      %v3468 = vld [vmem:[#allocation3 + $0x120] sm:$0xff]
      %v3469 = vld [vmem:[#allocation3 + $0x128] sm:$0xff]
      %v3470 = vld [vmem:[#allocation3 + $0x130] sm:$0xff]
      %3507 = vrot.lane.b32.xlu0 %v3435, 33
      %v3508 = vpop.permute.xlu0 %3507
      %3509 = vrot.lane.b32.xlu0 %v3436, 33
      %v3510 = vpop.permute.xlu0 %3509
      %3511 = vrot.lane.b32.xlu0 %v3437, 33
      %v3512 = vpop.permute.xlu0 %3511
      %3513 = vrot.lane.b32.xlu0 %v3438, 33
      %v3514 = vpop.permute.xlu0 %3513
      %3515 = vrot.lane.b32.xlu0 %v3439, 33
      %v3516 = vpop.permute.xlu0 %3515
      %3517 = vrot.lane.b32.xlu0 %v3440, 33
      %v3518 = vpop.permute.xlu0 %3517
      %3519 = vrot.lane.b32.xlu0 %v3441, 33
      %v3520 = vpop.permute.xlu0 %3519
      %3521 = vrot.lane.b32.xlu0 %v3442, 33
      %v3522 = vpop.permute.xlu0 %3521
      %3523 = vrot.lane.b32.xlu0 %v3443, 33
      %v3524 = vpop.permute.xlu0 %3523
      %3525 = vrot.lane.b32.xlu0 %v3444, 33
      %v3526 = vpop.permute.xlu0 %3525
      %3527 = vrot.lane.b32.xlu0 %v3445, 33
      %v3528 = vpop.permute.xlu0 %3527
      %3529 = vrot.lane.b32.xlu0 %v3446, 33
      %v3530 = vpop.permute.xlu0 %3529
      %3531 = vrot.lane.b32.xlu0 %v3447, 33
      %v3532 = vpop.permute.xlu0 %3531
      %3533 = vrot.lane.b32.xlu0 %v3448, 33
      %v3534 = vpop.permute.xlu0 %3533
      %3535 = vrot.lane.b32.xlu0 %v3449, 33
      %v3536 = vpop.permute.xlu0 %3535
      %3537 = vrot.lane.b32.xlu0 %v3450, 33
      %v3538 = vpop.permute.xlu0 %3537
      %3539 = vrot.lane.b32.xlu0 %v3451, 33
      %v3540 = vpop.permute.xlu0 %3539
      %3541 = vrot.lane.b32.xlu0 %v3452, 33
      %v3542 = vpop.permute.xlu0 %3541
      %3543 = vrot.lane.b32.xlu0 %v3453, 33
      %v3544 = vpop.permute.xlu0 %3543
      %3545 = vrot.lane.b32.xlu0 %v3454, 33
      %v3546 = vpop.permute.xlu0 %3545
      %3547 = vrot.lane.b32.xlu0 %v3455, 33
      %v3548 = vpop.permute.xlu0 %3547
      %3549 = vrot.lane.b32.xlu0 %v3456, 33
      %v3550 = vpop.permute.xlu0 %3549
      %3551 = vrot.lane.b32.xlu0 %v3457, 33
      %v3552 = vpop.permute.xlu0 %3551
      %3553 = vrot.lane.b32.xlu0 %v3458, 33
      %v3554 = vpop.permute.xlu0 %3553
      %3555 = vrot.lane.b32.xlu0 %v3459, 33
      %v3556 = vpop.permute.xlu0 %3555
      %3557 = vrot.lane.b32.xlu0 %v3460, 33
      %v3558 = vpop.permute.xlu0 %3557
      %3559 = vrot.lane.b32.xlu0 %v3461, 33
      %v3560 = vpop.permute.xlu0 %3559
      %3561 = vrot.lane.b32.xlu0 %v3462, 33
      %v3562 = vpop.permute.xlu0 %3561
      %3563 = vrot.lane.b32.xlu0 %v3463, 33
      %v3564 = vpop.permute.xlu0 %3563
      %3565 = vrot.lane.b32.xlu0 %v3464, 33
      %v3566 = vpop.permute.xlu0 %3565
      %3567 = vrot.lane.b32.xlu0 %v3465, 33
      %v3568 = vpop.permute.xlu0 %3567
      %3569 = vrot.lane.b32.xlu0 %v3466, 33
      %v3570 = vpop.permute.xlu0 %3569
      %3571 = vrot.lane.b32.xlu0 %v3467, 33
      %v3572 = vpop.permute.xlu0 %3571
      %3573 = vrot.lane.b32.xlu0 %v3468, 33
      %v3574 = vpop.permute.xlu0 %3573
      %3575 = vrot.lane.b32.xlu0 %v3469, 33
      %v3576 = vpop.permute.xlu0 %3575
      %3577 = vrot.lane.b32.xlu0 %v3470, 33
      %v3578 = vpop.permute.xlu0 %3577
      %v3579 = vsel %vm1175, %v3508, %v3510
      %v3580 = vsel %vm1175, %v3510, %v3512
      %v3581 = vsel %vm1175, %v3512, %v3514
      %v3582 = vsel %vm1175, %v3514, %v3516
      %v3583 = vsel %vm1175, %v3516, %v3518
      %v3584 = vsel %vm1175, %v3518, %v3520
      %v3585 = vsel %vm1175, %v3520, %v3522
      %v3586 = vsel %vm1175, %v3522, %v3524
      %v3587 = vsel %vm1175, %v3526, %v3528
      %v3588 = vsel %vm1175, %v3528, %v3530
      %v3589 = vsel %vm1175, %v3530, %v3532
      %v3590 = vsel %vm1175, %v3532, %v3534
      %v3591 = vsel %vm1175, %v3534, %v3536
      %v3592 = vsel %vm1175, %v3536, %v3538
      %v3593 = vsel %vm1175, %v3538, %v3540
      %v3594 = vsel %vm1175, %v3540, %v3542
      %v3595 = vsel %vm1175, %v3544, %v3546
      %v3596 = vsel %vm1175, %v3546, %v3548
      %v3597 = vsel %vm1175, %v3548, %v3550
      %v3598 = vsel %vm1175, %v3550, %v3552
      %v3599 = vsel %vm1175, %v3552, %v3554
      %v3600 = vsel %vm1175, %v3554, %v3556
      %v3601 = vsel %vm1175, %v3556, %v3558
      %v3602 = vsel %vm1175, %v3558, %v3560
      %v3603 = vsel %vm1175, %v3562, %v3564
      %v3604 = vsel %vm1175, %v3564, %v3566
      %v3605 = vsel %vm1175, %v3566, %v3568
      %v3606 = vsel %vm1175, %v3568, %v3570
      %v3607 = vsel %vm1175, %v3570, %v3572
      %v3608 = vsel %vm1175, %v3572, %v3574
      %v3609 = vsel %vm1175, %v3574, %v3576
      %v3610 = vsel %vm1175, %v3576, %v3578
      %v3643 = vsel %vm1059, %v3579, 0.0
      %v3644 = vsel %vm1060, %v3580, 0.0
      %v3645 = vsel %vm1061, %v3581, 0.0
      %v3646 = vsel %vm1062, %v3582, 0.0
      %v3647 = vsel %vm1063, %v3583, 0.0
      %v3648 = vsel %vm1064, %v3584, 0.0
      %v3649 = vsel %vm1065, %v3585, 0.0
      %v3650 = vsel %vm1066, %v3586, 0.0
      %v3651 = vsel %vm1059, %v3587, 0.0
      %v3652 = vsel %vm1060, %v3588, 0.0
      %v3653 = vsel %vm1061, %v3589, 0.0
      %v3654 = vsel %vm1062, %v3590, 0.0
      %v3655 = vsel %vm1063, %v3591, 0.0
      %v3656 = vsel %vm1064, %v3592, 0.0
      %v3657 = vsel %vm1065, %v3593, 0.0
      %v3658 = vsel %vm1066, %v3594, 0.0
      %v3659 = vsel %vm1059, %v3595, 0.0
      %v3660 = vsel %vm1060, %v3596, 0.0
      %v3661 = vsel %vm1061, %v3597, 0.0
      %v3662 = vsel %vm1062, %v3598, 0.0
      %v3663 = vsel %vm1063, %v3599, 0.0
      %v3664 = vsel %vm1064, %v3600, 0.0
      %v3665 = vsel %vm1065, %v3601, 0.0
      %v3666 = vsel %vm1066, %v3602, 0.0
      %v3667 = vsel %vm1059, %v3603, 0.0
      %v3668 = vsel %vm1060, %v3604, 0.0
      %v3669 = vsel %vm1061, %v3605, 0.0
      %v3670 = vsel %vm1062, %v3606, 0.0
      %v3671 = vsel %vm1063, %v3607, 0.0
      %v3672 = vsel %vm1064, %v3608, 0.0
      %v3673 = vsel %vm1065, %v3609, 0.0
      %v3674 = vsel %vm1066, %v3610, 0.0
      %3675 = vrot.lane.b32.xlu0 %v3435, 31
      %v3676 = vpop.permute.xlu0 %3675
      %3677 = vrot.lane.b32.xlu0 %v3436, 31
      %v3678 = vpop.permute.xlu0 %3677
      %3679 = vrot.lane.b32.xlu0 %v3437, 31
      %v3680 = vpop.permute.xlu0 %3679
      %3681 = vrot.lane.b32.xlu0 %v3438, 31
      %v3682 = vpop.permute.xlu0 %3681
      %3683 = vrot.lane.b32.xlu0 %v3439, 31
      %v3684 = vpop.permute.xlu0 %3683
      %3685 = vrot.lane.b32.xlu0 %v3440, 31
      %v3686 = vpop.permute.xlu0 %3685
      %3687 = vrot.lane.b32.xlu0 %v3441, 31
      %v3688 = vpop.permute.xlu0 %3687
      %3689 = vrot.lane.b32.xlu0 %v3442, 31
      %v3690 = vpop.permute.xlu0 %3689
      %3691 = vrot.lane.b32.xlu0 %v3443, 31
      %v3692 = vpop.permute.xlu0 %3691
      %3693 = vrot.lane.b32.xlu0 %v3444, 31
      %v3694 = vpop.permute.xlu0 %3693
      %3695 = vrot.lane.b32.xlu0 %v3445, 31
      %v3696 = vpop.permute.xlu0 %3695
      %3697 = vrot.lane.b32.xlu0 %v3446, 31
      %v3698 = vpop.permute.xlu0 %3697
      %3699 = vrot.lane.b32.xlu0 %v3447, 31
      %v3700 = vpop.permute.xlu0 %3699
      %3701 = vrot.lane.b32.xlu0 %v3448, 31
      %v3702 = vpop.permute.xlu0 %3701
      %3703 = vrot.lane.b32.xlu0 %v3449, 31
      %v3704 = vpop.permute.xlu0 %3703
      %3705 = vrot.lane.b32.xlu0 %v3450, 31
      %v3706 = vpop.permute.xlu0 %3705
      %3707 = vrot.lane.b32.xlu0 %v3451, 31
      %v3708 = vpop.permute.xlu0 %3707
      %3709 = vrot.lane.b32.xlu0 %v3452, 31
      %v3710 = vpop.permute.xlu0 %3709
      %3711 = vrot.lane.b32.xlu0 %v3453, 31
      %v3712 = vpop.permute.xlu0 %3711
      %3713 = vrot.lane.b32.xlu0 %v3454, 31
      %v3714 = vpop.permute.xlu0 %3713
      %3715 = vrot.lane.b32.xlu0 %v3455, 31
      %v3716 = vpop.permute.xlu0 %3715
      %3717 = vrot.lane.b32.xlu0 %v3456, 31
      %v3718 = vpop.permute.xlu0 %3717
      %3719 = vrot.lane.b32.xlu0 %v3457, 31
      %v3720 = vpop.permute.xlu0 %3719
      %3721 = vrot.lane.b32.xlu0 %v3458, 31
      %v3722 = vpop.permute.xlu0 %3721
      %3723 = vrot.lane.b32.xlu0 %v3459, 31
      %v3724 = vpop.permute.xlu0 %3723
      %3725 = vrot.lane.b32.xlu0 %v3460, 31
      %v3726 = vpop.permute.xlu0 %3725
      %3727 = vrot.lane.b32.xlu0 %v3461, 31
      %v3728 = vpop.permute.xlu0 %3727
      %3729 = vrot.lane.b32.xlu0 %v3462, 31
      %v3730 = vpop.permute.xlu0 %3729
      %3731 = vrot.lane.b32.xlu0 %v3463, 31
      %v3732 = vpop.permute.xlu0 %3731
      %3733 = vrot.lane.b32.xlu0 %v3464, 31
      %v3734 = vpop.permute.xlu0 %3733
      %3735 = vrot.lane.b32.xlu0 %v3465, 31
      %v3736 = vpop.permute.xlu0 %3735
      %3737 = vrot.lane.b32.xlu0 %v3466, 31
      %v3738 = vpop.permute.xlu0 %3737
      %3739 = vrot.lane.b32.xlu0 %v3467, 31
      %v3740 = vpop.permute.xlu0 %3739
      %3741 = vrot.lane.b32.xlu0 %v3468, 31
      %v3742 = vpop.permute.xlu0 %3741
      %3743 = vrot.lane.b32.xlu0 %v3469, 31
      %v3744 = vpop.permute.xlu0 %3743
      %3745 = vrot.lane.b32.xlu0 %v3470, 31
      %v3746 = vpop.permute.xlu0 %3745
      %v3747 = vsel %vm1368, %v3676, %v3678
      %v3748 = vsel %vm1368, %v3678, %v3680
      %v3749 = vsel %vm1368, %v3680, %v3682
      %v3750 = vsel %vm1368, %v3682, %v3684
      %v3751 = vsel %vm1368, %v3684, %v3686
      %v3752 = vsel %vm1368, %v3686, %v3688
      %v3753 = vsel %vm1368, %v3688, %v3690
      %v3754 = vsel %vm1368, %v3690, %v3692
      %v3755 = vsel %vm1368, %v3694, %v3696
      %v3756 = vsel %vm1368, %v3696, %v3698
      %v3757 = vsel %vm1368, %v3698, %v3700
      %v3758 = vsel %vm1368, %v3700, %v3702
      %v3759 = vsel %vm1368, %v3702, %v3704
      %v3760 = vsel %vm1368, %v3704, %v3706
      %v3761 = vsel %vm1368, %v3706, %v3708
      %v3762 = vsel %vm1368, %v3708, %v3710
      %v3763 = vsel %vm1368, %v3712, %v3714
      %v3764 = vsel %vm1368, %v3714, %v3716
      %v3765 = vsel %vm1368, %v3716, %v3718
      %v3766 = vsel %vm1368, %v3718, %v3720
      %v3767 = vsel %vm1368, %v3720, %v3722
      %v3768 = vsel %vm1368, %v3722, %v3724
      %v3769 = vsel %vm1368, %v3724, %v3726
      %v3770 = vsel %vm1368, %v3726, %v3728
      %v3771 = vsel %vm1368, %v3730, %v3732
      %v3772 = vsel %vm1368, %v3732, %v3734
      %v3773 = vsel %vm1368, %v3734, %v3736
      %v3774 = vsel %vm1368, %v3736, %v3738
      %v3775 = vsel %vm1368, %v3738, %v3740
      %v3776 = vsel %vm1368, %v3740, %v3742
      %v3777 = vsel %vm1368, %v3742, %v3744
      %v3778 = vsel %vm1368, %v3744, %v3746
      %v3811 = vsel %vm1288, %v3747, 0.0
      %v3812 = vsel %vm1289, %v3748, 0.0
      %v3813 = vsel %vm1290, %v3749, 0.0
      %v3814 = vsel %vm1291, %v3750, 0.0
      %v3815 = vsel %vm1292, %v3751, 0.0
      %v3816 = vsel %vm1293, %v3752, 0.0
      %v3817 = vsel %vm1294, %v3753, 0.0
      %v3818 = vsel %vm1295, %v3754, 0.0
      %v3819 = vsel %vm1288, %v3755, 0.0
      %v3820 = vsel %vm1289, %v3756, 0.0
      %v3821 = vsel %vm1290, %v3757, 0.0
      %v3822 = vsel %vm1291, %v3758, 0.0
      %v3823 = vsel %vm1292, %v3759, 0.0
      %v3824 = vsel %vm1293, %v3760, 0.0
      %v3825 = vsel %vm1294, %v3761, 0.0
      %v3826 = vsel %vm1295, %v3762, 0.0
      %v3827 = vsel %vm1288, %v3763, 0.0
      %v3828 = vsel %vm1289, %v3764, 0.0
      %v3829 = vsel %vm1290, %v3765, 0.0
      %v3830 = vsel %vm1291, %v3766, 0.0
      %v3831 = vsel %vm1292, %v3767, 0.0
      %v3832 = vsel %vm1293, %v3768, 0.0
      %v3833 = vsel %vm1294, %v3769, 0.0
      %v3834 = vsel %vm1295, %v3770, 0.0
      %v3835 = vsel %vm1288, %v3771, 0.0
      %v3836 = vsel %vm1289, %v3772, 0.0
      %v3837 = vsel %vm1290, %v3773, 0.0
      %v3838 = vsel %vm1291, %v3774, 0.0
      %v3839 = vsel %vm1292, %v3775, 0.0
      %v3840 = vsel %vm1293, %v3776, 0.0
      %v3841 = vsel %vm1294, %v3777, 0.0
      %v3842 = vsel %vm1295, %v3778, 0.0
      %3843 = vrot.lane.b32.xlu0 %v3435, 1
      %v3844 = vpop.permute.xlu0 %3843
      %3845 = vrot.lane.b32.xlu0 %v3436, 1
      %v3846 = vpop.permute.xlu0 %3845
      %3847 = vrot.lane.b32.xlu0 %v3437, 1
      %v3848 = vpop.permute.xlu0 %3847
      %3849 = vrot.lane.b32.xlu0 %v3438, 1
      %v3850 = vpop.permute.xlu0 %3849
      %3851 = vrot.lane.b32.xlu0 %v3439, 1
      %v3852 = vpop.permute.xlu0 %3851
      %3853 = vrot.lane.b32.xlu0 %v3440, 1
      %v3854 = vpop.permute.xlu0 %3853
      %3855 = vrot.lane.b32.xlu0 %v3441, 1
      %v3856 = vpop.permute.xlu0 %3855
      %3857 = vrot.lane.b32.xlu0 %v3442, 1
      %v3858 = vpop.permute.xlu0 %3857
      %3859 = vrot.lane.b32.xlu0 %v3443, 1
      %v3860 = vpop.permute.xlu0 %3859
      %3861 = vrot.lane.b32.xlu0 %v3444, 1
      %v3862 = vpop.permute.xlu0 %3861
      %3863 = vrot.lane.b32.xlu0 %v3445, 1
      %v3864 = vpop.permute.xlu0 %3863
      %3865 = vrot.lane.b32.xlu0 %v3446, 1
      %v3866 = vpop.permute.xlu0 %3865
      %3867 = vrot.lane.b32.xlu0 %v3447, 1
      %v3868 = vpop.permute.xlu0 %3867
      %3869 = vrot.lane.b32.xlu0 %v3448, 1
      %v3870 = vpop.permute.xlu0 %3869
      %3871 = vrot.lane.b32.xlu0 %v3449, 1
      %v3872 = vpop.permute.xlu0 %3871
      %3873 = vrot.lane.b32.xlu0 %v3450, 1
      %v3874 = vpop.permute.xlu0 %3873
      %3875 = vrot.lane.b32.xlu0 %v3451, 1
      %v3876 = vpop.permute.xlu0 %3875
      %3877 = vrot.lane.b32.xlu0 %v3452, 1
      %v3878 = vpop.permute.xlu0 %3877
      %3879 = vrot.lane.b32.xlu0 %v3453, 1
      %v3880 = vpop.permute.xlu0 %3879
      %3881 = vrot.lane.b32.xlu0 %v3454, 1
      %v3882 = vpop.permute.xlu0 %3881
      %3883 = vrot.lane.b32.xlu0 %v3455, 1
      %v3884 = vpop.permute.xlu0 %3883
      %3885 = vrot.lane.b32.xlu0 %v3456, 1
      %v3886 = vpop.permute.xlu0 %3885
      %3887 = vrot.lane.b32.xlu0 %v3457, 1
      %v3888 = vpop.permute.xlu0 %3887
      %3889 = vrot.lane.b32.xlu0 %v3458, 1
      %v3890 = vpop.permute.xlu0 %3889
      %3891 = vrot.lane.b32.xlu0 %v3459, 1
      %v3892 = vpop.permute.xlu0 %3891
      %3893 = vrot.lane.b32.xlu0 %v3460, 1
      %v3894 = vpop.permute.xlu0 %3893
      %3895 = vrot.lane.b32.xlu0 %v3461, 1
      %v3896 = vpop.permute.xlu0 %3895
      %3897 = vrot.lane.b32.xlu0 %v3462, 1
      %v3898 = vpop.permute.xlu0 %3897
      %3899 = vrot.lane.b32.xlu0 %v3463, 1
      %v3900 = vpop.permute.xlu0 %3899
      %3901 = vrot.lane.b32.xlu0 %v3464, 1
      %v3902 = vpop.permute.xlu0 %3901
      %3903 = vrot.lane.b32.xlu0 %v3465, 1
      %v3904 = vpop.permute.xlu0 %3903
      %3905 = vrot.lane.b32.xlu0 %v3466, 1
      %v3906 = vpop.permute.xlu0 %3905
      %3907 = vrot.lane.b32.xlu0 %v3467, 1
      %v3908 = vpop.permute.xlu0 %3907
      %3909 = vrot.lane.b32.xlu0 %v3468, 1
      %v3910 = vpop.permute.xlu0 %3909
      %3911 = vrot.lane.b32.xlu0 %v3469, 1
      %v3912 = vpop.permute.xlu0 %3911
      %3913 = vrot.lane.b32.xlu0 %v3470, 1
      %v3914 = vpop.permute.xlu0 %3913
      %v3915 = vsel %vm1537, %v3844, %v3846
      %v3916 = vsel %vm1537, %v3846, %v3848
      %v3917 = vsel %vm1537, %v3848, %v3850
      %v3918 = vsel %vm1537, %v3850, %v3852
      %v3919 = vsel %vm1537, %v3852, %v3854
      %v3920 = vsel %vm1537, %v3854, %v3856
      %v3921 = vsel %vm1537, %v3856, %v3858
      %v3922 = vsel %vm1537, %v3858, %v3860
      %v3923 = vsel %vm1537, %v3862, %v3864
      %v3924 = vsel %vm1537, %v3864, %v3866
      %v3925 = vsel %vm1537, %v3866, %v3868
      %v3926 = vsel %vm1537, %v3868, %v3870
      %v3927 = vsel %vm1537, %v3870, %v3872
      %v3928 = vsel %vm1537, %v3872, %v3874
      %v3929 = vsel %vm1537, %v3874, %v3876
      %v3930 = vsel %vm1537, %v3876, %v3878
      %v3931 = vsel %vm1537, %v3880, %v3882
      %v3932 = vsel %vm1537, %v3882, %v3884
      %v3933 = vsel %vm1537, %v3884, %v3886
      %v3934 = vsel %vm1537, %v3886, %v3888
      %v3935 = vsel %vm1537, %v3888, %v3890
      %v3936 = vsel %vm1537, %v3890, %v3892
      %v3937 = vsel %vm1537, %v3892, %v3894
      %v3938 = vsel %vm1537, %v3894, %v3896
      %v3939 = vsel %vm1537, %v3898, %v3900
      %v3940 = vsel %vm1537, %v3900, %v3902
      %v3941 = vsel %vm1537, %v3902, %v3904
      %v3942 = vsel %vm1537, %v3904, %v3906
      %v3943 = vsel %vm1537, %v3906, %v3908
      %v3944 = vsel %vm1537, %v3908, %v3910
      %v3945 = vsel %vm1537, %v3910, %v3912
      %v3946 = vsel %vm1537, %v3912, %v3914
      %v3979 = vsel %vm1059, %v3915, 0.0
      %v3980 = vsel %vm1060, %v3916, 0.0
      %v3981 = vsel %vm1061, %v3917, 0.0
      %v3982 = vsel %vm1062, %v3918, 0.0
      %v3983 = vsel %vm1063, %v3919, 0.0
      %v3984 = vsel %vm1064, %v3920, 0.0
      %v3985 = vsel %vm1065, %v3921, 0.0
      %v3986 = vsel %vm1066, %v3922, 0.0
      %v3987 = vsel %vm1059, %v3923, 0.0
      %v3988 = vsel %vm1060, %v3924, 0.0
      %v3989 = vsel %vm1061, %v3925, 0.0
      %v3990 = vsel %vm1062, %v3926, 0.0
      %v3991 = vsel %vm1063, %v3927, 0.0
      %v3992 = vsel %vm1064, %v3928, 0.0
      %v3993 = vsel %vm1065, %v3929, 0.0
      %v3994 = vsel %vm1066, %v3930, 0.0
      %v3995 = vsel %vm1059, %v3931, 0.0
      %v3996 = vsel %vm1060, %v3932, 0.0
      %v3997 = vsel %vm1061, %v3933, 0.0
      %v3998 = vsel %vm1062, %v3934, 0.0
      %v3999 = vsel %vm1063, %v3935, 0.0
      %v4000 = vsel %vm1064, %v3936, 0.0
      %v4001 = vsel %vm1065, %v3937, 0.0
      %v4002 = vsel %vm1066, %v3938, 0.0
      %v4003 = vsel %vm1059, %v3939, 0.0
      %v4004 = vsel %vm1060, %v3940, 0.0
      %v4005 = vsel %vm1061, %v3941, 0.0
      %v4006 = vsel %vm1062, %v3942, 0.0
      %v4007 = vsel %vm1063, %v3943, 0.0
      %v4008 = vsel %vm1064, %v3944, 0.0
      %v4009 = vsel %vm1065, %v3945, 0.0
      %v4010 = vsel %vm1066, %v3946, 0.0
      %v4011 = vld [vmem:[#allocation3 + $0x8] sm:$0xff]
      %v4012 = vld [vmem:[#allocation3 + $0x10] sm:$0xff]
      %v4013 = vld [vmem:[#allocation3 + $0x18] sm:$0xff]
      %v4014 = vld [vmem:[#allocation3 + $0x20] sm:$0xff]
      %v4015 = vld [vmem:[#allocation3 + $0x28] sm:$0xff]
      %v4016 = vld [vmem:[#allocation3 + $0x30] sm:$0xff]
      %v4017 = vld [vmem:[#allocation3 + $0x38] sm:$0xff]
      %v4018 = vld [vmem:[#allocation3 + $0x40] sm:$0xff]
      %v4019 = vld [vmem:[#allocation3 + $0x48] sm:$0xff]
      %v4020 = vld [vmem:[#allocation3 + $0x58] sm:$0xff]
      %v4021 = vld [vmem:[#allocation3 + $0x60] sm:$0xff]
      %v4022 = vld [vmem:[#allocation3 + $0x68] sm:$0xff]
      %v4023 = vld [vmem:[#allocation3 + $0x70] sm:$0xff]
      %v4024 = vld [vmem:[#allocation3 + $0x78] sm:$0xff]
      %v4025 = vld [vmem:[#allocation3 + $0x80] sm:$0xff]
      %v4026 = vld [vmem:[#allocation3 + $0x88] sm:$0xff]
      %v4027 = vld [vmem:[#allocation3 + $0x90] sm:$0xff]
      %v4028 = vld [vmem:[#allocation3 + $0x98] sm:$0xff]
      %v4029 = vld [vmem:[#allocation3 + $0xa8] sm:$0xff]
      %v4030 = vld [vmem:[#allocation3 + $0xb0] sm:$0xff]
      %v4031 = vld [vmem:[#allocation3 + $0xb8] sm:$0xff]
      %v4032 = vld [vmem:[#allocation3 + $0xc0] sm:$0xff]
      %v4033 = vld [vmem:[#allocation3 + $0xc8] sm:$0xff]
      %v4034 = vld [vmem:[#allocation3 + $0xd0] sm:$0xff]
      %v4035 = vld [vmem:[#allocation3 + $0xd8] sm:$0xff]
      %v4036 = vld [vmem:[#allocation3 + $0xe0] sm:$0xff]
      %v4037 = vld [vmem:[#allocation3 + $0xe8] sm:$0xff]
      %v4038 = vld [vmem:[#allocation3 + $0xf8] sm:$0xff]
      %v4039 = vld [vmem:[#allocation3 + $0x100] sm:$0xff]
      %v4040 = vld [vmem:[#allocation3 + $0x108] sm:$0xff]
      %v4041 = vld [vmem:[#allocation3 + $0x110] sm:$0xff]
      %v4042 = vld [vmem:[#allocation3 + $0x118] sm:$0xff]
      %v4043 = vld [vmem:[#allocation3 + $0x120] sm:$0xff]
      %v4044 = vld [vmem:[#allocation3 + $0x128] sm:$0xff]
      %v4045 = vld [vmem:[#allocation3 + $0x130] sm:$0xff]
      %v4046 = vld [vmem:[#allocation3 + $0x138] sm:$0xff]
      %4083 = vrot.lane.b32.xlu0 %v4011, 127
      %v4084 = vpop.permute.xlu0 %4083
      %4085 = vrot.lane.b32.xlu0 %v4012, 127
      %v4086 = vpop.permute.xlu0 %4085
      %4087 = vrot.lane.b32.xlu0 %v4013, 127
      %v4088 = vpop.permute.xlu0 %4087
      %4089 = vrot.lane.b32.xlu0 %v4014, 127
      %v4090 = vpop.permute.xlu0 %4089
      %4091 = vrot.lane.b32.xlu0 %v4015, 127
      %v4092 = vpop.permute.xlu0 %4091
      %4093 = vrot.lane.b32.xlu0 %v4016, 127
      %v4094 = vpop.permute.xlu0 %4093
      %4095 = vrot.lane.b32.xlu0 %v4017, 127
      %v4096 = vpop.permute.xlu0 %4095
      %4097 = vrot.lane.b32.xlu0 %v4018, 127
      %v4098 = vpop.permute.xlu0 %4097
      %4099 = vrot.lane.b32.xlu0 %v4019, 127
      %v4100 = vpop.permute.xlu0 %4099
      %4101 = vrot.lane.b32.xlu0 %v4020, 127
      %v4102 = vpop.permute.xlu0 %4101
      %4103 = vrot.lane.b32.xlu0 %v4021, 127
      %v4104 = vpop.permute.xlu0 %4103
      %4105 = vrot.lane.b32.xlu0 %v4022, 127
      %v4106 = vpop.permute.xlu0 %4105
      %4107 = vrot.lane.b32.xlu0 %v4023, 127
      %v4108 = vpop.permute.xlu0 %4107
      %4109 = vrot.lane.b32.xlu0 %v4024, 127
      %v4110 = vpop.permute.xlu0 %4109
      %4111 = vrot.lane.b32.xlu0 %v4025, 127
      %v4112 = vpop.permute.xlu0 %4111
      %4113 = vrot.lane.b32.xlu0 %v4026, 127
      %v4114 = vpop.permute.xlu0 %4113
      %4115 = vrot.lane.b32.xlu0 %v4027, 127
      %v4116 = vpop.permute.xlu0 %4115
      %4117 = vrot.lane.b32.xlu0 %v4028, 127
      %v4118 = vpop.permute.xlu0 %4117
      %4119 = vrot.lane.b32.xlu0 %v4029, 127
      %v4120 = vpop.permute.xlu0 %4119
      %4121 = vrot.lane.b32.xlu0 %v4030, 127
      %v4122 = vpop.permute.xlu0 %4121
      %4123 = vrot.lane.b32.xlu0 %v4031, 127
      %v4124 = vpop.permute.xlu0 %4123
      %4125 = vrot.lane.b32.xlu0 %v4032, 127
      %v4126 = vpop.permute.xlu0 %4125
      %4127 = vrot.lane.b32.xlu0 %v4033, 127
      %v4128 = vpop.permute.xlu0 %4127
      %4129 = vrot.lane.b32.xlu0 %v4034, 127
      %v4130 = vpop.permute.xlu0 %4129
      %4131 = vrot.lane.b32.xlu0 %v4035, 127
      %v4132 = vpop.permute.xlu0 %4131
      %4133 = vrot.lane.b32.xlu0 %v4036, 127
      %v4134 = vpop.permute.xlu0 %4133
      %4135 = vrot.lane.b32.xlu0 %v4037, 127
      %v4136 = vpop.permute.xlu0 %4135
      %4137 = vrot.lane.b32.xlu0 %v4038, 127
      %v4138 = vpop.permute.xlu0 %4137
      %4139 = vrot.lane.b32.xlu0 %v4039, 127
      %v4140 = vpop.permute.xlu0 %4139
      %4141 = vrot.lane.b32.xlu0 %v4040, 127
      %v4142 = vpop.permute.xlu0 %4141
      %4143 = vrot.lane.b32.xlu0 %v4041, 127
      %v4144 = vpop.permute.xlu0 %4143
      %4145 = vrot.lane.b32.xlu0 %v4042, 127
      %v4146 = vpop.permute.xlu0 %4145
      %4147 = vrot.lane.b32.xlu0 %v4043, 127
      %v4148 = vpop.permute.xlu0 %4147
      %4149 = vrot.lane.b32.xlu0 %v4044, 127
      %v4150 = vpop.permute.xlu0 %4149
      %4151 = vrot.lane.b32.xlu0 %v4045, 127
      %v4152 = vpop.permute.xlu0 %4151
      %4153 = vrot.lane.b32.xlu0 %v4046, 127
      %v4154 = vpop.permute.xlu0 %4153
      %v4155 = vsel %vm1778, %v4084, %v4086
      %v4156 = vsel %vm1778, %v4086, %v4088
      %v4157 = vsel %vm1778, %v4088, %v4090
      %v4158 = vsel %vm1778, %v4090, %v4092
      %v4159 = vsel %vm1778, %v4092, %v4094
      %v4160 = vsel %vm1778, %v4094, %v4096
      %v4161 = vsel %vm1778, %v4096, %v4098
      %v4162 = vsel %vm1778, %v4098, %v4100
      %v4163 = vsel %vm1778, %v4102, %v4104
      %v4164 = vsel %vm1778, %v4104, %v4106
      %v4165 = vsel %vm1778, %v4106, %v4108
      %v4166 = vsel %vm1778, %v4108, %v4110
      %v4167 = vsel %vm1778, %v4110, %v4112
      %v4168 = vsel %vm1778, %v4112, %v4114
      %v4169 = vsel %vm1778, %v4114, %v4116
      %v4170 = vsel %vm1778, %v4116, %v4118
      %v4171 = vsel %vm1778, %v4120, %v4122
      %v4172 = vsel %vm1778, %v4122, %v4124
      %v4173 = vsel %vm1778, %v4124, %v4126
      %v4174 = vsel %vm1778, %v4126, %v4128
      %v4175 = vsel %vm1778, %v4128, %v4130
      %v4176 = vsel %vm1778, %v4130, %v4132
      %v4177 = vsel %vm1778, %v4132, %v4134
      %v4178 = vsel %vm1778, %v4134, %v4136
      %v4179 = vsel %vm1778, %v4138, %v4140
      %v4180 = vsel %vm1778, %v4140, %v4142
      %v4181 = vsel %vm1778, %v4142, %v4144
      %v4182 = vsel %vm1778, %v4144, %v4146
      %v4183 = vsel %vm1778, %v4146, %v4148
      %v4184 = vsel %vm1778, %v4148, %v4150
      %v4185 = vsel %vm1778, %v4150, %v4152
      %v4186 = vsel %vm1778, %v4152, %v4154
      %v4219 = vsel %vm1288, %v4155, 0.0
      %v4220 = vsel %vm1289, %v4156, 0.0
      %v4221 = vsel %vm1290, %v4157, 0.0
      %v4222 = vsel %vm1291, %v4158, 0.0
      %v4223 = vsel %vm1292, %v4159, 0.0
      %v4224 = vsel %vm1293, %v4160, 0.0
      %v4225 = vsel %vm1294, %v4161, 0.0
      %v4226 = vsel %vm1295, %v4162, 0.0
      %v4227 = vsel %vm1288, %v4163, 0.0
      %v4228 = vsel %vm1289, %v4164, 0.0
      %v4229 = vsel %vm1290, %v4165, 0.0
      %v4230 = vsel %vm1291, %v4166, 0.0
      %v4231 = vsel %vm1292, %v4167, 0.0
      %v4232 = vsel %vm1293, %v4168, 0.0
      %v4233 = vsel %vm1294, %v4169, 0.0
      %v4234 = vsel %vm1295, %v4170, 0.0
      %v4235 = vsel %vm1288, %v4171, 0.0
      %v4236 = vsel %vm1289, %v4172, 0.0
      %v4237 = vsel %vm1290, %v4173, 0.0
      %v4238 = vsel %vm1291, %v4174, 0.0
      %v4239 = vsel %vm1292, %v4175, 0.0
      %v4240 = vsel %vm1293, %v4176, 0.0
      %v4241 = vsel %vm1294, %v4177, 0.0
      %v4242 = vsel %vm1295, %v4178, 0.0
      %v4243 = vsel %vm1288, %v4179, 0.0
      %v4244 = vsel %vm1289, %v4180, 0.0
      %v4245 = vsel %vm1290, %v4181, 0.0
      %v4246 = vsel %vm1291, %v4182, 0.0
      %v4247 = vsel %vm1292, %v4183, 0.0
      %v4248 = vsel %vm1293, %v4184, 0.0
      %v4249 = vsel %vm1294, %v4185, 0.0
      %v4250 = vsel %vm1295, %v4186, 0.0
      %4251 = vrot.lane.b32.xlu0 %v4011, 97
      %v4252 = vpop.permute.xlu0 %4251
      %4253 = vrot.lane.b32.xlu0 %v4012, 97
      %v4254 = vpop.permute.xlu0 %4253
      %4255 = vrot.lane.b32.xlu0 %v4013, 97
      %v4256 = vpop.permute.xlu0 %4255
      %4257 = vrot.lane.b32.xlu0 %v4014, 97
      %v4258 = vpop.permute.xlu0 %4257
      %4259 = vrot.lane.b32.xlu0 %v4015, 97
      %v4260 = vpop.permute.xlu0 %4259
      %4261 = vrot.lane.b32.xlu0 %v4016, 97
      %v4262 = vpop.permute.xlu0 %4261
      %4263 = vrot.lane.b32.xlu0 %v4017, 97
      %v4264 = vpop.permute.xlu0 %4263
      %4265 = vrot.lane.b32.xlu0 %v4018, 97
      %v4266 = vpop.permute.xlu0 %4265
      %4267 = vrot.lane.b32.xlu0 %v4019, 97
      %v4268 = vpop.permute.xlu0 %4267
      %4269 = vrot.lane.b32.xlu0 %v4020, 97
      %v4270 = vpop.permute.xlu0 %4269
      %4271 = vrot.lane.b32.xlu0 %v4021, 97
      %v4272 = vpop.permute.xlu0 %4271
      %4273 = vrot.lane.b32.xlu0 %v4022, 97
      %v4274 = vpop.permute.xlu0 %4273
      %4275 = vrot.lane.b32.xlu0 %v4023, 97
      %v4276 = vpop.permute.xlu0 %4275
      %4277 = vrot.lane.b32.xlu0 %v4024, 97
      %v4278 = vpop.permute.xlu0 %4277
      %4279 = vrot.lane.b32.xlu0 %v4025, 97
      %v4280 = vpop.permute.xlu0 %4279
      %4281 = vrot.lane.b32.xlu0 %v4026, 97
      %v4282 = vpop.permute.xlu0 %4281
      %4283 = vrot.lane.b32.xlu0 %v4027, 97
      %v4284 = vpop.permute.xlu0 %4283
      %4285 = vrot.lane.b32.xlu0 %v4028, 97
      %v4286 = vpop.permute.xlu0 %4285
      %4287 = vrot.lane.b32.xlu0 %v4029, 97
      %v4288 = vpop.permute.xlu0 %4287
      %4289 = vrot.lane.b32.xlu0 %v4030, 97
      %v4290 = vpop.permute.xlu0 %4289
      %4291 = vrot.lane.b32.xlu0 %v4031, 97
      %v4292 = vpop.permute.xlu0 %4291
      %4293 = vrot.lane.b32.xlu0 %v4032, 97
      %v4294 = vpop.permute.xlu0 %4293
      %4295 = vrot.lane.b32.xlu0 %v4033, 97
      %v4296 = vpop.permute.xlu0 %4295
      %4297 = vrot.lane.b32.xlu0 %v4034, 97
      %v4298 = vpop.permute.xlu0 %4297
      %4299 = vrot.lane.b32.xlu0 %v4035, 97
      %v4300 = vpop.permute.xlu0 %4299
      %4301 = vrot.lane.b32.xlu0 %v4036, 97
      %v4302 = vpop.permute.xlu0 %4301
      %4303 = vrot.lane.b32.xlu0 %v4037, 97
      %v4304 = vpop.permute.xlu0 %4303
      %4305 = vrot.lane.b32.xlu0 %v4038, 97
      %v4306 = vpop.permute.xlu0 %4305
      %4307 = vrot.lane.b32.xlu0 %v4039, 97
      %v4308 = vpop.permute.xlu0 %4307
      %4309 = vrot.lane.b32.xlu0 %v4040, 97
      %v4310 = vpop.permute.xlu0 %4309
      %4311 = vrot.lane.b32.xlu0 %v4041, 97
      %v4312 = vpop.permute.xlu0 %4311
      %4313 = vrot.lane.b32.xlu0 %v4042, 97
      %v4314 = vpop.permute.xlu0 %4313
      %4315 = vrot.lane.b32.xlu0 %v4043, 97
      %v4316 = vpop.permute.xlu0 %4315
      %4317 = vrot.lane.b32.xlu0 %v4044, 97
      %v4318 = vpop.permute.xlu0 %4317
      %4319 = vrot.lane.b32.xlu0 %v4045, 97
      %v4320 = vpop.permute.xlu0 %4319
      %4321 = vrot.lane.b32.xlu0 %v4046, 97
      %v4322 = vpop.permute.xlu0 %4321
      %v4323 = vsel %vm1947, %v4252, %v4254
      %v4324 = vsel %vm1947, %v4254, %v4256
      %v4325 = vsel %vm1947, %v4256, %v4258
      %v4326 = vsel %vm1947, %v4258, %v4260
      %v4327 = vsel %vm1947, %v4260, %v4262
      %v4328 = vsel %vm1947, %v4262, %v4264
      %v4329 = vsel %vm1947, %v4264, %v4266
      %v4330 = vsel %vm1947, %v4266, %v4268
      %v4331 = vsel %vm1947, %v4270, %v4272
      %v4332 = vsel %vm1947, %v4272, %v4274
      %v4333 = vsel %vm1947, %v4274, %v4276
      %v4334 = vsel %vm1947, %v4276, %v4278
      %v4335 = vsel %vm1947, %v4278, %v4280
      %v4336 = vsel %vm1947, %v4280, %v4282
      %v4337 = vsel %vm1947, %v4282, %v4284
      %v4338 = vsel %vm1947, %v4284, %v4286
      %v4339 = vsel %vm1947, %v4288, %v4290
      %v4340 = vsel %vm1947, %v4290, %v4292
      %v4341 = vsel %vm1947, %v4292, %v4294
      %v4342 = vsel %vm1947, %v4294, %v4296
      %v4343 = vsel %vm1947, %v4296, %v4298
      %v4344 = vsel %vm1947, %v4298, %v4300
      %v4345 = vsel %vm1947, %v4300, %v4302
      %v4346 = vsel %vm1947, %v4302, %v4304
      %v4347 = vsel %vm1947, %v4306, %v4308
      %v4348 = vsel %vm1947, %v4308, %v4310
      %v4349 = vsel %vm1947, %v4310, %v4312
      %v4350 = vsel %vm1947, %v4312, %v4314
      %v4351 = vsel %vm1947, %v4314, %v4316
      %v4352 = vsel %vm1947, %v4316, %v4318
      %v4353 = vsel %vm1947, %v4318, %v4320
      %v4354 = vsel %vm1947, %v4320, %v4322
      %v4387 = vsel %vm1059, %v4323, 0.0
      %v4388 = vsel %vm1060, %v4324, 0.0
      %v4389 = vsel %vm1061, %v4325, 0.0
      %v4390 = vsel %vm1062, %v4326, 0.0
      %v4391 = vsel %vm1063, %v4327, 0.0
      %v4392 = vsel %vm1064, %v4328, 0.0
      %v4393 = vsel %vm1065, %v4329, 0.0
      %v4394 = vsel %vm1066, %v4330, 0.0
      %v4395 = vsel %vm1059, %v4331, 0.0
      %v4396 = vsel %vm1060, %v4332, 0.0
      %v4397 = vsel %vm1061, %v4333, 0.0
      %v4398 = vsel %vm1062, %v4334, 0.0
      %v4399 = vsel %vm1063, %v4335, 0.0
      %v4400 = vsel %vm1064, %v4336, 0.0
      %v4401 = vsel %vm1065, %v4337, 0.0
      %v4402 = vsel %vm1066, %v4338, 0.0
      %v4403 = vsel %vm1059, %v4339, 0.0
      %v4404 = vsel %vm1060, %v4340, 0.0
      %v4405 = vsel %vm1061, %v4341, 0.0
      %v4406 = vsel %vm1062, %v4342, 0.0
      %v4407 = vsel %vm1063, %v4343, 0.0
      %v4408 = vsel %vm1064, %v4344, 0.0
      %v4409 = vsel %vm1065, %v4345, 0.0
      %v4410 = vsel %vm1066, %v4346, 0.0
      %v4411 = vsel %vm1059, %v4347, 0.0
      %v4412 = vsel %vm1060, %v4348, 0.0
      %v4413 = vsel %vm1061, %v4349, 0.0
      %v4414 = vsel %vm1062, %v4350, 0.0
      %v4415 = vsel %vm1063, %v4351, 0.0
      %v4416 = vsel %vm1064, %v4352, 0.0
      %v4417 = vsel %vm1065, %v4353, 0.0
      %v4418 = vsel %vm1066, %v4354, 0.0
      %4419 = vrot.lane.b32.xlu0 %v4011, 95
      %v4420 = vpop.permute.xlu0 %4419
      %4421 = vrot.lane.b32.xlu0 %v4012, 95
      %v4422 = vpop.permute.xlu0 %4421
      %4423 = vrot.lane.b32.xlu0 %v4013, 95
      %v4424 = vpop.permute.xlu0 %4423
      %4425 = vrot.lane.b32.xlu0 %v4014, 95
      %v4426 = vpop.permute.xlu0 %4425
      %4427 = vrot.lane.b32.xlu0 %v4015, 95
      %v4428 = vpop.permute.xlu0 %4427
      %4429 = vrot.lane.b32.xlu0 %v4016, 95
      %v4430 = vpop.permute.xlu0 %4429
      %4431 = vrot.lane.b32.xlu0 %v4017, 95
      %v4432 = vpop.permute.xlu0 %4431
      %4433 = vrot.lane.b32.xlu0 %v4018, 95
      %v4434 = vpop.permute.xlu0 %4433
      %4435 = vrot.lane.b32.xlu0 %v4019, 95
      %v4436 = vpop.permute.xlu0 %4435
      %4437 = vrot.lane.b32.xlu0 %v4020, 95
      %v4438 = vpop.permute.xlu0 %4437
      %4439 = vrot.lane.b32.xlu0 %v4021, 95
      %v4440 = vpop.permute.xlu0 %4439
      %4441 = vrot.lane.b32.xlu0 %v4022, 95
      %v4442 = vpop.permute.xlu0 %4441
      %4443 = vrot.lane.b32.xlu0 %v4023, 95
      %v4444 = vpop.permute.xlu0 %4443
      %4445 = vrot.lane.b32.xlu0 %v4024, 95
      %v4446 = vpop.permute.xlu0 %4445
      %4447 = vrot.lane.b32.xlu0 %v4025, 95
      %v4448 = vpop.permute.xlu0 %4447
      %4449 = vrot.lane.b32.xlu0 %v4026, 95
      %v4450 = vpop.permute.xlu0 %4449
      %4451 = vrot.lane.b32.xlu0 %v4027, 95
      %v4452 = vpop.permute.xlu0 %4451
      %4453 = vrot.lane.b32.xlu0 %v4028, 95
      %v4454 = vpop.permute.xlu0 %4453
      %4455 = vrot.lane.b32.xlu0 %v4029, 95
      %v4456 = vpop.permute.xlu0 %4455
      %4457 = vrot.lane.b32.xlu0 %v4030, 95
      %v4458 = vpop.permute.xlu0 %4457
      %4459 = vrot.lane.b32.xlu0 %v4031, 95
      %v4460 = vpop.permute.xlu0 %4459
      %4461 = vrot.lane.b32.xlu0 %v4032, 95
      %v4462 = vpop.permute.xlu0 %4461
      %4463 = vrot.lane.b32.xlu0 %v4033, 95
      %v4464 = vpop.permute.xlu0 %4463
      %4465 = vrot.lane.b32.xlu0 %v4034, 95
      %v4466 = vpop.permute.xlu0 %4465
      %4467 = vrot.lane.b32.xlu0 %v4035, 95
      %v4468 = vpop.permute.xlu0 %4467
      %4469 = vrot.lane.b32.xlu0 %v4036, 95
      %v4470 = vpop.permute.xlu0 %4469
      %4471 = vrot.lane.b32.xlu0 %v4037, 95
      %v4472 = vpop.permute.xlu0 %4471
      %4473 = vrot.lane.b32.xlu0 %v4038, 95
      %v4474 = vpop.permute.xlu0 %4473
      %4475 = vrot.lane.b32.xlu0 %v4039, 95
      %v4476 = vpop.permute.xlu0 %4475
      %4477 = vrot.lane.b32.xlu0 %v4040, 95
      %v4478 = vpop.permute.xlu0 %4477
      %4479 = vrot.lane.b32.xlu0 %v4041, 95
      %v4480 = vpop.permute.xlu0 %4479
      %4481 = vrot.lane.b32.xlu0 %v4042, 95
      %v4482 = vpop.permute.xlu0 %4481
      %4483 = vrot.lane.b32.xlu0 %v4043, 95
      %v4484 = vpop.permute.xlu0 %4483
      %4485 = vrot.lane.b32.xlu0 %v4044, 95
      %v4486 = vpop.permute.xlu0 %4485
      %4487 = vrot.lane.b32.xlu0 %v4045, 95
      %v4488 = vpop.permute.xlu0 %4487
      %4489 = vrot.lane.b32.xlu0 %v4046, 95
      %v4490 = vpop.permute.xlu0 %4489
      %v4491 = vsel %vm2116, %v4420, %v4422
      %v4492 = vsel %vm2116, %v4422, %v4424
      %v4493 = vsel %vm2116, %v4424, %v4426
      %v4494 = vsel %vm2116, %v4426, %v4428
      %v4495 = vsel %vm2116, %v4428, %v4430
      %v4496 = vsel %vm2116, %v4430, %v4432
      %v4497 = vsel %vm2116, %v4432, %v4434
      %v4498 = vsel %vm2116, %v4434, %v4436
      %v4499 = vsel %vm2116, %v4438, %v4440
      %v4500 = vsel %vm2116, %v4440, %v4442
      %v4501 = vsel %vm2116, %v4442, %v4444
      %v4502 = vsel %vm2116, %v4444, %v4446
      %v4503 = vsel %vm2116, %v4446, %v4448
      %v4504 = vsel %vm2116, %v4448, %v4450
      %v4505 = vsel %vm2116, %v4450, %v4452
      %v4506 = vsel %vm2116, %v4452, %v4454
      %v4507 = vsel %vm2116, %v4456, %v4458
      %v4508 = vsel %vm2116, %v4458, %v4460
      %v4509 = vsel %vm2116, %v4460, %v4462
      %v4510 = vsel %vm2116, %v4462, %v4464
      %v4511 = vsel %vm2116, %v4464, %v4466
      %v4512 = vsel %vm2116, %v4466, %v4468
      %v4513 = vsel %vm2116, %v4468, %v4470
      %v4514 = vsel %vm2116, %v4470, %v4472
      %v4515 = vsel %vm2116, %v4474, %v4476
      %v4516 = vsel %vm2116, %v4476, %v4478
      %v4517 = vsel %vm2116, %v4478, %v4480
      %v4518 = vsel %vm2116, %v4480, %v4482
      %v4519 = vsel %vm2116, %v4482, %v4484
      %v4520 = vsel %vm2116, %v4484, %v4486
      %v4521 = vsel %vm2116, %v4486, %v4488
      %v4522 = vsel %vm2116, %v4488, %v4490
      %v4555 = vsel %vm1288, %v4491, 0.0
      %v4556 = vsel %vm1289, %v4492, 0.0
      %v4557 = vsel %vm1290, %v4493, 0.0
      %v4558 = vsel %vm1291, %v4494, 0.0
      %v4559 = vsel %vm1292, %v4495, 0.0
      %v4560 = vsel %vm1293, %v4496, 0.0
      %v4561 = vsel %vm1294, %v4497, 0.0
      %v4562 = vsel %vm1295, %v4498, 0.0
      %v4563 = vsel %vm1288, %v4499, 0.0
      %v4564 = vsel %vm1289, %v4500, 0.0
      %v4565 = vsel %vm1290, %v4501, 0.0
      %v4566 = vsel %vm1291, %v4502, 0.0
      %v4567 = vsel %vm1292, %v4503, 0.0
      %v4568 = vsel %vm1293, %v4504, 0.0
      %v4569 = vsel %vm1294, %v4505, 0.0
      %v4570 = vsel %vm1295, %v4506, 0.0
      %v4571 = vsel %vm1288, %v4507, 0.0
      %v4572 = vsel %vm1289, %v4508, 0.0
      %v4573 = vsel %vm1290, %v4509, 0.0
      %v4574 = vsel %vm1291, %v4510, 0.0
      %v4575 = vsel %vm1292, %v4511, 0.0
      %v4576 = vsel %vm1293, %v4512, 0.0
      %v4577 = vsel %vm1294, %v4513, 0.0
      %v4578 = vsel %vm1295, %v4514, 0.0
      %v4579 = vsel %vm1288, %v4515, 0.0
      %v4580 = vsel %vm1289, %v4516, 0.0
      %v4581 = vsel %vm1290, %v4517, 0.0
      %v4582 = vsel %vm1291, %v4518, 0.0
      %v4583 = vsel %vm1292, %v4519, 0.0
      %v4584 = vsel %vm1293, %v4520, 0.0
      %v4585 = vsel %vm1294, %v4521, 0.0
      %v4586 = vsel %vm1295, %v4522, 0.0
      %4587 = vrot.lane.b32.xlu0 %v3435, 32
      %v4588 = vpop.permute.xlu0 %4587
      %4589 = vrot.lane.b32.xlu0 %v3436, 32
      %v4590 = vpop.permute.xlu0 %4589
      %4591 = vrot.lane.b32.xlu0 %v3437, 32
      %v4592 = vpop.permute.xlu0 %4591
      %4593 = vrot.lane.b32.xlu0 %v3438, 32
      %v4594 = vpop.permute.xlu0 %4593
      %4595 = vrot.lane.b32.xlu0 %v3439, 32
      %v4596 = vpop.permute.xlu0 %4595
      %4597 = vrot.lane.b32.xlu0 %v3440, 32
      %v4598 = vpop.permute.xlu0 %4597
      %4599 = vrot.lane.b32.xlu0 %v3441, 32
      %v4600 = vpop.permute.xlu0 %4599
      %4601 = vrot.lane.b32.xlu0 %v3442, 32
      %v4602 = vpop.permute.xlu0 %4601
      %4603 = vrot.lane.b32.xlu0 %v3443, 32
      %v4604 = vpop.permute.xlu0 %4603
      %4605 = vrot.lane.b32.xlu0 %v3444, 32
      %v4606 = vpop.permute.xlu0 %4605
      %4607 = vrot.lane.b32.xlu0 %v3445, 32
      %v4608 = vpop.permute.xlu0 %4607
      %4609 = vrot.lane.b32.xlu0 %v3446, 32
      %v4610 = vpop.permute.xlu0 %4609
      %4611 = vrot.lane.b32.xlu0 %v3447, 32
      %v4612 = vpop.permute.xlu0 %4611
      %4613 = vrot.lane.b32.xlu0 %v3448, 32
      %v4614 = vpop.permute.xlu0 %4613
      %4615 = vrot.lane.b32.xlu0 %v3449, 32
      %v4616 = vpop.permute.xlu0 %4615
      %4617 = vrot.lane.b32.xlu0 %v3450, 32
      %v4618 = vpop.permute.xlu0 %4617
      %4619 = vrot.lane.b32.xlu0 %v3451, 32
      %v4620 = vpop.permute.xlu0 %4619
      %4621 = vrot.lane.b32.xlu0 %v3452, 32
      %v4622 = vpop.permute.xlu0 %4621
      %4623 = vrot.lane.b32.xlu0 %v3453, 32
      %v4624 = vpop.permute.xlu0 %4623
      %4625 = vrot.lane.b32.xlu0 %v3454, 32
      %v4626 = vpop.permute.xlu0 %4625
      %4627 = vrot.lane.b32.xlu0 %v3455, 32
      %v4628 = vpop.permute.xlu0 %4627
      %4629 = vrot.lane.b32.xlu0 %v3456, 32
      %v4630 = vpop.permute.xlu0 %4629
      %4631 = vrot.lane.b32.xlu0 %v3457, 32
      %v4632 = vpop.permute.xlu0 %4631
      %4633 = vrot.lane.b32.xlu0 %v3458, 32
      %v4634 = vpop.permute.xlu0 %4633
      %4635 = vrot.lane.b32.xlu0 %v3459, 32
      %v4636 = vpop.permute.xlu0 %4635
      %4637 = vrot.lane.b32.xlu0 %v3460, 32
      %v4638 = vpop.permute.xlu0 %4637
      %4639 = vrot.lane.b32.xlu0 %v3461, 32
      %v4640 = vpop.permute.xlu0 %4639
      %4641 = vrot.lane.b32.xlu0 %v3462, 32
      %v4642 = vpop.permute.xlu0 %4641
      %4643 = vrot.lane.b32.xlu0 %v3463, 32
      %v4644 = vpop.permute.xlu0 %4643
      %4645 = vrot.lane.b32.xlu0 %v3464, 32
      %v4646 = vpop.permute.xlu0 %4645
      %4647 = vrot.lane.b32.xlu0 %v3465, 32
      %v4648 = vpop.permute.xlu0 %4647
      %4649 = vrot.lane.b32.xlu0 %v3466, 32
      %v4650 = vpop.permute.xlu0 %4649
      %4651 = vrot.lane.b32.xlu0 %v3467, 32
      %v4652 = vpop.permute.xlu0 %4651
      %4653 = vrot.lane.b32.xlu0 %v3468, 32
      %v4654 = vpop.permute.xlu0 %4653
      %4655 = vrot.lane.b32.xlu0 %v3469, 32
      %v4656 = vpop.permute.xlu0 %4655
      %4657 = vrot.lane.b32.xlu0 %v3470, 32
      %v4658 = vpop.permute.xlu0 %4657
      %v4659 = vsel %vm2285, %v4588, %v4590
      %v4660 = vsel %vm2285, %v4590, %v4592
      %v4661 = vsel %vm2285, %v4592, %v4594
      %v4662 = vsel %vm2285, %v4594, %v4596
      %v4663 = vsel %vm2285, %v4596, %v4598
      %v4664 = vsel %vm2285, %v4598, %v4600
      %v4665 = vsel %vm2285, %v4600, %v4602
      %v4666 = vsel %vm2285, %v4602, %v4604
      %v4667 = vsel %vm2285, %v4606, %v4608
      %v4668 = vsel %vm2285, %v4608, %v4610
      %v4669 = vsel %vm2285, %v4610, %v4612
      %v4670 = vsel %vm2285, %v4612, %v4614
      %v4671 = vsel %vm2285, %v4614, %v4616
      %v4672 = vsel %vm2285, %v4616, %v4618
      %v4673 = vsel %vm2285, %v4618, %v4620
      %v4674 = vsel %vm2285, %v4620, %v4622
      %v4675 = vsel %vm2285, %v4624, %v4626
      %v4676 = vsel %vm2285, %v4626, %v4628
      %v4677 = vsel %vm2285, %v4628, %v4630
      %v4678 = vsel %vm2285, %v4630, %v4632
      %v4679 = vsel %vm2285, %v4632, %v4634
      %v4680 = vsel %vm2285, %v4634, %v4636
      %v4681 = vsel %vm2285, %v4636, %v4638
      %v4682 = vsel %vm2285, %v4638, %v4640
      %v4683 = vsel %vm2285, %v4642, %v4644
      %v4684 = vsel %vm2285, %v4644, %v4646
      %v4685 = vsel %vm2285, %v4646, %v4648
      %v4686 = vsel %vm2285, %v4648, %v4650
      %v4687 = vsel %vm2285, %v4650, %v4652
      %v4688 = vsel %vm2285, %v4652, %v4654
      %v4689 = vsel %vm2285, %v4654, %v4656
      %v4690 = vsel %vm2285, %v4656, %v4658
      %4723 = vrot.lane.b32.xlu0 %v4011, 96
      %v4724 = vpop.permute.xlu0 %4723
      %4725 = vrot.lane.b32.xlu0 %v4012, 96
      %v4726 = vpop.permute.xlu0 %4725
      %4727 = vrot.lane.b32.xlu0 %v4013, 96
      %v4728 = vpop.permute.xlu0 %4727
      %4729 = vrot.lane.b32.xlu0 %v4014, 96
      %v4730 = vpop.permute.xlu0 %4729
      %4731 = vrot.lane.b32.xlu0 %v4015, 96
      %v4732 = vpop.permute.xlu0 %4731
      %4733 = vrot.lane.b32.xlu0 %v4016, 96
      %v4734 = vpop.permute.xlu0 %4733
      %4735 = vrot.lane.b32.xlu0 %v4017, 96
      %v4736 = vpop.permute.xlu0 %4735
      %4737 = vrot.lane.b32.xlu0 %v4018, 96
      %v4738 = vpop.permute.xlu0 %4737
      %4739 = vrot.lane.b32.xlu0 %v4019, 96
      %v4740 = vpop.permute.xlu0 %4739
      %4741 = vrot.lane.b32.xlu0 %v4020, 96
      %v4742 = vpop.permute.xlu0 %4741
      %4743 = vrot.lane.b32.xlu0 %v4021, 96
      %v4744 = vpop.permute.xlu0 %4743
      %4745 = vrot.lane.b32.xlu0 %v4022, 96
      %v4746 = vpop.permute.xlu0 %4745
      %4747 = vrot.lane.b32.xlu0 %v4023, 96
      %v4748 = vpop.permute.xlu0 %4747
      %4749 = vrot.lane.b32.xlu0 %v4024, 96
      %v4750 = vpop.permute.xlu0 %4749
      %4751 = vrot.lane.b32.xlu0 %v4025, 96
      %v4752 = vpop.permute.xlu0 %4751
      %4753 = vrot.lane.b32.xlu0 %v4026, 96
      %v4754 = vpop.permute.xlu0 %4753
      %4755 = vrot.lane.b32.xlu0 %v4027, 96
      %v4756 = vpop.permute.xlu0 %4755
      %4757 = vrot.lane.b32.xlu0 %v4028, 96
      %v4758 = vpop.permute.xlu0 %4757
      %4759 = vrot.lane.b32.xlu0 %v4029, 96
      %v4760 = vpop.permute.xlu0 %4759
      %4761 = vrot.lane.b32.xlu0 %v4030, 96
      %v4762 = vpop.permute.xlu0 %4761
      %4763 = vrot.lane.b32.xlu0 %v4031, 96
      %v4764 = vpop.permute.xlu0 %4763
      %4765 = vrot.lane.b32.xlu0 %v4032, 96
      %v4766 = vpop.permute.xlu0 %4765
      %4767 = vrot.lane.b32.xlu0 %v4033, 96
      %v4768 = vpop.permute.xlu0 %4767
      %4769 = vrot.lane.b32.xlu0 %v4034, 96
      %v4770 = vpop.permute.xlu0 %4769
      %4771 = vrot.lane.b32.xlu0 %v4035, 96
      %v4772 = vpop.permute.xlu0 %4771
      %4773 = vrot.lane.b32.xlu0 %v4036, 96
      %v4774 = vpop.permute.xlu0 %4773
      %4775 = vrot.lane.b32.xlu0 %v4037, 96
      %v4776 = vpop.permute.xlu0 %4775
      %4777 = vrot.lane.b32.xlu0 %v4038, 96
      %v4778 = vpop.permute.xlu0 %4777
      %4779 = vrot.lane.b32.xlu0 %v4039, 96
      %v4780 = vpop.permute.xlu0 %4779
      %4781 = vrot.lane.b32.xlu0 %v4040, 96
      %v4782 = vpop.permute.xlu0 %4781
      %4783 = vrot.lane.b32.xlu0 %v4041, 96
      %v4784 = vpop.permute.xlu0 %4783
      %4785 = vrot.lane.b32.xlu0 %v4042, 96
      %v4786 = vpop.permute.xlu0 %4785
      %4787 = vrot.lane.b32.xlu0 %v4043, 96
      %v4788 = vpop.permute.xlu0 %4787
      %4789 = vrot.lane.b32.xlu0 %v4044, 96
      %v4790 = vpop.permute.xlu0 %4789
      %4791 = vrot.lane.b32.xlu0 %v4045, 96
      %v4792 = vpop.permute.xlu0 %4791
      %4793 = vrot.lane.b32.xlu0 %v4046, 96
      %v4794 = vpop.permute.xlu0 %4793
      %v4795 = vsel %vm2422, %v4724, %v4726
      %v4796 = vsel %vm2422, %v4726, %v4728
      %v4797 = vsel %vm2422, %v4728, %v4730
      %v4798 = vsel %vm2422, %v4730, %v4732
      %v4799 = vsel %vm2422, %v4732, %v4734
      %v4800 = vsel %vm2422, %v4734, %v4736
      %v4801 = vsel %vm2422, %v4736, %v4738
      %v4802 = vsel %vm2422, %v4738, %v4740
      %v4803 = vsel %vm2422, %v4742, %v4744
      %v4804 = vsel %vm2422, %v4744, %v4746
      %v4805 = vsel %vm2422, %v4746, %v4748
      %v4806 = vsel %vm2422, %v4748, %v4750
      %v4807 = vsel %vm2422, %v4750, %v4752
      %v4808 = vsel %vm2422, %v4752, %v4754
      %v4809 = vsel %vm2422, %v4754, %v4756
      %v4810 = vsel %vm2422, %v4756, %v4758
      %v4811 = vsel %vm2422, %v4760, %v4762
      %v4812 = vsel %vm2422, %v4762, %v4764
      %v4813 = vsel %vm2422, %v4764, %v4766
      %v4814 = vsel %vm2422, %v4766, %v4768
      %v4815 = vsel %vm2422, %v4768, %v4770
      %v4816 = vsel %vm2422, %v4770, %v4772
      %v4817 = vsel %vm2422, %v4772, %v4774
      %v4818 = vsel %vm2422, %v4774, %v4776
      %v4819 = vsel %vm2422, %v4778, %v4780
      %v4820 = vsel %vm2422, %v4780, %v4782
      %v4821 = vsel %vm2422, %v4782, %v4784
      %v4822 = vsel %vm2422, %v4784, %v4786
      %v4823 = vsel %vm2422, %v4786, %v4788
      %v4824 = vsel %vm2422, %v4788, %v4790
      %v4825 = vsel %vm2422, %v4790, %v4792
      %v4826 = vsel %vm2422, %v4792, %v4794
      %v4859 = vmul.f32 %v3351, 0.058925565
      %v4860 = vmul.f32 %v3352, 0.058925565
      %v4861 = vmul.f32 %v3353, 0.058925565
      %v4862 = vmul.f32 %v3354, 0.058925565
      %v4863 = vmul.f32 %v3355, 0.058925565
      %v4864 = vmul.f32 %v3356, 0.058925565
      %v4865 = vmul.f32 %v3357, 0.058925565
      %v4866 = vmul.f32 %v3358, 0.058925565
      %v4867 = vmul.f32 %v3359, 0.058925565
      %v4868 = vmul.f32 %v3360, 0.058925565
      %v4869 = vmul.f32 %v3361, 0.058925565
      %v4870 = vmul.f32 %v3362, 0.058925565
      %v4872 = vsel %vm2285, %v4861, 0
      %v4875 = vsel %vm2285, %v4864, 0
      %v4878 = vsel %vm2285, %v4867, 0
      %v4881 = vsel %vm2285, %v4870, 0
      %4883 = vmatprep.subr.mxu0 %v3644
      %4884 = vmatpush1.msra.mxu0 %v3643
      %4885 = vmatprep.subr.mxu0 %v3652
      %4886 = vmatpush1.msra.mxu0 %v3651
      %4887 = vmatprep.subr.mxu0 %v3660
      %4888 = vmatpush1.msra.mxu0 %v3659
      %4889 = vmatprep.subr.mxu0 %v3668
      %4890 = vmatpush1.msra.mxu0 %v3667
      %4891 = vmatprep.subr.mxu0 %v4660
      %4892 = vmatpush1.msra.mxu0 %v4659
      %4893 = vmatprep.subr.mxu0 %v4668
      %4894 = vmatpush1.msra.mxu0 %v4667
      %4895 = vmatprep.subr.mxu0 %v4676
      %4896 = vmatpush1.msra.mxu0 %v4675
      %4897 = vmatprep.subr.mxu0 %v4684
      %4898 = vmatpush1.msra.mxu0 %v4683
      %4899 = vmatprep.subr.mxu0 %v3812
      %4900 = vmatpush1.msra.mxu0 %v3811
      %4901 = vmatprep.subr.mxu0 %v3820
      %4902 = vmatpush1.msra.mxu0 %v3819
      %4903 = vmatprep.subr.mxu0 %v3828
      %4904 = vmatpush1.msra.mxu0 %v3827
      %4905 = vmatprep.subr.mxu0 %v3836
      %4906 = vmatpush1.msra.mxu0 %v3835
      %4907 = vmatprep.subr.mxu0 %v3980
      %4908 = vmatpush1.msra.mxu0 %v3979
      %4909 = vmatprep.subr.mxu0 %v3988
      %4910 = vmatpush1.msra.mxu0 %v3987
      %4911 = vmatprep.subr.mxu0 %v3996
      %4912 = vmatpush1.msra.mxu0 %v3995
      %4913 = vmatprep.subr.mxu0 %v4004
      %4914 = vmatpush1.msra.mxu0 %v4003
      %4915 = vmatprep.subr.mxu0 %v3437
      %4916 = vmatpush1.msra.mxu0 %v3436
      %4917 = vmatprep.subr.mxu0 %v3446
      %4918 = vmatpush1.msra.mxu0 %v3445
      %4919 = vmatprep.subr.mxu0 %v3455
      %4920 = vmatpush1.msra.mxu0 %v3454
      %4921 = vmatprep.subr.mxu0 %v3464
      %4922 = vmatpush1.msra.mxu0 %v3463
      %4923 = vmatprep.subr.mxu0 %v4220
      %4924 = vmatpush1.msra.mxu0 %v4219
      %4925 = vmatprep.subr.mxu0 %v4228
      %4926 = vmatpush1.msra.mxu0 %v4227
      %4927 = vmatprep.subr.mxu0 %v4236
      %4928 = vmatpush1.msra.mxu0 %v4235
      %4929 = vmatprep.subr.mxu0 %v4244
      %4930 = vmatpush1.msra.mxu0 %v4243
      %4931 = vmatprep.subr.mxu0 %v4388
      %4932 = vmatpush1.msra.mxu0 %v4387
      %4933 = vmatprep.subr.mxu0 %v4396
      %4934 = vmatpush1.msra.mxu0 %v4395
      %4935 = vmatprep.subr.mxu0 %v4404
      %4936 = vmatpush1.msra.mxu0 %v4403
      %4937 = vmatprep.subr.mxu0 %v4412
      %4938 = vmatpush1.msra.mxu0 %v4411
      %4939 = vmatprep.subr.mxu0 %v4796
      %4940 = vmatpush1.msra.mxu0 %v4795
      %4941 = vmatprep.subr.mxu0 %v4804
      %4942 = vmatpush1.msra.mxu0 %v4803
      %4943 = vmatprep.subr.mxu0 %v4812
      %4944 = vmatpush1.msra.mxu0 %v4811
      %4945 = vmatprep.subr.mxu0 %v4820
      %4946 = vmatpush1.msra.mxu0 %v4819
      %4947 = vmatprep.mubr.f32.mxu0 %v4860
      %4948 = vmatmul.mubr.f32.gmra.mrb[0].mxu0 %v4859
      %v4949 = vpop.f32.mrb[0].mxu0
      %v4950 = vadd.f32 0.0, %v4949
      %v4951 = vpop.f32.mrb[0].mxu0
      %v4952 = vadd.f32 0.0, %v4951
      %4953 = vmatprep.mubr.f32.mxu0 %v4863
      %4954 = vmatmul.mubr.f32.gmra.mrb[0].mxu0 %v4862
      %v4955 = vpop.f32.mrb[0].mxu0
      %v4956 = vadd.f32 0.0, %v4955
      %v4957 = vpop.f32.mrb[0].mxu0
      %v4958 = vadd.f32 0.0, %v4957
      %4959 = vmatprep.mubr.f32.mxu0 %v4866
      %4960 = vmatmul.mubr.f32.gmra.mrb[0].mxu0 %v4865
      %v4961 = vpop.f32.mrb[0].mxu0
      %v4962 = vadd.f32 0.0, %v4961
      %v4963 = vpop.f32.mrb[0].mxu0
      %v4964 = vadd.f32 0.0, %v4963
      %4965 = vmatprep.mubr.f32.mxu0 %v4869
      %4966 = vmatmul.mubr.f32.gmra.mrb[0].mxu0 %v4868
      %v4967 = vpop.f32.mrb[0].mxu0
      %v4968 = vadd.f32 0.0, %v4967
      %v4969 = vpop.f32.mrb[0].mxu0
      %v4970 = vadd.f32 0.0, %v4969
      %4971 = vdwg.mxu0
      %4972 = vmatprep.subr.mxu0 %v4556
      %4973 = vmatpush1.msra.mxu0 %v4555
      %4974 = vmatprep.subr.mxu0 %v4564
      %4975 = vmatpush1.msra.mxu0 %v4563
      %4976 = vmatprep.subr.mxu0 %v4572
      %4977 = vmatpush1.msra.mxu0 %v4571
      %4978 = vmatprep.subr.mxu0 %v4580
      %4979 = vmatpush1.msra.mxu0 %v4579
      %4980 = vmatprep.subr.mxu0 0.0
      %4981 = vmatpush1.msra.mxu0 0.0
      %4982 = vmatprep.subr.mxu0 0.0
      %4983 = vmatpush1.msra.mxu0 0.0
      %4984 = vmatprep.subr.mxu0 0.0
      %4985 = vmatpush1.msra.mxu0 0.0
      %4986 = vmatprep.subr.mxu0 0.0
      %4987 = vmatpush1.msra.mxu0 0.0
      %4988 = vmatprep.subr.mxu0 0.0
      %4989 = vmatpush1.msra.mxu0 0.0
      %4990 = vmatprep.subr.mxu0 0.0
      %4991 = vmatpush1.msra.mxu0 0.0
      %4992 = vmatprep.subr.mxu0 0.0
      %4993 = vmatpush1.msra.mxu0 0.0
      %4994 = vmatprep.subr.mxu0 0.0
      %4995 = vmatpush1.msra.mxu0 0.0
      %4996 = vmatprep.subr.mxu0 0.0
      %4997 = vmatpush1.msra.mxu0 0.0
      %4998 = vmatprep.subr.mxu0 0.0
      %4999 = vmatpush1.msra.mxu0 0.0
      %5000 = vmatprep.subr.mxu0 0.0
      %5001 = vmatpush1.msra.mxu0 0.0
      %5002 = vmatprep.subr.mxu0 0.0
      %5003 = vmatpush1.msra.mxu0 0.0
      %5004 = vmatprep.subr.mxu0 0.0
      %5005 = vmatpush1.msra.mxu0 0.0
      %5006 = vmatprep.subr.mxu0 0.0
      %5007 = vmatpush1.msra.mxu0 0.0
      %5008 = vmatprep.subr.mxu0 0.0
      %5009 = vmatpush1.msra.mxu0 0.0
      %5010 = vmatprep.subr.mxu0 0.0
      %5011 = vmatpush1.msra.mxu0 0.0
      %5012 = vmatprep.subr.mxu0 0.0
      %5013 = vmatpush1.msra.mxu0 0.0
      %5014 = vmatprep.subr.mxu0 0.0
      %5015 = vmatpush1.msra.mxu0 0.0
      %5016 = vmatprep.subr.mxu0 0.0
      %5017 = vmatpush1.msra.mxu0 0.0
      %5018 = vmatprep.subr.mxu0 0.0
      %5019 = vmatpush1.msra.mxu0 0.0
      %5020 = vmatprep.subr.mxu0 0.0
      %5021 = vmatpush1.msra.mxu0 0.0
      %5022 = vmatprep.subr.mxu0 0.0
      %5023 = vmatpush1.msra.mxu0 0.0
      %5024 = vmatprep.subr.mxu0 0.0
      %5025 = vmatpush1.msra.mxu0 0.0
      %5026 = vmatprep.subr.mxu0 0.0
      %5027 = vmatpush1.msra.mxu0 0.0
      %5028 = vmatprep.subr.mxu0 0.0
      %5029 = vmatpush1.msra.mxu0 0.0
      %5030 = vmatprep.subr.mxu0 0.0
      %5031 = vmatpush1.msra.mxu0 0.0
      %5032 = vmatprep.subr.mxu0 0.0
      %5033 = vmatpush1.msra.mxu0 0.0
      %5034 = vmatprep.subr.mxu0 0.0
      %5035 = vmatpush1.msra.mxu0 0.0
      %5036 = vmatprep.mubr.f32.mxu0 0.0
      %5037 = vmatmul.mubr.f32.gmra.mrb[0].mxu0 %v4872
      %v5038 = vpop.f32.mrb[0].mxu0
      %v5039 = vadd.f32 %v4950, %v5038
      %v5040 = vpop.f32.mrb[0].mxu0
      %v5041 = vadd.f32 %v4952, %v5040
      %5042 = vmatprep.mubr.f32.mxu0 0.0
      %5043 = vmatmul.mubr.f32.gmra.mrb[0].mxu0 %v4875
      %v5044 = vpop.f32.mrb[0].mxu0
      %v5045 = vadd.f32 %v4956, %v5044
      %v5046 = vpop.f32.mrb[0].mxu0
      %v5047 = vadd.f32 %v4958, %v5046
      %5048 = vmatprep.mubr.f32.mxu0 0.0
      %5049 = vmatmul.mubr.f32.gmra.mrb[0].mxu0 %v4878
      %v5050 = vpop.f32.mrb[0].mxu0
      %v5051 = vadd.f32 %v4962, %v5050
      %v5052 = vpop.f32.mrb[0].mxu0
      %v5053 = vadd.f32 %v4964, %v5052
      %5054 = vmatprep.mubr.f32.mxu0 0.0
      %5055 = vmatmul.mubr.f32.gmra.mrb[0].mxu0 %v4881
      %v5056 = vpop.f32.mrb[0].mxu0
      %v5057 = vadd.f32 %v4968, %v5056
      %v5058 = vpop.f32.mrb[0].mxu0
      %v5059 = vadd.f32 %v4970, %v5058
      %5060 = vdwg.mxu0
      %5061 = vmatprep.subr.mxu0 %v3646
      %5062 = vmatpush1.msra.mxu0 %v3645
      %5063 = vmatprep.subr.mxu0 %v3654
      %5064 = vmatpush1.msra.mxu0 %v3653
      %5065 = vmatprep.subr.mxu0 %v3662
      %5066 = vmatpush1.msra.mxu0 %v3661
      %5067 = vmatprep.subr.mxu0 %v3670
      %5068 = vmatpush1.msra.mxu0 %v3669
      %5069 = vmatprep.subr.mxu0 %v4662
      %5070 = vmatpush1.msra.mxu0 %v4661
      %5071 = vmatprep.subr.mxu0 %v4670
      %5072 = vmatpush1.msra.mxu0 %v4669
      %5073 = vmatprep.subr.mxu0 %v4678
      %5074 = vmatpush1.msra.mxu0 %v4677
      %5075 = vmatprep.subr.mxu0 %v4686
      %5076 = vmatpush1.msra.mxu0 %v4685
      %5077 = vmatprep.subr.mxu0 %v3814
      %5078 = vmatpush1.msra.mxu0 %v3813
      %5079 = vmatprep.subr.mxu0 %v3822
      %5080 = vmatpush1.msra.mxu0 %v3821
      %5081 = vmatprep.subr.mxu0 %v3830
      %5082 = vmatpush1.msra.mxu0 %v3829
      %5083 = vmatprep.subr.mxu0 %v3838
      %5084 = vmatpush1.msra.mxu0 %v3837
      %5085 = vmatprep.subr.mxu0 %v3982
      %5086 = vmatpush1.msra.mxu0 %v3981
      %5087 = vmatprep.subr.mxu0 %v3990
      %5088 = vmatpush1.msra.mxu0 %v3989
      %5089 = vmatprep.subr.mxu0 %v3998
      %5090 = vmatpush1.msra.mxu0 %v3997
      %5091 = vmatprep.subr.mxu0 %v4006
      %5092 = vmatpush1.msra.mxu0 %v4005
      %5093 = vmatprep.subr.mxu0 %v3439
      %5094 = vmatpush1.msra.mxu0 %v3438
      %5095 = vmatprep.subr.mxu0 %v3448
      %5096 = vmatpush1.msra.mxu0 %v3447
      %5097 = vmatprep.subr.mxu0 %v3457
      %5098 = vmatpush1.msra.mxu0 %v3456
      %5099 = vmatprep.subr.mxu0 %v3466
      %5100 = vmatpush1.msra.mxu0 %v3465
      %5101 = vmatprep.subr.mxu0 %v4222
      %5102 = vmatpush1.msra.mxu0 %v4221
      %5103 = vmatprep.subr.mxu0 %v4230
      %5104 = vmatpush1.msra.mxu0 %v4229
      %5105 = vmatprep.subr.mxu0 %v4238
      %5106 = vmatpush1.msra.mxu0 %v4237
      %5107 = vmatprep.subr.mxu0 %v4246
      %5108 = vmatpush1.msra.mxu0 %v4245
      %5109 = vmatprep.subr.mxu0 %v4390
      %5110 = vmatpush1.msra.mxu0 %v4389
      %5111 = vmatprep.subr.mxu0 %v4398
      %5112 = vmatpush1.msra.mxu0 %v4397
      %5113 = vmatprep.subr.mxu0 %v4406
      %5114 = vmatpush1.msra.mxu0 %v4405
      %5115 = vmatprep.subr.mxu0 %v4414
      %5116 = vmatpush1.msra.mxu0 %v4413
      %5117 = vmatprep.subr.mxu0 %v4798
      %5118 = vmatpush1.msra.mxu0 %v4797
      %5119 = vmatprep.subr.mxu0 %v4806
      %5120 = vmatpush1.msra.mxu0 %v4805
      %5121 = vmatprep.subr.mxu0 %v4814
      %5122 = vmatpush1.msra.mxu0 %v4813
      %5123 = vmatprep.subr.mxu0 %v4822
      %5124 = vmatpush1.msra.mxu0 %v4821
      %5125 = vmatprep.mubr.f32.mxu0 %v4860
      %5126 = vmatmul.mubr.f32.gmra.mrb[0].mxu0 %v4859
      %v5127 = vpop.f32.mrb[0].mxu0
      %v5128 = vadd.f32 0.0, %v5127
      %v5129 = vpop.f32.mrb[0].mxu0
      %v5130 = vadd.f32 0.0, %v5129
      %5131 = vmatprep.mubr.f32.mxu0 %v4863
      %5132 = vmatmul.mubr.f32.gmra.mrb[0].mxu0 %v4862
      %v5133 = vpop.f32.mrb[0].mxu0
      %v5134 = vadd.f32 0.0, %v5133
      %v5135 = vpop.f32.mrb[0].mxu0
      %v5136 = vadd.f32 0.0, %v5135
      %5137 = vmatprep.mubr.f32.mxu0 %v4866
      %5138 = vmatmul.mubr.f32.gmra.mrb[0].mxu0 %v4865
      %v5139 = vpop.f32.mrb[0].mxu0
      %v5140 = vadd.f32 0.0, %v5139
      %v5141 = vpop.f32.mrb[0].mxu0
      %v5142 = vadd.f32 0.0, %v5141
      %5143 = vmatprep.mubr.f32.mxu0 %v4869
      %5144 = vmatmul.mubr.f32.gmra.mrb[0].mxu0 %v4868
      %v5145 = vpop.f32.mrb[0].mxu0
      %v5146 = vadd.f32 0.0, %v5145
      %v5147 = vpop.f32.mrb[0].mxu0
      %v5148 = vadd.f32 0.0, %v5147
      %5149 = vdwg.mxu0
      %5150 = vmatprep.subr.mxu0 %v4558
      %5151 = vmatpush1.msra.mxu0 %v4557
      %5152 = vmatprep.subr.mxu0 %v4566
      %5153 = vmatpush1.msra.mxu0 %v4565
      %5154 = vmatprep.subr.mxu0 %v4574
      %5155 = vmatpush1.msra.mxu0 %v4573
      %5156 = vmatprep.subr.mxu0 %v4582
      %5157 = vmatpush1.msra.mxu0 %v4581
      %5158 = vmatprep.subr.mxu0 0.0
      %5159 = vmatpush1.msra.mxu0 0.0
      %5160 = vmatprep.subr.mxu0 0.0
      %5161 = vmatpush1.msra.mxu0 0.0
      %5162 = vmatprep.subr.mxu0 0.0
      %5163 = vmatpush1.msra.mxu0 0.0
      %5164 = vmatprep.subr.mxu0 0.0
      %5165 = vmatpush1.msra.mxu0 0.0
      %5166 = vmatprep.subr.mxu0 0.0
      %5167 = vmatpush1.msra.mxu0 0.0
      %5168 = vmatprep.subr.mxu0 0.0
      %5169 = vmatpush1.msra.mxu0 0.0
      %5170 = vmatprep.subr.mxu0 0.0
      %5171 = vmatpush1.msra.mxu0 0.0
      %5172 = vmatprep.subr.mxu0 0.0
      %5173 = vmatpush1.msra.mxu0 0.0
      %5174 = vmatprep.subr.mxu0 0.0
      %5175 = vmatpush1.msra.mxu0 0.0
      %5176 = vmatprep.subr.mxu0 0.0
      %5177 = vmatpush1.msra.mxu0 0.0
      %5178 = vmatprep.subr.mxu0 0.0
      %5179 = vmatpush1.msra.mxu0 0.0
      %5180 = vmatprep.subr.mxu0 0.0
      %5181 = vmatpush1.msra.mxu0 0.0
      %5182 = vmatprep.subr.mxu0 0.0
      %5183 = vmatpush1.msra.mxu0 0.0
      %5184 = vmatprep.subr.mxu0 0.0
      %5185 = vmatpush1.msra.mxu0 0.0
      %5186 = vmatprep.subr.mxu0 0.0
      %5187 = vmatpush1.msra.mxu0 0.0
      %5188 = vmatprep.subr.mxu0 0.0
      %5189 = vmatpush1.msra.mxu0 0.0
      %5190 = vmatprep.subr.mxu0 0.0
      %5191 = vmatpush1.msra.mxu0 0.0
      %5192 = vmatprep.subr.mxu0 0.0
      %5193 = vmatpush1.msra.mxu0 0.0
      %5194 = vmatprep.subr.mxu0 0.0
      %5195 = vmatpush1.msra.mxu0 0.0
      %5196 = vmatprep.subr.mxu0 0.0
      %5197 = vmatpush1.msra.mxu0 0.0
      %5198 = vmatprep.subr.mxu0 0.0
      %5199 = vmatpush1.msra.mxu0 0.0
      %5200 = vmatprep.subr.mxu0 0.0
      %5201 = vmatpush1.msra.mxu0 0.0
      %5202 = vmatprep.subr.mxu0 0.0
      %5203 = vmatpush1.msra.mxu0 0.0
      %5204 = vmatprep.subr.mxu0 0.0
      %5205 = vmatpush1.msra.mxu0 0.0
      %5206 = vmatprep.subr.mxu0 0.0
      %5207 = vmatpush1.msra.mxu0 0.0
      %5208 = vmatprep.subr.mxu0 0.0
      %5209 = vmatpush1.msra.mxu0 0.0
      %5210 = vmatprep.subr.mxu0 0.0
      %5211 = vmatpush1.msra.mxu0 0.0
      %5212 = vmatprep.subr.mxu0 0.0
      %5213 = vmatpush1.msra.mxu0 0.0
      %5214 = vmatprep.mubr.f32.mxu0 0.0
      %5215 = vmatmul.mubr.f32.gmra.mrb[0].mxu0 %v4872
      %v5216 = vpop.f32.mrb[0].mxu0
      %v5217 = vadd.f32 %v5128, %v5216
      %v5218 = vpop.f32.mrb[0].mxu0
      %v5219 = vadd.f32 %v5130, %v5218
      %5220 = vmatprep.mubr.f32.mxu0 0.0
      %5221 = vmatmul.mubr.f32.gmra.mrb[0].mxu0 %v4875
      %v5222 = vpop.f32.mrb[0].mxu0
      %v5223 = vadd.f32 %v5134, %v5222
      %v5224 = vpop.f32.mrb[0].mxu0
      %v5225 = vadd.f32 %v5136, %v5224
      %5226 = vmatprep.mubr.f32.mxu0 0.0
      %5227 = vmatmul.mubr.f32.gmra.mrb[0].mxu0 %v4878
      %v5228 = vpop.f32.mrb[0].mxu0
      %v5229 = vadd.f32 %v5140, %v5228
      %v5230 = vpop.f32.mrb[0].mxu0
      %v5231 = vadd.f32 %v5142, %v5230
      %5232 = vmatprep.mubr.f32.mxu0 0.0
      %5233 = vmatmul.mubr.f32.gmra.mrb[0].mxu0 %v4881
      %v5234 = vpop.f32.mrb[0].mxu0
      %v5235 = vadd.f32 %v5146, %v5234
      %v5236 = vpop.f32.mrb[0].mxu0
      %v5237 = vadd.f32 %v5148, %v5236
      %5238 = vdwg.mxu0
      %5239 = vmatprep.subr.mxu0 %v3648
      %5240 = vmatpush1.msra.mxu0 %v3647
      %5241 = vmatprep.subr.mxu0 %v3656
      %5242 = vmatpush1.msra.mxu0 %v3655
      %5243 = vmatprep.subr.mxu0 %v3664
      %5244 = vmatpush1.msra.mxu0 %v3663
      %5245 = vmatprep.subr.mxu0 %v3672
      %5246 = vmatpush1.msra.mxu0 %v3671
      %5247 = vmatprep.subr.mxu0 %v4664
      %5248 = vmatpush1.msra.mxu0 %v4663
      %5249 = vmatprep.subr.mxu0 %v4672
      %5250 = vmatpush1.msra.mxu0 %v4671
      %5251 = vmatprep.subr.mxu0 %v4680
      %5252 = vmatpush1.msra.mxu0 %v4679
      %5253 = vmatprep.subr.mxu0 %v4688
      %5254 = vmatpush1.msra.mxu0 %v4687
      %5255 = vmatprep.subr.mxu0 %v3816
      %5256 = vmatpush1.msra.mxu0 %v3815
      %5257 = vmatprep.subr.mxu0 %v3824
      %5258 = vmatpush1.msra.mxu0 %v3823
      %5259 = vmatprep.subr.mxu0 %v3832
      %5260 = vmatpush1.msra.mxu0 %v3831
      %5261 = vmatprep.subr.mxu0 %v3840
      %5262 = vmatpush1.msra.mxu0 %v3839
      %5263 = vmatprep.subr.mxu0 %v3984
      %5264 = vmatpush1.msra.mxu0 %v3983
      %5265 = vmatprep.subr.mxu0 %v3992
      %5266 = vmatpush1.msra.mxu0 %v3991
      %5267 = vmatprep.subr.mxu0 %v4000
      %5268 = vmatpush1.msra.mxu0 %v3999
      %5269 = vmatprep.subr.mxu0 %v4008
      %5270 = vmatpush1.msra.mxu0 %v4007
      %5271 = vmatprep.subr.mxu0 %v3441
      %5272 = vmatpush1.msra.mxu0 %v3440
      %5273 = vmatprep.subr.mxu0 %v3450
      %5274 = vmatpush1.msra.mxu0 %v3449
      %5275 = vmatprep.subr.mxu0 %v3459
      %5276 = vmatpush1.msra.mxu0 %v3458
      %5277 = vmatprep.subr.mxu0 %v3468
      %5278 = vmatpush1.msra.mxu0 %v3467
      %5279 = vmatprep.subr.mxu0 %v4224
      %5280 = vmatpush1.msra.mxu0 %v4223
      %5281 = vmatprep.subr.mxu0 %v4232
      %5282 = vmatpush1.msra.mxu0 %v4231
      %5283 = vmatprep.subr.mxu0 %v4240
      %5284 = vmatpush1.msra.mxu0 %v4239
      %5285 = vmatprep.subr.mxu0 %v4248
      %5286 = vmatpush1.msra.mxu0 %v4247
      %5287 = vmatprep.subr.mxu0 %v4392
      %5288 = vmatpush1.msra.mxu0 %v4391
      %5289 = vmatprep.subr.mxu0 %v4400
      %5290 = vmatpush1.msra.mxu0 %v4399
      %5291 = vmatprep.subr.mxu0 %v4408
      %5292 = vmatpush1.msra.mxu0 %v4407
      %5293 = vmatprep.subr.mxu0 %v4416
      %5294 = vmatpush1.msra.mxu0 %v4415
      %5295 = vmatprep.subr.mxu0 %v4800
      %5296 = vmatpush1.msra.mxu0 %v4799
      %5297 = vmatprep.subr.mxu0 %v4808
      %5298 = vmatpush1.msra.mxu0 %v4807
      %5299 = vmatprep.subr.mxu0 %v4816
      %5300 = vmatpush1.msra.mxu0 %v4815
      %5301 = vmatprep.subr.mxu0 %v4824
      %5302 = vmatpush1.msra.mxu0 %v4823
      %5303 = vmatprep.mubr.f32.mxu0 %v4860
      %5304 = vmatmul.mubr.f32.gmra.mrb[0].mxu0 %v4859
      %v5305 = vpop.f32.mrb[0].mxu0
      %v5306 = vadd.f32 0.0, %v5305
      %v5307 = vpop.f32.mrb[0].mxu0
      %v5308 = vadd.f32 0.0, %v5307
      %5309 = vmatprep.mubr.f32.mxu0 %v4863
      %5310 = vmatmul.mubr.f32.gmra.mrb[0].mxu0 %v4862
      %v5311 = vpop.f32.mrb[0].mxu0
      %v5312 = vadd.f32 0.0, %v5311
      %v5313 = vpop.f32.mrb[0].mxu0
      %v5314 = vadd.f32 0.0, %v5313
      %5315 = vmatprep.mubr.f32.mxu0 %v4866
      %5316 = vmatmul.mubr.f32.gmra.mrb[0].mxu0 %v4865
      %v5317 = vpop.f32.mrb[0].mxu0
      %v5318 = vadd.f32 0.0, %v5317
      %v5319 = vpop.f32.mrb[0].mxu0
      %v5320 = vadd.f32 0.0, %v5319
      %5321 = vmatprep.mubr.f32.mxu0 %v4869
      %5322 = vmatmul.mubr.f32.gmra.mrb[0].mxu0 %v4868
      %v5323 = vpop.f32.mrb[0].mxu0
      %v5324 = vadd.f32 0.0, %v5323
      %v5325 = vpop.f32.mrb[0].mxu0
      %v5326 = vadd.f32 0.0, %v5325
      %5327 = vdwg.mxu0
      %5328 = vmatprep.subr.mxu0 %v4560
      %5329 = vmatpush1.msra.mxu0 %v4559
      %5330 = vmatprep.subr.mxu0 %v4568
      %5331 = vmatpush1.msra.mxu0 %v4567
      %5332 = vmatprep.subr.mxu0 %v4576
      %5333 = vmatpush1.msra.mxu0 %v4575
      %5334 = vmatprep.subr.mxu0 %v4584
      %5335 = vmatpush1.msra.mxu0 %v4583
      %5336 = vmatprep.subr.mxu0 0.0
      %5337 = vmatpush1.msra.mxu0 0.0
      %5338 = vmatprep.subr.mxu0 0.0
      %5339 = vmatpush1.msra.mxu0 0.0
      %5340 = vmatprep.subr.mxu0 0.0
      %5341 = vmatpush1.msra.mxu0 0.0
      %5342 = vmatprep.subr.mxu0 0.0
      %5343 = vmatpush1.msra.mxu0 0.0
      %5344 = vmatprep.subr.mxu0 0.0
      %5345 = vmatpush1.msra.mxu0 0.0
      %5346 = vmatprep.subr.mxu0 0.0
      %5347 = vmatpush1.msra.mxu0 0.0
      %5348 = vmatprep.subr.mxu0 0.0
      %5349 = vmatpush1.msra.mxu0 0.0
      %5350 = vmatprep.subr.mxu0 0.0
      %5351 = vmatpush1.msra.mxu0 0.0
      %5352 = vmatprep.subr.mxu0 0.0
      %5353 = vmatpush1.msra.mxu0 0.0
      %5354 = vmatprep.subr.mxu0 0.0
      %5355 = vmatpush1.msra.mxu0 0.0
      %5356 = vmatprep.subr.mxu0 0.0
      %5357 = vmatpush1.msra.mxu0 0.0
      %5358 = vmatprep.subr.mxu0 0.0
      %5359 = vmatpush1.msra.mxu0 0.0
      %5360 = vmatprep.subr.mxu0 0.0
      %5361 = vmatpush1.msra.mxu0 0.0
      %5362 = vmatprep.subr.mxu0 0.0
      %5363 = vmatpush1.msra.mxu0 0.0
      %5364 = vmatprep.subr.mxu0 0.0
      %5365 = vmatpush1.msra.mxu0 0.0
      %5366 = vmatprep.subr.mxu0 0.0
      %5367 = vmatpush1.msra.mxu0 0.0
      %5368 = vmatprep.subr.mxu0 0.0
      %5369 = vmatpush1.msra.mxu0 0.0
      %5370 = vmatprep.subr.mxu0 0.0
      %5371 = vmatpush1.msra.mxu0 0.0
      %5372 = vmatprep.subr.mxu0 0.0
      %5373 = vmatpush1.msra.mxu0 0.0
      %5374 = vmatprep.subr.mxu0 0.0
      %5375 = vmatpush1.msra.mxu0 0.0
      %5376 = vmatprep.subr.mxu0 0.0
      %5377 = vmatpush1.msra.mxu0 0.0
      %5378 = vmatprep.subr.mxu0 0.0
      %5379 = vmatpush1.msra.mxu0 0.0
      %5380 = vmatprep.subr.mxu0 0.0
      %5381 = vmatpush1.msra.mxu0 0.0
      %5382 = vmatprep.subr.mxu0 0.0
      %5383 = vmatpush1.msra.mxu0 0.0
      %5384 = vmatprep.subr.mxu0 0.0
      %5385 = vmatpush1.msra.mxu0 0.0
      %5386 = vmatprep.subr.mxu0 0.0
      %5387 = vmatpush1.msra.mxu0 0.0
      %5388 = vmatprep.subr.mxu0 0.0
      %5389 = vmatpush1.msra.mxu0 0.0
      %5390 = vmatprep.subr.mxu0 0.0
      %5391 = vmatpush1.msra.mxu0 0.0
      %5392 = vmatprep.mubr.f32.mxu0 0.0
      %5393 = vmatmul.mubr.f32.gmra.mrb[0].mxu0 %v4872
      %v5394 = vpop.f32.mrb[0].mxu0
      %v5395 = vadd.f32 %v5306, %v5394
      %v5396 = vpop.f32.mrb[0].mxu0
      %v5397 = vadd.f32 %v5308, %v5396
      %5398 = vmatprep.mubr.f32.mxu0 0.0
      %5399 = vmatmul.mubr.f32.gmra.mrb[0].mxu0 %v4875
      %v5400 = vpop.f32.mrb[0].mxu0
      %v5401 = vadd.f32 %v5312, %v5400
      %v5402 = vpop.f32.mrb[0].mxu0
      %v5403 = vadd.f32 %v5314, %v5402
      %5404 = vmatprep.mubr.f32.mxu0 0.0
      %5405 = vmatmul.mubr.f32.gmra.mrb[0].mxu0 %v4878
      %v5406 = vpop.f32.mrb[0].mxu0
      %v5407 = vadd.f32 %v5318, %v5406
      %v5408 = vpop.f32.mrb[0].mxu0
      %v5409 = vadd.f32 %v5320, %v5408
      %5410 = vmatprep.mubr.f32.mxu0 0.0
      %5411 = vmatmul.mubr.f32.gmra.mrb[0].mxu0 %v4881
      %v5412 = vpop.f32.mrb[0].mxu0
      %v5413 = vadd.f32 %v5324, %v5412
      %v5414 = vpop.f32.mrb[0].mxu0
      %v5415 = vadd.f32 %v5326, %v5414
      %5416 = vdwg.mxu0
      %5417 = vmatprep.subr.mxu0 %v3650
      %5418 = vmatpush1.msra.mxu0 %v3649
      %5419 = vmatprep.subr.mxu0 %v3658
      %5420 = vmatpush1.msra.mxu0 %v3657
      %5421 = vmatprep.subr.mxu0 %v3666
      %5422 = vmatpush1.msra.mxu0 %v3665
      %5423 = vmatprep.subr.mxu0 %v3674
      %5424 = vmatpush1.msra.mxu0 %v3673
      %5425 = vmatprep.subr.mxu0 %v4666
      %5426 = vmatpush1.msra.mxu0 %v4665
      %5427 = vmatprep.subr.mxu0 %v4674
      %5428 = vmatpush1.msra.mxu0 %v4673
      %5429 = vmatprep.subr.mxu0 %v4682
      %5430 = vmatpush1.msra.mxu0 %v4681
      %5431 = vmatprep.subr.mxu0 %v4690
      %5432 = vmatpush1.msra.mxu0 %v4689
      %5433 = vmatprep.subr.mxu0 %v3818
      %5434 = vmatpush1.msra.mxu0 %v3817
      %5435 = vmatprep.subr.mxu0 %v3826
      %5436 = vmatpush1.msra.mxu0 %v3825
      %5437 = vmatprep.subr.mxu0 %v3834
      %5438 = vmatpush1.msra.mxu0 %v3833
      %5439 = vmatprep.subr.mxu0 %v3842
      %5440 = vmatpush1.msra.mxu0 %v3841
      %5441 = vmatprep.subr.mxu0 %v3986
      %5442 = vmatpush1.msra.mxu0 %v3985
      %5443 = vmatprep.subr.mxu0 %v3994
      %5444 = vmatpush1.msra.mxu0 %v3993
      %5445 = vmatprep.subr.mxu0 %v4002
      %5446 = vmatpush1.msra.mxu0 %v4001
      %5447 = vmatprep.subr.mxu0 %v4010
      %5448 = vmatpush1.msra.mxu0 %v4009
      %5449 = vmatprep.subr.mxu0 %v3443
      %5450 = vmatpush1.msra.mxu0 %v3442
      %5451 = vmatprep.subr.mxu0 %v3452
      %5452 = vmatpush1.msra.mxu0 %v3451
      %5453 = vmatprep.subr.mxu0 %v3461
      %5454 = vmatpush1.msra.mxu0 %v3460
      %5455 = vmatprep.subr.mxu0 %v3470
      %5456 = vmatpush1.msra.mxu0 %v3469
      %5457 = vmatprep.subr.mxu0 %v4226
      %5458 = vmatpush1.msra.mxu0 %v4225
      %5459 = vmatprep.subr.mxu0 %v4234
      %5460 = vmatpush1.msra.mxu0 %v4233
      %5461 = vmatprep.subr.mxu0 %v4242
      %5462 = vmatpush1.msra.mxu0 %v4241
      %5463 = vmatprep.subr.mxu0 %v4250
      %5464 = vmatpush1.msra.mxu0 %v4249
      %5465 = vmatprep.subr.mxu0 %v4394
      %5466 = vmatpush1.msra.mxu0 %v4393
      %5467 = vmatprep.subr.mxu0 %v4402
      %5468 = vmatpush1.msra.mxu0 %v4401
      %5469 = vmatprep.subr.mxu0 %v4410
      %5470 = vmatpush1.msra.mxu0 %v4409
      %5471 = vmatprep.subr.mxu0 %v4418
      %5472 = vmatpush1.msra.mxu0 %v4417
      %5473 = vmatprep.subr.mxu0 %v4802
      %5474 = vmatpush1.msra.mxu0 %v4801
      %5475 = vmatprep.subr.mxu0 %v4810
      %5476 = vmatpush1.msra.mxu0 %v4809
      %5477 = vmatprep.subr.mxu0 %v4818
      %5478 = vmatpush1.msra.mxu0 %v4817
      %5479 = vmatprep.subr.mxu0 %v4826
      %5480 = vmatpush1.msra.mxu0 %v4825
      %5481 = vmatprep.mubr.f32.mxu0 %v4860
      %5482 = vmatmul.mubr.f32.gmra.mrb[0].mxu0 %v4859
      %v5483 = vpop.f32.mrb[0].mxu0
      %v5484 = vadd.f32 0.0, %v5483
      %v5485 = vpop.f32.mrb[0].mxu0
      %v5486 = vadd.f32 0.0, %v5485
      %5487 = vmatprep.mubr.f32.mxu0 %v4863
      %5488 = vmatmul.mubr.f32.gmra.mrb[0].mxu0 %v4862
      %v5489 = vpop.f32.mrb[0].mxu0
      %v5490 = vadd.f32 0.0, %v5489
      %v5491 = vpop.f32.mrb[0].mxu0
      %v5492 = vadd.f32 0.0, %v5491
      %5493 = vmatprep.mubr.f32.mxu0 %v4866
      %5494 = vmatmul.mubr.f32.gmra.mrb[0].mxu0 %v4865
      %v5495 = vpop.f32.mrb[0].mxu0
      %v5496 = vadd.f32 0.0, %v5495
      %v5497 = vpop.f32.mrb[0].mxu0
      %v5498 = vadd.f32 0.0, %v5497
      %5499 = vmatprep.mubr.f32.mxu0 %v4869
      %5500 = vmatmul.mubr.f32.gmra.mrb[0].mxu0 %v4868
      %v5501 = vpop.f32.mrb[0].mxu0
      %v5502 = vadd.f32 0.0, %v5501
      %v5503 = vpop.f32.mrb[0].mxu0
      %v5504 = vadd.f32 0.0, %v5503
      %5505 = vdwg.mxu0
      %5506 = vmatprep.subr.mxu0 %v4562
      %5507 = vmatpush1.msra.mxu0 %v4561
      %5508 = vmatprep.subr.mxu0 %v4570
      %5509 = vmatpush1.msra.mxu0 %v4569
      %5510 = vmatprep.subr.mxu0 %v4578
      %5511 = vmatpush1.msra.mxu0 %v4577
      %5512 = vmatprep.subr.mxu0 %v4586
      %5513 = vmatpush1.msra.mxu0 %v4585
      %5514 = vmatprep.subr.mxu0 0.0
      %5515 = vmatpush1.msra.mxu0 0.0
      %5516 = vmatprep.subr.mxu0 0.0
      %5517 = vmatpush1.msra.mxu0 0.0
      %5518 = vmatprep.subr.mxu0 0.0
      %5519 = vmatpush1.msra.mxu0 0.0
      %5520 = vmatprep.subr.mxu0 0.0
      %5521 = vmatpush1.msra.mxu0 0.0
      %5522 = vmatprep.subr.mxu0 0.0
      %5523 = vmatpush1.msra.mxu0 0.0
      %5524 = vmatprep.subr.mxu0 0.0
      %5525 = vmatpush1.msra.mxu0 0.0
      %5526 = vmatprep.subr.mxu0 0.0
      %5527 = vmatpush1.msra.mxu0 0.0
      %5528 = vmatprep.subr.mxu0 0.0
      %5529 = vmatpush1.msra.mxu0 0.0
      %5530 = vmatprep.subr.mxu0 0.0
      %5531 = vmatpush1.msra.mxu0 0.0
      %5532 = vmatprep.subr.mxu0 0.0
      %5533 = vmatpush1.msra.mxu0 0.0
      %5534 = vmatprep.subr.mxu0 0.0
      %5535 = vmatpush1.msra.mxu0 0.0
      %5536 = vmatprep.subr.mxu0 0.0
      %5537 = vmatpush1.msra.mxu0 0.0
      %5538 = vmatprep.subr.mxu0 0.0
      %5539 = vmatpush1.msra.mxu0 0.0
      %5540 = vmatprep.subr.mxu0 0.0
      %5541 = vmatpush1.msra.mxu0 0.0
      %5542 = vmatprep.subr.mxu0 0.0
      %5543 = vmatpush1.msra.mxu0 0.0
      %5544 = vmatprep.subr.mxu0 0.0
      %5545 = vmatpush1.msra.mxu0 0.0
      %5546 = vmatprep.subr.mxu0 0.0
      %5547 = vmatpush1.msra.mxu0 0.0
      %5548 = vmatprep.subr.mxu0 0.0
      %5549 = vmatpush1.msra.mxu0 0.0
      %5550 = vmatprep.subr.mxu0 0.0
      %5551 = vmatpush1.msra.mxu0 0.0
      %5552 = vmatprep.subr.mxu0 0.0
      %5553 = vmatpush1.msra.mxu0 0.0
      %5554 = vmatprep.subr.mxu0 0.0
      %5555 = vmatpush1.msra.mxu0 0.0
      %5556 = vmatprep.subr.mxu0 0.0
      %5557 = vmatpush1.msra.mxu0 0.0
      %5558 = vmatprep.subr.mxu0 0.0
      %5559 = vmatpush1.msra.mxu0 0.0
      %5560 = vmatprep.subr.mxu0 0.0
      %5561 = vmatpush1.msra.mxu0 0.0
      %5562 = vmatprep.subr.mxu0 0.0
      %5563 = vmatpush1.msra.mxu0 0.0
      %5564 = vmatprep.subr.mxu0 0.0
      %5565 = vmatpush1.msra.mxu0 0.0
      %5566 = vmatprep.subr.mxu0 0.0
      %5567 = vmatpush1.msra.mxu0 0.0
      %5568 = vmatprep.subr.mxu0 0.0
      %5569 = vmatpush1.msra.mxu0 0.0
      %5570 = vmatprep.mubr.f32.mxu0 0.0
      %5571 = vmatmul.mubr.f32.gmra.mrb[0].mxu0 %v4872
      %v5572 = vpop.f32.mrb[0].mxu0
      %v5573 = vadd.f32 %v5484, %v5572
      %v5574 = vpop.f32.mrb[0].mxu0
      %v5575 = vadd.f32 %v5486, %v5574
      %5576 = vmatprep.mubr.f32.mxu0 0.0
      %5577 = vmatmul.mubr.f32.gmra.mrb[0].mxu0 %v4875
      %v5578 = vpop.f32.mrb[0].mxu0
      %v5579 = vadd.f32 %v5490, %v5578
      %v5580 = vpop.f32.mrb[0].mxu0
      %v5581 = vadd.f32 %v5492, %v5580
      %5582 = vmatprep.mubr.f32.mxu0 0.0
      %5583 = vmatmul.mubr.f32.gmra.mrb[0].mxu0 %v4878
      %v5584 = vpop.f32.mrb[0].mxu0
      %v5585 = vadd.f32 %v5496, %v5584
      %v5586 = vpop.f32.mrb[0].mxu0
      %v5587 = vadd.f32 %v5498, %v5586
      %5588 = vmatprep.mubr.f32.mxu0 0.0
      %5589 = vmatmul.mubr.f32.gmra.mrb[0].mxu0 %v4881
      %v5590 = vpop.f32.mrb[0].mxu0
      %v5591 = vadd.f32 %v5502, %v5590
      %v5592 = vpop.f32.mrb[0].mxu0
      %v5593 = vadd.f32 %v5504, %v5592
      %5594 = vdwg.mxu0
      %vm5595 = vcmp.ge.f32.partialorder %v5039, 0.0
      %vm5596 = vcmp.ge.f32.partialorder %v5041, 0.0
      %vm5597 = vcmp.ge.f32.partialorder %v5217, 0.0
      %vm5598 = vcmp.ge.f32.partialorder %v5219, 0.0
      %vm5599 = vcmp.ge.f32.partialorder %v5395, 0.0
      %vm5600 = vcmp.ge.f32.partialorder %v5397, 0.0
      %vm5601 = vcmp.ge.f32.partialorder %v5573, 0.0
      %vm5602 = vcmp.ge.f32.partialorder %v5575, 0.0
      %vm5603 = vcmp.ge.f32.partialorder %v5045, 0.0
      %vm5604 = vcmp.ge.f32.partialorder %v5047, 0.0
      %vm5605 = vcmp.ge.f32.partialorder %v5223, 0.0
      %vm5606 = vcmp.ge.f32.partialorder %v5225, 0.0
      %vm5607 = vcmp.ge.f32.partialorder %v5401, 0.0
      %vm5608 = vcmp.ge.f32.partialorder %v5403, 0.0
      %vm5609 = vcmp.ge.f32.partialorder %v5579, 0.0
      %vm5610 = vcmp.ge.f32.partialorder %v5581, 0.0
      %vm5611 = vcmp.ge.f32.partialorder %v5051, 0.0
      %vm5612 = vcmp.ge.f32.partialorder %v5053, 0.0
      %vm5613 = vcmp.ge.f32.partialorder %v5229, 0.0
      %vm5614 = vcmp.ge.f32.partialorder %v5231, 0.0
      %vm5615 = vcmp.ge.f32.partialorder %v5407, 0.0
      %vm5616 = vcmp.ge.f32.partialorder %v5409, 0.0
      %vm5617 = vcmp.ge.f32.partialorder %v5585, 0.0
      %vm5618 = vcmp.ge.f32.partialorder %v5587, 0.0
      %vm5619 = vcmp.ge.f32.partialorder %v5057, 0.0
      %vm5620 = vcmp.ge.f32.partialorder %v5059, 0.0
      %vm5621 = vcmp.ge.f32.partialorder %v5235, 0.0
      %vm5622 = vcmp.ge.f32.partialorder %v5237, 0.0
      %vm5623 = vcmp.ge.f32.partialorder %v5413, 0.0
      %vm5624 = vcmp.ge.f32.partialorder %v5415, 0.0
      %vm5625 = vcmp.ge.f32.partialorder %v5591, 0.0
      %vm5626 = vcmp.ge.f32.partialorder %v5593, 0.0
      %v5627 = vmul.f32 %v5039, 0.2
      %v5628 = vmul.f32 %v5041, 0.2
      %v5629 = vmul.f32 %v5217, 0.2
      %v5630 = vmul.f32 %v5219, 0.2
      %v5631 = vmul.f32 %v5395, 0.2
      %v5632 = vmul.f32 %v5397, 0.2
      %v5633 = vmul.f32 %v5573, 0.2
      %v5634 = vmul.f32 %v5575, 0.2
      %v5635 = vmul.f32 %v5045, 0.2
      %v5636 = vmul.f32 %v5047, 0.2
      %v5637 = vmul.f32 %v5223, 0.2
      %v5638 = vmul.f32 %v5225, 0.2
      %v5639 = vmul.f32 %v5401, 0.2
      %v5640 = vmul.f32 %v5403, 0.2
      %v5641 = vmul.f32 %v5579, 0.2
      %v5642 = vmul.f32 %v5581, 0.2
      %v5643 = vmul.f32 %v5051, 0.2
      %v5644 = vmul.f32 %v5053, 0.2
      %v5645 = vmul.f32 %v5229, 0.2
      %v5646 = vmul.f32 %v5231, 0.2
      %v5647 = vmul.f32 %v5407, 0.2
      %v5648 = vmul.f32 %v5409, 0.2
      %v5649 = vmul.f32 %v5585, 0.2
      %v5650 = vmul.f32 %v5587, 0.2
      %v5651 = vmul.f32 %v5057, 0.2
      %v5652 = vmul.f32 %v5059, 0.2
      %v5653 = vmul.f32 %v5235, 0.2
      %v5654 = vmul.f32 %v5237, 0.2
      %v5655 = vmul.f32 %v5413, 0.2
      %v5656 = vmul.f32 %v5415, 0.2
      %v5657 = vmul.f32 %v5591, 0.2
      %v5658 = vmul.f32 %v5593, 0.2
      %v5659 = vsel %vm5595, %v5039, %v5627
      %v5660 = vsel %vm5596, %v5041, %v5628
      %v5661 = vsel %vm5597, %v5217, %v5629
      %v5662 = vsel %vm5598, %v5219, %v5630
      %v5663 = vsel %vm5599, %v5395, %v5631
      %v5664 = vsel %vm5600, %v5397, %v5632
      %v5665 = vsel %vm5601, %v5573, %v5633
      %v5666 = vsel %vm5602, %v5575, %v5634
      %v5667 = vsel %vm5603, %v5045, %v5635
      %v5668 = vsel %vm5604, %v5047, %v5636
      %v5669 = vsel %vm5605, %v5223, %v5637
      %v5670 = vsel %vm5606, %v5225, %v5638
      %v5671 = vsel %vm5607, %v5401, %v5639
      %v5672 = vsel %vm5608, %v5403, %v5640
      %v5673 = vsel %vm5609, %v5579, %v5641
      %v5674 = vsel %vm5610, %v5581, %v5642
      %v5675 = vsel %vm5611, %v5051, %v5643
      %v5676 = vsel %vm5612, %v5053, %v5644
      %v5677 = vsel %vm5613, %v5229, %v5645
      %v5678 = vsel %vm5614, %v5231, %v5646
      %v5679 = vsel %vm5615, %v5407, %v5647
      %v5680 = vsel %vm5616, %v5409, %v5648
      %v5681 = vsel %vm5617, %v5585, %v5649
      %v5682 = vsel %vm5618, %v5587, %v5650
      %v5683 = vsel %vm5619, %v5057, %v5651
      %v5684 = vsel %vm5620, %v5059, %v5652
      %v5685 = vsel %vm5621, %v5235, %v5653
      %v5686 = vsel %vm5622, %v5237, %v5654
      %v5687 = vsel %vm5623, %v5413, %v5655
      %v5688 = vsel %vm5624, %v5415, %v5656
      %v5689 = vsel %vm5625, %v5591, %v5657
      %v5690 = vsel %vm5626, %v5593, %v5658
      %v5691 = vmul.f32 %v5659, 1.4142135
      %v5692 = vmul.f32 %v5660, 1.4142135
      %v5693 = vmul.f32 %v5661, 1.4142135
      %v5694 = vmul.f32 %v5662, 1.4142135
      %v5695 = vmul.f32 %v5663, 1.4142135
      %v5696 = vmul.f32 %v5664, 1.4142135
      %v5697 = vmul.f32 %v5665, 1.4142135
      %v5698 = vmul.f32 %v5666, 1.4142135
      %v5699 = vmul.f32 %v5667, 1.4142135
      %v5700 = vmul.f32 %v5668, 1.4142135
      %v5701 = vmul.f32 %v5669, 1.4142135
      %v5702 = vmul.f32 %v5670, 1.4142135
      %v5703 = vmul.f32 %v5671, 1.4142135
      %v5704 = vmul.f32 %v5672, 1.4142135
      %v5705 = vmul.f32 %v5673, 1.4142135
      %v5706 = vmul.f32 %v5674, 1.4142135
      %v5707 = vmul.f32 %v5675, 1.4142135
      %v5708 = vmul.f32 %v5676, 1.4142135
      %v5709 = vmul.f32 %v5677, 1.4142135
      %v5710 = vmul.f32 %v5678, 1.4142135
      %v5711 = vmul.f32 %v5679, 1.4142135
      %v5712 = vmul.f32 %v5680, 1.4142135
      %v5713 = vmul.f32 %v5681, 1.4142135
      %v5714 = vmul.f32 %v5682, 1.4142135
      %v5715 = vmul.f32 %v5683, 1.4142135
      %v5716 = vmul.f32 %v5684, 1.4142135
      %v5717 = vmul.f32 %v5685, 1.4142135
      %v5718 = vmul.f32 %v5686, 1.4142135
      %v5719 = vmul.f32 %v5687, 1.4142135
      %v5720 = vmul.f32 %v5688, 1.4142135
      %v5721 = vmul.f32 %v5689, 1.4142135
      %v5722 = vmul.f32 %v5690, 1.4142135
      %v5723 = vadd.f32 %v5691, %v3319
      %v5724 = vadd.f32 %v5692, %v3320
      %v5725 = vadd.f32 %v5693, %v3321
      %v5726 = vadd.f32 %v5694, %v3322
      %v5727 = vadd.f32 %v5695, %v3323
      %v5728 = vadd.f32 %v5696, %v3324
      %v5729 = vadd.f32 %v5697, %v3325
      %v5730 = vadd.f32 %v5698, %v3326
      %v5731 = vadd.f32 %v5699, %v3327
      %v5732 = vadd.f32 %v5700, %v3328
      %v5733 = vadd.f32 %v5701, %v3329
      %v5734 = vadd.f32 %v5702, %v3330
      %v5735 = vadd.f32 %v5703, %v3331
      %v5736 = vadd.f32 %v5704, %v3332
      %v5737 = vadd.f32 %v5705, %v3333
      %v5738 = vadd.f32 %v5706, %v3334
      %v5739 = vadd.f32 %v5707, %v3335
      %v5740 = vadd.f32 %v5708, %v3336
      %v5741 = vadd.f32 %v5709, %v3337
      %v5742 = vadd.f32 %v5710, %v3338
      %v5743 = vadd.f32 %v5711, %v3339
      %v5744 = vadd.f32 %v5712, %v3340
      %v5745 = vadd.f32 %v5713, %v3341
      %v5746 = vadd.f32 %v5714, %v3342
      %v5747 = vadd.f32 %v5715, %v3343
      %v5748 = vadd.f32 %v5716, %v3344
      %v5749 = vadd.f32 %v5717, %v3345
      %v5750 = vadd.f32 %v5718, %v3346
      %v5751 = vadd.f32 %v5719, %v3347
      %v5752 = vadd.f32 %v5720, %v3348
      %v5753 = vadd.f32 %v5721, %v3349
      %v5754 = vadd.f32 %v5722, %v3350
      %5755 = vst [vmem:[%s197] sm:$0xff] %v5723
      %5756 = vst [vmem:[%s197 + $0x8] sm:$0xff] %v5724
      %5757 = vst [vmem:[%s197 + $0x10] sm:$0xff] %v5725
      %5758 = vst [vmem:[%s197 + $0x18] sm:$0xff] %v5726
      %5759 = vst [vmem:[%s197 + $0x20] sm:$0xff] %v5727
      %5760 = vst [vmem:[%s197 + $0x28] sm:$0xff] %v5728
      %5761 = vst [vmem:[%s197 + $0x30] sm:$0xff] %v5729
      %5762 = vst [vmem:[%s197 + $0x38] sm:$0xff] %v5730
      %5763 = vst [vmem:[%s197 + $0x40] sm:$0xff] %v5731
      %5764 = vst [vmem:[%s197 + $0x48] sm:$0xff] %v5732
      %5765 = vst [vmem:[%s197 + $0x50] sm:$0xff] %v5733
      %5766 = vst [vmem:[%s197 + $0x58] sm:$0xff] %v5734
      %5767 = vst [vmem:[%s197 + $0x60] sm:$0xff] %v5735
      %5768 = vst [vmem:[%s197 + $0x68] sm:$0xff] %v5736
      %5769 = vst [vmem:[%s197 + $0x70] sm:$0xff] %v5737
      %5770 = vst [vmem:[%s197 + $0x78] sm:$0xff] %v5738
      %5771 = vst [vmem:[%s197 + $0x80] sm:$0xff] %v5739
      %5772 = vst [vmem:[%s197 + $0x88] sm:$0xff] %v5740
      %5773 = vst [vmem:[%s197 + $0x90] sm:$0xff] %v5741
      %5774 = vst [vmem:[%s197 + $0x98] sm:$0xff] %v5742
      %5775 = vst [vmem:[%s197 + $0xa0] sm:$0xff] %v5743
      %5776 = vst [vmem:[%s197 + $0xa8] sm:$0xff] %v5744
      %5777 = vst [vmem:[%s197 + $0xb0] sm:$0xff] %v5745
      %5778 = vst [vmem:[%s197 + $0xb8] sm:$0xff] %v5746
      %5779 = vst [vmem:[%s197 + $0xc0] sm:$0xff] %v5747
      %5780 = vst [vmem:[%s197 + $0xc8] sm:$0xff] %v5748
      %5781 = vst [vmem:[%s197 + $0xd0] sm:$0xff] %v5749
      %5782 = vst [vmem:[%s197 + $0xd8] sm:$0xff] %v5750
      %5783 = vst [vmem:[%s197 + $0xe0] sm:$0xff] %v5751
      %5784 = vst [vmem:[%s197 + $0xe8] sm:$0xff] %v5752
      %5785 = vst [vmem:[%s197 + $0xf0] sm:$0xff] %v5753
      %5786 = vst [vmem:[%s197 + $0xf8] sm:$0xff] %v5754
      %p5787 = scmp.lt.s32.totalorder %s15, 1
      %s5788 = scalar_select %p5787, %s15, 1
      %s5789 = smul.addr %s5788, 32
      %s5790 = smul.addr %s5789, 8
      %s5791 = scalar_lea.vmem %s4, %s5790
      // Predicated region
      $region37: #{double_deconv2d.1} parent=35 // pred_check
        %p5792 = pneg %p122
      $region38: #{double_deconv2d.1} parent=35 // pred_check_branch
        %5794 = sbr.rel (%p5792) target = $region40
      $region39: #{double_deconv2d.1} parent=35 // pred_region
        _
      $region40: #{double_deconv2d.1} parent=35 // pred_fallthru
        _
    $region36: #{double_deconv2d.1} parent=5 // pred_fallthru
      _
    %p5795 = scmp.le.s32.totalorder 2, %s10
    // Predicated region
    $region41: #{double_deconv2d.1} parent=5 // pred_check
      %p5796 = pneg %p5795
    $region42: #{double_deconv2d.1} parent=5 // pred_check_branch
      %5798 = sbr.rel (%p5796) target = $region44
    $region43: #{double_deconv2d.1} parent=5 // pred_region
      %s5799 = ssub.s32 %s10, 2
      // Predicated region
      $region45: #{double_deconv2d.1} parent=43 // pred_check
        %p5800 = pneg %p128
      $region46: #{double_deconv2d.1} parent=43 // pred_check_branch
        %5802 = sbr.rel (%p5800) target = $region48
      $region47: #{double_deconv2d.1} parent=43 // pred_region
        %p5803 = scmp.lt.s32.totalorder %s16, 1
        %s5804 = scalar_select %p5803, %s16, 1
        %s5805 = smul.addr %s5804, 32
        %s5806 = smul.addr %s5805, 8
        %s5807 = scalar_lea.vmem %s4, %s5806
      $region48: #{double_deconv2d.1} parent=43 // pred_fallthru
        _
    $region44: #{double_deconv2d.1} parent=5 // pred_fallthru
      _
  $region6: #{double_deconv2d.1} parent=0 // loop_footer
    %s14 = sadd.s32 1, %s10
  $region7: #{double_deconv2d.1} parent=0 // loop_footer_branch
    %9 = sbr.rel target = $region3
  $region8: #{double_deconv2d.1} parent=0 // loop_exit
    _

</llo_original>
